<compile_context>
chip_gen: v7x
topology: tpu7x:2x2x1
jax: 0.10.0
libtpu: 0.0.40
codegen_flags: <defaults>
</compile_context>

<pallas_src>
import jax
import jax.numpy as jnp
from jax.experimental import pallas as pl
from jax.experimental.pallas import tpu as pltpu


LANES = 128  # padded lane width for the flattened (H*W) axis


# -----------------------------------------------------------------------------
# Kernel 1: fused conv stage (per batch element, grid=(N,), "parallel")
# -----------------------------------------------------------------------------
def _make_conv_stage_kernel(Di, Hi, Wi):
    Do, Ho, Wo = Di - 2, Hi - 2, Wi - 2
    L = Ho * Wi  # strided-flat output width (junk at columns with w >= Wo)

    def kernel(x_ref, mask_ref, w_stem_ref, b_stem_ref, a1_ref, b1_ref,
               wb_ref, sA_ref, sB_ref, a3_ref, b3_ref, o_ref, pad_sc):
        def conv3x3x3(src, w_ref, base):
            # src: (rows, LANES) value in strided-flat (h*Wi + w) layout.
            # 27 shift-and-accumulate taps; weights are SMEM scalars.
            acc = jnp.zeros((Do, L), jnp.float32)
            for kd in range(3):
                for kh in range(3):
                    for kw in range(3):
                        wv = w_ref[base + kd * 9 + kh * 3 + kw]
                        off = kh * Wi + kw
                        tap = jax.lax.slice(src, (kd, off), (kd + Do, off + L))
                        acc = acc + wv * tap
            return acc

        xb = x_ref[0]             # (Di, LANES), lanes >= Hi*Wi are zero
        mask = mask_ref[...]      # (Do, L) float: 1.0 where (col % Wi) < Wo

        # ---- TestModel.conv1: Conv3d(1,1,3), valid, + bias  (= residual) ----
        y = conv3x3x3(xb, w_stem_ref, 0) + b_stem_ref[0]          # (Do, L)

        # ---- Bottle2Neck3d.conv1 (1->4, k=1, no bias) + bn1 + relu (folded) ----
        spx = [jnp.maximum(a1_ref[k] * y + b1_ref[k], 0.0) for k in range(4)]

        # ---- three 3x3x3 branch convs (padding=1) + bn + relu ----
        pad_sc[...] = jnp.zeros_like(pad_sc)        # borders / lane tail stay zero
        cat = []
        sp = None
        for i in range(3):                          # nums = scale - 1 = 3, 'normal'
            sp = spx[i] if i == 0 else sp + spx[i]
            # Scatter the valid (Do,Ho,Wo) interior into the zero-padded flat
            # buffer: interior of padded (d,h,w) lives at row d+1, lane (h+1)*Wi+(w+1).
            pad_sc[1:1 + Do, Wi + 1:Wi + 1 + L] = sp * mask
            ci = conv3x3x3(pad_sc[...], wb_ref, i * 27)
            sp = jnp.maximum(sA_ref[i] * ci + sB_ref[i], 0.0)
            cat.append(sp)
        cat.append(spx[3])                          # untouched 4th split

        # ---- conv3 (4->12, k=1) + bn3 (folded) + broadcast residual + relu ----
        for c in range(12):
            acc = a3_ref[c * 4] * cat[0]
            for k in range(1, 4):
                acc = acc + a3_ref[c * 4 + k] * cat[k]
            o_ref[0, c] = jnp.maximum(acc + b3_ref[c] + y, 0.0)   # 80-lane store

    return kernel, (Do, Ho, Wo, L)


def conv_stage(x_flat, mask, p, dims):
    """x_flat: (N, Di, LANES) f32 (H*W flattened into lanes, zero tail).
    Returns (N, 12, Do, Ho*Wi) f32 in strided-flat layout (junk at w >= Wo)."""
    Di, Hi, Wi = dims
    N = x_flat.shape[0]
    kernel, (Do, _, _, L) = _make_conv_stage_kernel(Di, Hi, Wi)
    smem = pl.BlockSpec(memory_space=pltpu.MemorySpace.SMEM)
    return pl.pallas_call(
        kernel,
        out_shape=jax.ShapeDtypeStruct((N, 12, Do, L), jnp.float32),
        grid=(N,),
        in_specs=[pl.BlockSpec((1, Di, LANES), lambda n: (n, 0, 0)),
                  pl.BlockSpec((Do, L), lambda n: (0, 0))] + [smem] * 9,
        out_specs=pl.BlockSpec((1, 12, Do, L), lambda n: (n, 0, 0, 0)),
        scratch_shapes=[pltpu.VMEM((Di, LANES), jnp.float32)],
        compiler_params=pltpu.CompilerParams(dimension_semantics=("parallel",)),
    )(x_flat, mask, p["w_stem"], p["b_stem"], p["a1"], p["b1"],
      p["wb"], p["sA"], p["sB"], p["a3"], p["b3"])


# -----------------------------------------------------------------------------
# Kernel 2: MLP head, whole batch in one step (fc1 -> ReLU -> fc2 -> sigmoid)
# -----------------------------------------------------------------------------
def _head_kernel(x_ref, w1_ref, b1_ref, w2_ref, b2_ref, o_ref):
    h = jnp.dot(x_ref[...], w1_ref[...], preferred_element_type=jnp.float32) + b1_ref[...]
    h = jnp.maximum(h, 0.0)
    z = jnp.dot(h, w2_ref[...], preferred_element_type=jnp.float32) + b2_ref[...]
    o_ref[...] = jax.nn.sigmoid(z)


def mlp_head(flat, fc):
    N = flat.shape[0]
    vmem = pl.BlockSpec(memory_space=pltpu.MemorySpace.VMEM)
    return pl.pallas_call(
        _head_kernel,
        out_shape=jax.ShapeDtypeStruct((N, 1), jnp.float32),
        in_specs=[vmem] * 5,
        out_specs=vmem,
    )(flat, fc["w1"], fc["b1"].reshape(1, -1), fc["w2"], fc["b2"].reshape(1, 1))


# -----------------------------------------------------------------------------
# Parameters (deterministic synthetic init; BN folded in inference mode)
# -----------------------------------------------------------------------------
def init_params(key):
    eps = 1e-5

    def bn_fold(gamma, beta, mean, var):
        s = gamma / jnp.sqrt(var + eps)
        return s, beta - mean * s

    ks = jax.random.split(key, 16)
    # TestModel.conv1: Conv3d(1, 1, 3) with bias
    w_stem = 0.2 * jax.random.normal(ks[0], (27,), jnp.float32)
    b_stem = 0.1 * jax.random.normal(ks[1], (1,), jnp.float32)
    # Bottle2Neck3d(inplanes=1, planes=3): width = floor(3*26/64) = 1, scale = 4, nums = 3
    w_c1 = 0.5 * jax.random.normal(ks[2], (4,), jnp.float32)          # conv1: 1 -> 4, k=1
    g1 = 1.0 + 0.1 * jax.random.normal(ks[3], (4,), jnp.float32)
    be1 = 0.1 * jax.random.normal(ks[4], (4,), jnp.float32)
    s1, t1 = bn_fold(g1, be1, jnp.zeros(4), jnp.ones(4))
    a1, b1 = s1 * w_c1, t1                                            # fold conv1 into bn1
    # three 3x3x3 branch convs (no bias) + per-branch BN(1)
    wb = 0.2 * jax.random.normal(ks[5], (3, 27), jnp.float32)
    gb = 1.0 + 0.1 * jax.random.normal(ks[6], (3,), jnp.float32)
    bb = 0.1 * jax.random.normal(ks[7], (3,), jnp.float32)
    sA, sB = bn_fold(gb, bb, jnp.zeros(3), jnp.ones(3))
    # conv3: 4 -> 12, k=1 (no bias) + bn3, folded
    w3 = 0.3 * jax.random.normal(ks[8], (12, 4), jnp.float32)
    g3 = 1.0 + 0.1 * jax.random.normal(ks[9], (12,), jnp.float32)
    b3r = 0.1 * jax.random.normal(ks[10], (12,), jnp.float32)
    s3, t3 = bn_fold(g3, b3r, jnp.zeros(12), jnp.ones(12))
    a3, b3 = (s3[:, None] * w3).reshape(-1), t3
    return dict(w_stem=w_stem, b_stem=b_stem, a1=a1, b1=b1,
                wb=wb.reshape(-1), sA=sA, sB=sB, a3=a3, b3=b3)


# -----------------------------------------------------------------------------
# Forward pass: 2 pallas_call launches; tiny XLA glue (lane pad / junk-column drop)
# -----------------------------------------------------------------------------
def forward(x, p, fc):
    # x: (N, 1, D0, H0, W0), NCDHW, float32
    N, _, D0, H0, W0 = x.shape
    Do, Ho, Wo = D0 - 2, H0 - 2, W0 - 2
    L = Ho * W0
    assert H0 * W0 + 2 * W0 + 2 <= LANES, "spatial plane too large for LANES padding"

    # Flatten (H, W) into the lane axis; zero-pad lanes so every static conv tap
    # slice of length L (max offset 2*W0 + 2) stays in bounds.
    x_flat = x[:, 0].reshape(N, D0, H0 * W0)
    x_flat = jnp.pad(x_flat, ((0, 0), (0, 0), (0, LANES - H0 * W0)))
    # Lane-validity mask for the strided-flat layout (1 where w < Wo).
    col = jnp.arange(L, dtype=jnp.int32) % W0
    mask = jnp.broadcast_to((col < Wo).astype(jnp.float32), (Do, L))

    out = conv_stage(x_flat, mask, p, (D0, H0, W0))       # (N, 12, Do, Ho*W0)
    out = out.reshape(N, 12, Do, Ho, W0)[..., :Wo]        # drop strided junk columns
    flat = out.reshape(N, -1)                             # torch.flatten order (C,D,H,W)
    return mlp_head(flat, fc)                             # (N, 1)


if __name__ == "__main__":
    N, D0 = 2, 10
    x = jax.random.normal(jax.random.PRNGKey(0), (N, 1, D0, D0, D0), jnp.float32)

    params = init_params(jax.random.PRNGKey(42))

    D = D0 - 2                 # after the valid 3x3x3 stem conv
    F = 12 * D * D * D         # flattened feature size (6144 at this example shape)
    # TODO(synk): the reference module hard-codes fc1 = Linear(778688, 50), which is not
    # consistent with any achievable 12*D*H*W; fc1 in-features here follow the example shape.
    kf = jax.random.split(jax.random.PRNGKey(7), 4)
    fc = {
        "w1": 0.02 * jax.random.normal(kf[0], (F, 50), jnp.float32),
        "b1": 0.01 * jax.random.normal(kf[1], (50,), jnp.float32),
        "w2": 0.1 * jax.random.normal(kf[2], (50, 1), jnp.float32),
        "b2": 0.01 * jax.random.normal(kf[3], (1,), jnp.float32),
    }

    out = jax.jit(forward)(x, params, fc)
    out = jax.block_until_ready(out)
    assert out.shape == (N, 1), out.shape
    assert bool(jnp.all(jnp.isfinite(out)))
    print("KERNEL_OK")
</pallas_src>

<mosaic_0001>
module attributes {stable_mosaic.version = 11 : i64} {
  func.func @kernel(%arg0: i32, %arg1: memref<1x10x128xf32, #tpu.memory_space<vmem>>, %arg2: memref<8x80xf32, #tpu.memory_space<vmem>>, %arg3: memref<27xf32, #tpu.memory_space<smem>>, %arg4: memref<1xf32, #tpu.memory_space<smem>>, %arg5: memref<4xf32, #tpu.memory_space<smem>>, %arg6: memref<4xf32, #tpu.memory_space<smem>>, %arg7: memref<81xf32, #tpu.memory_space<smem>>, %arg8: memref<3xf32, #tpu.memory_space<smem>>, %arg9: memref<3xf32, #tpu.memory_space<smem>>, %arg10: memref<48xf32, #tpu.memory_space<smem>>, %arg11: memref<12xf32, #tpu.memory_space<smem>>, %arg12: memref<1x12x8x80xf32, #tpu.memory_space<vmem>>, %arg13: memref<10x128xf32, #tpu.memory_space<vmem>>) attributes {dimension_semantics = [#tpu.dimension_semantics<parallel>], iteration_bounds = array<i64: 2>, scalar_prefetch = 0 : i64, scratch_operands = 1 : i64, tpu.core_type = #tpu.core_type<tc>, window_params = [{transform_indices = @transform_0, window_bounds = array<i64: 1, 10, 128>}, {pipeline_mode = #tpu.pipeline_mode<synchronous>, transform_indices = @transform_1, window_bounds = array<i64: 8, 80>}, {transform_indices = @transform_2, window_bounds = array<i64: 27>}, {transform_indices = @transform_3, window_bounds = array<i64: 1>}, {transform_indices = @transform_4, window_bounds = array<i64: 4>}, {transform_indices = @transform_5, window_bounds = array<i64: 4>}, {transform_indices = @transform_6, window_bounds = array<i64: 81>}, {transform_indices = @transform_7, window_bounds = array<i64: 3>}, {transform_indices = @transform_8, window_bounds = array<i64: 3>}, {transform_indices = @transform_9, window_bounds = array<i64: 48>}, {transform_indices = @transform_10, window_bounds = array<i64: 12>}, {transform_indices = @transform_11, window_bounds = array<i64: 1, 12, 8, 80>}]} {
    %c0 = arith.constant 0 : index
    %c0_0 = arith.constant 0 : index
    %c0_1 = arith.constant 0 : index
    %0 = vector.load %arg1[%c0, %c0_0, %c0_1] : memref<1x10x128xf32, #tpu.memory_space<vmem>>, vector<1x10x128xf32>
    %1 = vector.shape_cast %0 : vector<1x10x128xf32> to vector<10x128xf32>
    %c0_2 = arith.constant 0 : index
    %c0_3 = arith.constant 0 : index
    %2 = vector.load %arg2[%c0_2, %c0_3] : memref<8x80xf32, #tpu.memory_space<vmem>>, vector<8x80xf32>
    %cst = arith.constant 0.000000e+00 : f32
    %3 = vector.broadcast %cst : f32 to vector<8x80xf32>
    %c0_4 = arith.constant 0 : index
    %4 = memref.load %arg3[%c0_4] : memref<27xf32, #tpu.memory_space<smem>>
    %5 = vector.extract_strided_slice %1 {offsets = [0, 0], sizes = [8, 80], strides = [1, 1]} : vector<10x128xf32> to vector<8x80xf32>
    %6 = vector.broadcast %4 : f32 to vector<8x80xf32>
    %7 = arith.mulf %6, %5 : vector<8x80xf32>
    %8 = arith.addf %3, %7 : vector<8x80xf32>
    %c1 = arith.constant 1 : index
    %9 = memref.load %arg3[%c1] : memref<27xf32, #tpu.memory_space<smem>>
    %10 = vector.extract_strided_slice %1 {offsets = [0, 1], sizes = [8, 80], strides = [1, 1]} : vector<10x128xf32> to vector<8x80xf32>
    %11 = vector.broadcast %9 : f32 to vector<8x80xf32>
    %12 = arith.mulf %11, %10 : vector<8x80xf32>
    %13 = arith.addf %8, %12 : vector<8x80xf32>
    %c2 = arith.constant 2 : index
    %14 = memref.load %arg3[%c2] : memref<27xf32, #tpu.memory_space<smem>>
    %15 = vector.extract_strided_slice %1 {offsets = [0, 2], sizes = [8, 80], strides = [1, 1]} : vector<10x128xf32> to vector<8x80xf32>
    %16 = vector.broadcast %14 : f32 to vector<8x80xf32>
    %17 = arith.mulf %16, %15 : vector<8x80xf32>
    %18 = arith.addf %13, %17 : vector<8x80xf32>
    %c3 = arith.constant 3 : index
    %19 = memref.load %arg3[%c3] : memref<27xf32, #tpu.memory_space<smem>>
    %20 = vector.extract_strided_slice %1 {offsets = [0, 10], sizes = [8, 80], strides = [1, 1]} : vector<10x128xf32> to vector<8x80xf32>
    %21 = vector.broadcast %19 : f32 to vector<8x80xf32>
    %22 = arith.mulf %21, %20 : vector<8x80xf32>
    %23 = arith.addf %18, %22 : vector<8x80xf32>
    %c4 = arith.constant 4 : index
    %24 = memref.load %arg3[%c4] : memref<27xf32, #tpu.memory_space<smem>>
    %25 = vector.extract_strided_slice %1 {offsets = [0, 11], sizes = [8, 80], strides = [1, 1]} : vector<10x128xf32> to vector<8x80xf32>
    %26 = vector.broadcast %24 : f32 to vector<8x80xf32>
    %27 = arith.mulf %26, %25 : vector<8x80xf32>
    %28 = arith.addf %23, %27 : vector<8x80xf32>
    %c5 = arith.constant 5 : index
    %29 = memref.load %arg3[%c5] : memref<27xf32, #tpu.memory_space<smem>>
    %30 = vector.extract_strided_slice %1 {offsets = [0, 12], sizes = [8, 80], strides = [1, 1]} : vector<10x128xf32> to vector<8x80xf32>
    %31 = vector.broadcast %29 : f32 to vector<8x80xf32>
    %32 = arith.mulf %31, %30 : vector<8x80xf32>
    %33 = arith.addf %28, %32 : vector<8x80xf32>
    %c6 = arith.constant 6 : index
    %34 = memref.load %arg3[%c6] : memref<27xf32, #tpu.memory_space<smem>>
    %35 = vector.extract_strided_slice %1 {offsets = [0, 20], sizes = [8, 80], strides = [1, 1]} : vector<10x128xf32> to vector<8x80xf32>
    %36 = vector.broadcast %34 : f32 to vector<8x80xf32>
    %37 = arith.mulf %36, %35 : vector<8x80xf32>
    %38 = arith.addf %33, %37 : vector<8x80xf32>
    %c7 = arith.constant 7 : index
    %39 = memref.load %arg3[%c7] : memref<27xf32, #tpu.memory_space<smem>>
    %40 = vector.extract_strided_slice %1 {offsets = [0, 21], sizes = [8, 80], strides = [1, 1]} : vector<10x128xf32> to vector<8x80xf32>
    %41 = vector.broadcast %39 : f32 to vector<8x80xf32>
    %42 = arith.mulf %41, %40 : vector<8x80xf32>
    %43 = arith.addf %38, %42 : vector<8x80xf32>
    %c8 = arith.constant 8 : index
    %44 = memref.load %arg3[%c8] : memref<27xf32, #tpu.memory_space<smem>>
    %45 = vector.extract_strided_slice %1 {offsets = [0, 22], sizes = [8, 80], strides = [1, 1]} : vector<10x128xf32> to vector<8x80xf32>
    %46 = vector.broadcast %44 : f32 to vector<8x80xf32>
    %47 = arith.mulf %46, %45 : vector<8x80xf32>
    %48 = arith.addf %43, %47 : vector<8x80xf32>
    %c9 = arith.constant 9 : index
    %49 = memref.load %arg3[%c9] : memref<27xf32, #tpu.memory_space<smem>>
    %50 = vector.extract_strided_slice %1 {offsets = [1, 0], sizes = [8, 80], strides = [1, 1]} : vector<10x128xf32> to vector<8x80xf32>
    %51 = vector.broadcast %49 : f32 to vector<8x80xf32>
    %52 = arith.mulf %51, %50 : vector<8x80xf32>
    %53 = arith.addf %48, %52 : vector<8x80xf32>
    %c10 = arith.constant 10 : index
    %54 = memref.load %arg3[%c10] : memref<27xf32, #tpu.memory_space<smem>>
    %55 = vector.extract_strided_slice %1 {offsets = [1, 1], sizes = [8, 80], strides = [1, 1]} : vector<10x128xf32> to vector<8x80xf32>
    %56 = vector.broadcast %54 : f32 to vector<8x80xf32>
    %57 = arith.mulf %56, %55 : vector<8x80xf32>
    %58 = arith.addf %53, %57 : vector<8x80xf32>
    %c11 = arith.constant 11 : index
    %59 = memref.load %arg3[%c11] : memref<27xf32, #tpu.memory_space<smem>>
    %60 = vector.extract_strided_slice %1 {offsets = [1, 2], sizes = [8, 80], strides = [1, 1]} : vector<10x128xf32> to vector<8x80xf32>
    %61 = vector.broadcast %59 : f32 to vector<8x80xf32>
    %62 = arith.mulf %61, %60 : vector<8x80xf32>
    %63 = arith.addf %58, %62 : vector<8x80xf32>
    %c12 = arith.constant 12 : index
    %64 = memref.load %arg3[%c12] : memref<27xf32, #tpu.memory_space<smem>>
    %65 = vector.extract_strided_slice %1 {offsets = [1, 10], sizes = [8, 80], strides = [1, 1]} : vector<10x128xf32> to vector<8x80xf32>
    %66 = vector.broadcast %64 : f32 to vector<8x80xf32>
    %67 = arith.mulf %66, %65 : vector<8x80xf32>
    %68 = arith.addf %63, %67 : vector<8x80xf32>
    %c13 = arith.constant 13 : index
    %69 = memref.load %arg3[%c13] : memref<27xf32, #tpu.memory_space<smem>>
    %70 = vector.extract_strided_slice %1 {offsets = [1, 11], sizes = [8, 80], strides = [1, 1]} : vector<10x128xf32> to vector<8x80xf32>
    %71 = vector.broadcast %69 : f32 to vector<8x80xf32>
    %72 = arith.mulf %71, %70 : vector<8x80xf32>
    %73 = arith.addf %68, %72 : vector<8x80xf32>
    %c14 = arith.constant 14 : index
    %74 = memref.load %arg3[%c14] : memref<27xf32, #tpu.memory_space<smem>>
    %75 = vector.extract_strided_slice %1 {offsets = [1, 12], sizes = [8, 80], strides = [1, 1]} : vector<10x128xf32> to vector<8x80xf32>
    %76 = vector.broadcast %74 : f32 to vector<8x80xf32>
    %77 = arith.mulf %76, %75 : vector<8x80xf32>
    %78 = arith.addf %73, %77 : vector<8x80xf32>
    %c15 = arith.constant 15 : index
    %79 = memref.load %arg3[%c15] : memref<27xf32, #tpu.memory_space<smem>>
    %80 = vector.extract_strided_slice %1 {offsets = [1, 20], sizes = [8, 80], strides = [1, 1]} : vector<10x128xf32> to vector<8x80xf32>
    %81 = vector.broadcast %79 : f32 to vector<8x80xf32>
    %82 = arith.mulf %81, %80 : vector<8x80xf32>
    %83 = arith.addf %78, %82 : vector<8x80xf32>
    %c16 = arith.constant 16 : index
    %84 = memref.load %arg3[%c16] : memref<27xf32, #tpu.memory_space<smem>>
    %85 = vector.extract_strided_slice %1 {offsets = [1, 21], sizes = [8, 80], strides = [1, 1]} : vector<10x128xf32> to vector<8x80xf32>
    %86 = vector.broadcast %84 : f32 to vector<8x80xf32>
    %87 = arith.mulf %86, %85 : vector<8x80xf32>
    %88 = arith.addf %83, %87 : vector<8x80xf32>
    %c17 = arith.constant 17 : index
    %89 = memref.load %arg3[%c17] : memref<27xf32, #tpu.memory_space<smem>>
    %90 = vector.extract_strided_slice %1 {offsets = [1, 22], sizes = [8, 80], strides = [1, 1]} : vector<10x128xf32> to vector<8x80xf32>
    %91 = vector.broadcast %89 : f32 to vector<8x80xf32>
    %92 = arith.mulf %91, %90 : vector<8x80xf32>
    %93 = arith.addf %88, %92 : vector<8x80xf32>
    %c18 = arith.constant 18 : index
    %94 = memref.load %arg3[%c18] : memref<27xf32, #tpu.memory_space<smem>>
    %95 = vector.extract_strided_slice %1 {offsets = [2, 0], sizes = [8, 80], strides = [1, 1]} : vector<10x128xf32> to vector<8x80xf32>
    %96 = vector.broadcast %94 : f32 to vector<8x80xf32>
    %97 = arith.mulf %96, %95 : vector<8x80xf32>
    %98 = arith.addf %93, %97 : vector<8x80xf32>
    %c19 = arith.constant 19 : index
    %99 = memref.load %arg3[%c19] : memref<27xf32, #tpu.memory_space<smem>>
    %100 = vector.extract_strided_slice %1 {offsets = [2, 1], sizes = [8, 80], strides = [1, 1]} : vector<10x128xf32> to vector<8x80xf32>
    %101 = vector.broadcast %99 : f32 to vector<8x80xf32>
    %102 = arith.mulf %101, %100 : vector<8x80xf32>
    %103 = arith.addf %98, %102 : vector<8x80xf32>
    %c20 = arith.constant 20 : index
    %104 = memref.load %arg3[%c20] : memref<27xf32, #tpu.memory_space<smem>>
    %105 = vector.extract_strided_slice %1 {offsets = [2, 2], sizes = [8, 80], strides = [1, 1]} : vector<10x128xf32> to vector<8x80xf32>
    %106 = vector.broadcast %104 : f32 to vector<8x80xf32>
    %107 = arith.mulf %106, %105 : vector<8x80xf32>
    %108 = arith.addf %103, %107 : vector<8x80xf32>
    %c21 = arith.constant 21 : index
    %109 = memref.load %arg3[%c21] : memref<27xf32, #tpu.memory_space<smem>>
    %110 = vector.extract_strided_slice %1 {offsets = [2, 10], sizes = [8, 80], strides = [1, 1]} : vector<10x128xf32> to vector<8x80xf32>
    %111 = vector.broadcast %109 : f32 to vector<8x80xf32>
    %112 = arith.mulf %111, %110 : vector<8x80xf32>
    %113 = arith.addf %108, %112 : vector<8x80xf32>
    %c22 = arith.constant 22 : index
    %114 = memref.load %arg3[%c22] : memref<27xf32, #tpu.memory_space<smem>>
    %115 = vector.extract_strided_slice %1 {offsets = [2, 11], sizes = [8, 80], strides = [1, 1]} : vector<10x128xf32> to vector<8x80xf32>
    %116 = vector.broadcast %114 : f32 to vector<8x80xf32>
    %117 = arith.mulf %116, %115 : vector<8x80xf32>
    %118 = arith.addf %113, %117 : vector<8x80xf32>
    %c23 = arith.constant 23 : index
    %119 = memref.load %arg3[%c23] : memref<27xf32, #tpu.memory_space<smem>>
    %120 = vector.extract_strided_slice %1 {offsets = [2, 12], sizes = [8, 80], strides = [1, 1]} : vector<10x128xf32> to vector<8x80xf32>
    %121 = vector.broadcast %119 : f32 to vector<8x80xf32>
    %122 = arith.mulf %121, %120 : vector<8x80xf32>
    %123 = arith.addf %118, %122 : vector<8x80xf32>
    %c24 = arith.constant 24 : index
    %124 = memref.load %arg3[%c24] : memref<27xf32, #tpu.memory_space<smem>>
    %125 = vector.extract_strided_slice %1 {offsets = [2, 20], sizes = [8, 80], strides = [1, 1]} : vector<10x128xf32> to vector<8x80xf32>
    %126 = vector.broadcast %124 : f32 to vector<8x80xf32>
    %127 = arith.mulf %126, %125 : vector<8x80xf32>
    %128 = arith.addf %123, %127 : vector<8x80xf32>
    %c25 = arith.constant 25 : index
    %129 = memref.load %arg3[%c25] : memref<27xf32, #tpu.memory_space<smem>>
    %130 = vector.extract_strided_slice %1 {offsets = [2, 21], sizes = [8, 80], strides = [1, 1]} : vector<10x128xf32> to vector<8x80xf32>
    %131 = vector.broadcast %129 : f32 to vector<8x80xf32>
    %132 = arith.mulf %131, %130 : vector<8x80xf32>
    %133 = arith.addf %128, %132 : vector<8x80xf32>
    %c26 = arith.constant 26 : index
    %134 = memref.load %arg3[%c26] : memref<27xf32, #tpu.memory_space<smem>>
    %135 = vector.extract_strided_slice %1 {offsets = [2, 22], sizes = [8, 80], strides = [1, 1]} : vector<10x128xf32> to vector<8x80xf32>
    %136 = vector.broadcast %134 : f32 to vector<8x80xf32>
    %137 = arith.mulf %136, %135 : vector<8x80xf32>
    %138 = arith.addf %133, %137 : vector<8x80xf32>
    %c0_5 = arith.constant 0 : index
    %139 = memref.load %arg4[%c0_5] : memref<1xf32, #tpu.memory_space<smem>>
    %140 = vector.broadcast %139 : f32 to vector<8x80xf32>
    %141 = arith.addf %138, %140 : vector<8x80xf32>
    %c0_6 = arith.constant 0 : index
    %142 = memref.load %arg5[%c0_6] : memref<4xf32, #tpu.memory_space<smem>>
    %143 = vector.broadcast %142 : f32 to vector<8x80xf32>
    %144 = arith.mulf %143, %141 : vector<8x80xf32>
    %c0_7 = arith.constant 0 : index
    %145 = memref.load %arg6[%c0_7] : memref<4xf32, #tpu.memory_space<smem>>
    %146 = vector.broadcast %145 : f32 to vector<8x80xf32>
    %147 = arith.addf %144, %146 : vector<8x80xf32>
    %cst_8 = arith.constant 0.000000e+00 : f32
    %148 = vector.broadcast %cst_8 : f32 to vector<8x80xf32>
    %149 = arith.maximumf %147, %148 : vector<8x80xf32>
    %c1_9 = arith.constant 1 : index
    %150 = memref.load %arg5[%c1_9] : memref<4xf32, #tpu.memory_space<smem>>
    %151 = vector.broadcast %150 : f32 to vector<8x80xf32>
    %152 = arith.mulf %151, %141 : vector<8x80xf32>
    %c1_10 = arith.constant 1 : index
    %153 = memref.load %arg6[%c1_10] : memref<4xf32, #tpu.memory_space<smem>>
    %154 = vector.broadcast %153 : f32 to vector<8x80xf32>
    %155 = arith.addf %152, %154 : vector<8x80xf32>
    %cst_11 = arith.constant 0.000000e+00 : f32
    %156 = vector.broadcast %cst_11 : f32 to vector<8x80xf32>
    %157 = arith.maximumf %155, %156 : vector<8x80xf32>
    %c2_12 = arith.constant 2 : index
    %158 = memref.load %arg5[%c2_12] : memref<4xf32, #tpu.memory_space<smem>>
    %159 = vector.broadcast %158 : f32 to vector<8x80xf32>
    %160 = arith.mulf %159, %141 : vector<8x80xf32>
    %c2_13 = arith.constant 2 : index
    %161 = memref.load %arg6[%c2_13] : memref<4xf32, #tpu.memory_space<smem>>
    %162 = vector.broadcast %161 : f32 to vector<8x80xf32>
    %163 = arith.addf %160, %162 : vector<8x80xf32>
    %cst_14 = arith.constant 0.000000e+00 : f32
    %164 = vector.broadcast %cst_14 : f32 to vector<8x80xf32>
    %165 = arith.maximumf %163, %164 : vector<8x80xf32>
    %c3_15 = arith.constant 3 : index
    %166 = memref.load %arg5[%c3_15] : memref<4xf32, #tpu.memory_space<smem>>
    %167 = vector.broadcast %166 : f32 to vector<8x80xf32>
    %168 = arith.mulf %167, %141 : vector<8x80xf32>
    %c3_16 = arith.constant 3 : index
    %169 = memref.load %arg6[%c3_16] : memref<4xf32, #tpu.memory_space<smem>>
    %170 = vector.broadcast %169 : f32 to vector<8x80xf32>
    %171 = arith.addf %168, %170 : vector<8x80xf32>
    %cst_17 = arith.constant 0.000000e+00 : f32
    %172 = vector.broadcast %cst_17 : f32 to vector<8x80xf32>
    %173 = arith.maximumf %171, %172 : vector<8x80xf32>
    %cst_18 = arith.constant 0.000000e+00 : f32
    %174 = vector.broadcast %cst_18 : f32 to vector<10x128xf32>
    %c0_19 = arith.constant 0 : index
    %c0_20 = arith.constant 0 : index
    %175 = vector.load %arg13[%c0_19, %c0_20] : memref<10x128xf32, #tpu.memory_space<vmem>>, vector<10x128xf32>
    tpu.vector_store %arg13[%c0_19, %c0_20], %174 {strides = array<i32>} : memref<10x128xf32, #tpu.memory_space<vmem>>, vector<10x128xf32>,
    %176 = arith.mulf %149, %2 : vector<8x80xf32>
    %c1_21 = arith.constant 1 : index
    %c11_22 = arith.constant 11 : index
    %177 = vector.load %arg13[%c1_21, %c11_22] : memref<10x128xf32, #tpu.memory_space<vmem>>, vector<8x80xf32>
    tpu.vector_store %arg13[%c1_21, %c11_22], %176 {strides = array<i32>} : memref<10x128xf32, #tpu.memory_space<vmem>>, vector<8x80xf32>,
    %c0_23 = arith.constant 0 : index
    %c0_24 = arith.constant 0 : index
    %178 = vector.load %arg13[%c0_23, %c0_24] : memref<10x128xf32, #tpu.memory_space<vmem>>, vector<10x128xf32>
    %cst_25 = arith.constant 0.000000e+00 : f32
    %179 = vector.broadcast %cst_25 : f32 to vector<8x80xf32>
    %c0_26 = arith.constant 0 : index
    %180 = memref.load %arg7[%c0_26] : memref<81xf32, #tpu.memory_space<smem>>
    %181 = vector.extract_strided_slice %178 {offsets = [0, 0], sizes = [8, 80], strides = [1, 1]} : vector<10x128xf32> to vector<8x80xf32>
    %182 = vector.broadcast %180 : f32 to vector<8x80xf32>
    %183 = arith.mulf %182, %181 : vector<8x80xf32>
    %184 = arith.addf %179, %183 : vector<8x80xf32>
    %c1_27 = arith.constant 1 : index
    %185 = memref.load %arg7[%c1_27] : memref<81xf32, #tpu.memory_space<smem>>
    %186 = vector.extract_strided_slice %178 {offsets = [0, 1], sizes = [8, 80], strides = [1, 1]} : vector<10x128xf32> to vector<8x80xf32>
    %187 = vector.broadcast %185 : f32 to vector<8x80xf32>
    %188 = arith.mulf %187, %186 : vector<8x80xf32>
    %189 = arith.addf %184, %188 : vector<8x80xf32>
    %c2_28 = arith.constant 2 : index
    %190 = memref.load %arg7[%c2_28] : memref<81xf32, #tpu.memory_space<smem>>
    %191 = vector.extract_strided_slice %178 {offsets = [0, 2], sizes = [8, 80], strides = [1, 1]} : vector<10x128xf32> to vector<8x80xf32>
    %192 = vector.broadcast %190 : f32 to vector<8x80xf32>
    %193 = arith.mulf %192, %191 : vector<8x80xf32>
    %194 = arith.addf %189, %193 : vector<8x80xf32>
    %c3_29 = arith.constant 3 : index
    %195 = memref.load %arg7[%c3_29] : memref<81xf32, #tpu.memory_space<smem>>
    %196 = vector.extract_strided_slice %178 {offsets = [0, 10], sizes = [8, 80], strides = [1, 1]} : vector<10x128xf32> to vector<8x80xf32>
    %197 = vector.broadcast %195 : f32 to vector<8x80xf32>
    %198 = arith.mulf %197, %196 : vector<8x80xf32>
    %199 = arith.addf %194, %198 : vector<8x80xf32>
    %c4_30 = arith.constant 4 : index
    %200 = memref.load %arg7[%c4_30] : memref<81xf32, #tpu.memory_space<smem>>
    %201 = vector.extract_strided_slice %178 {offsets = [0, 11], sizes = [8, 80], strides = [1, 1]} : vector<10x128xf32> to vector<8x80xf32>
    %202 = vector.broadcast %200 : f32 to vector<8x80xf32>
    %203 = arith.mulf %202, %201 : vector<8x80xf32>
    %204 = arith.addf %199, %203 : vector<8x80xf32>
    %c5_31 = arith.constant 5 : index
    %205 = memref.load %arg7[%c5_31] : memref<81xf32, #tpu.memory_space<smem>>
    %206 = vector.extract_strided_slice %178 {offsets = [0, 12], sizes = [8, 80], strides = [1, 1]} : vector<10x128xf32> to vector<8x80xf32>
    %207 = vector.broadcast %205 : f32 to vector<8x80xf32>
    %208 = arith.mulf %207, %206 : vector<8x80xf32>
    %209 = arith.addf %204, %208 : vector<8x80xf32>
    %c6_32 = arith.constant 6 : index
    %210 = memref.load %arg7[%c6_32] : memref<81xf32, #tpu.memory_space<smem>>
    %211 = vector.extract_strided_slice %178 {offsets = [0, 20], sizes = [8, 80], strides = [1, 1]} : vector<10x128xf32> to vector<8x80xf32>
    %212 = vector.broadcast %210 : f32 to vector<8x80xf32>
    %213 = arith.mulf %212, %211 : vector<8x80xf32>
    %214 = arith.addf %209, %213 : vector<8x80xf32>
    %c7_33 = arith.constant 7 : index
    %215 = memref.load %arg7[%c7_33] : memref<81xf32, #tpu.memory_space<smem>>
    %216 = vector.extract_strided_slice %178 {offsets = [0, 21], sizes = [8, 80], strides = [1, 1]} : vector<10x128xf32> to vector<8x80xf32>
    %217 = vector.broadcast %215 : f32 to vector<8x80xf32>
    %218 = arith.mulf %217, %216 : vector<8x80xf32>
    %219 = arith.addf %214, %218 : vector<8x80xf32>
    %c8_34 = arith.constant 8 : index
    %220 = memref.load %arg7[%c8_34] : memref<81xf32, #tpu.memory_space<smem>>
    %221 = vector.extract_strided_slice %178 {offsets = [0, 22], sizes = [8, 80], strides = [1, 1]} : vector<10x128xf32> to vector<8x80xf32>
    %222 = vector.broadcast %220 : f32 to vector<8x80xf32>
    %223 = arith.mulf %222, %221 : vector<8x80xf32>
    %224 = arith.addf %219, %223 : vector<8x80xf32>
    %c9_35 = arith.constant 9 : index
    %225 = memref.load %arg7[%c9_35] : memref<81xf32, #tpu.memory_space<smem>>
    %226 = vector.extract_strided_slice %178 {offsets = [1, 0], sizes = [8, 80], strides = [1, 1]} : vector<10x128xf32> to vector<8x80xf32>
    %227 = vector.broadcast %225 : f32 to vector<8x80xf32>
    %228 = arith.mulf %227, %226 : vector<8x80xf32>
    %229 = arith.addf %224, %228 : vector<8x80xf32>
    %c10_36 = arith.constant 10 : index
    %230 = memref.load %arg7[%c10_36] : memref<81xf32, #tpu.memory_space<smem>>
    %231 = vector.extract_strided_slice %178 {offsets = [1, 1], sizes = [8, 80], strides = [1, 1]} : vector<10x128xf32> to vector<8x80xf32>
    %232 = vector.broadcast %230 : f32 to vector<8x80xf32>
    %233 = arith.mulf %232, %231 : vector<8x80xf32>
    %234 = arith.addf %229, %233 : vector<8x80xf32>
    %c11_37 = arith.constant 11 : index
    %235 = memref.load %arg7[%c11_37] : memref<81xf32, #tpu.memory_space<smem>>
    %236 = vector.extract_strided_slice %178 {offsets = [1, 2], sizes = [8, 80], strides = [1, 1]} : vector<10x128xf32> to vector<8x80xf32>
    %237 = vector.broadcast %235 : f32 to vector<8x80xf32>
    %238 = arith.mulf %237, %236 : vector<8x80xf32>
    %239 = arith.addf %234, %238 : vector<8x80xf32>
    %c12_38 = arith.constant 12 : index
    %240 = memref.load %arg7[%c12_38] : memref<81xf32, #tpu.memory_space<smem>>
    %241 = vector.extract_strided_slice %178 {offsets = [1, 10], sizes = [8, 80], strides = [1, 1]} : vector<10x128xf32> to vector<8x80xf32>
    %242 = vector.broadcast %240 : f32 to vector<8x80xf32>
    %243 = arith.mulf %242, %241 : vector<8x80xf32>
    %244 = arith.addf %239, %243 : vector<8x80xf32>
    %c13_39 = arith.constant 13 : index
    %245 = memref.load %arg7[%c13_39] : memref<81xf32, #tpu.memory_space<smem>>
    %246 = vector.extract_strided_slice %178 {offsets = [1, 11], sizes = [8, 80], strides = [1, 1]} : vector<10x128xf32> to vector<8x80xf32>
    %247 = vector.broadcast %245 : f32 to vector<8x80xf32>
    %248 = arith.mulf %247, %246 : vector<8x80xf32>
    %249 = arith.addf %244, %248 : vector<8x80xf32>
    %c14_40 = arith.constant 14 : index
    %250 = memref.load %arg7[%c14_40] : memref<81xf32, #tpu.memory_space<smem>>
    %251 = vector.extract_strided_slice %178 {offsets = [1, 12], sizes = [8, 80], strides = [1, 1]} : vector<10x128xf32> to vector<8x80xf32>
    %252 = vector.broadcast %250 : f32 to vector<8x80xf32>
    %253 = arith.mulf %252, %251 : vector<8x80xf32>
    %254 = arith.addf %249, %253 : vector<8x80xf32>
    %c15_41 = arith.constant 15 : index
    %255 = memref.load %arg7[%c15_41] : memref<81xf32, #tpu.memory_space<smem>>
    %256 = vector.extract_strided_slice %178 {offsets = [1, 20], sizes = [8, 80], strides = [1, 1]} : vector<10x128xf32> to vector<8x80xf32>
    %257 = vector.broadcast %255 : f32 to vector<8x80xf32>
    %258 = arith.mulf %257, %256 : vector<8x80xf32>
    %259 = arith.addf %254, %258 : vector<8x80xf32>
    %c16_42 = arith.constant 16 : index
    %260 = memref.load %arg7[%c16_42] : memref<81xf32, #tpu.memory_space<smem>>
    %261 = vector.extract_strided_slice %178 {offsets = [1, 21], sizes = [8, 80], strides = [1, 1]} : vector<10x128xf32> to vector<8x80xf32>
    %262 = vector.broadcast %260 : f32 to vector<8x80xf32>
    %263 = arith.mulf %262, %261 : vector<8x80xf32>
    %264 = arith.addf %259, %263 : vector<8x80xf32>
    %c17_43 = arith.constant 17 : index
    %265 = memref.load %arg7[%c17_43] : memref<81xf32, #tpu.memory_space<smem>>
    %266 = vector.extract_strided_slice %178 {offsets = [1, 22], sizes = [8, 80], strides = [1, 1]} : vector<10x128xf32> to vector<8x80xf32>
    %267 = vector.broadcast %265 : f32 to vector<8x80xf32>
    %268 = arith.mulf %267, %266 : vector<8x80xf32>
    %269 = arith.addf %264, %268 : vector<8x80xf32>
    %c18_44 = arith.constant 18 : index
    %270 = memref.load %arg7[%c18_44] : memref<81xf32, #tpu.memory_space<smem>>
    %271 = vector.extract_strided_slice %178 {offsets = [2, 0], sizes = [8, 80], strides = [1, 1]} : vector<10x128xf32> to vector<8x80xf32>
    %272 = vector.broadcast %270 : f32 to vector<8x80xf32>
    %273 = arith.mulf %272, %271 : vector<8x80xf32>
    %274 = arith.addf %269, %273 : vector<8x80xf32>
    %c19_45 = arith.constant 19 : index
    %275 = memref.load %arg7[%c19_45] : memref<81xf32, #tpu.memory_space<smem>>
    %276 = vector.extract_strided_slice %178 {offsets = [2, 1], sizes = [8, 80], strides = [1, 1]} : vector<10x128xf32> to vector<8x80xf32>
    %277 = vector.broadcast %275 : f32 to vector<8x80xf32>
    %278 = arith.mulf %277, %276 : vector<8x80xf32>
    %279 = arith.addf %274, %278 : vector<8x80xf32>
    %c20_46 = arith.constant 20 : index
    %280 = memref.load %arg7[%c20_46] : memref<81xf32, #tpu.memory_space<smem>>
    %281 = vector.extract_strided_slice %178 {offsets = [2, 2], sizes = [8, 80], strides = [1, 1]} : vector<10x128xf32> to vector<8x80xf32>
    %282 = vector.broadcast %280 : f32 to vector<8x80xf32>
    %283 = arith.mulf %282, %281 : vector<8x80xf32>
    %284 = arith.addf %279, %283 : vector<8x80xf32>
    %c21_47 = arith.constant 21 : index
    %285 = memref.load %arg7[%c21_47] : memref<81xf32, #tpu.memory_space<smem>>
    %286 = vector.extract_strided_slice %178 {offsets = [2, 10], sizes = [8, 80], strides = [1, 1]} : vector<10x128xf32> to vector<8x80xf32>
    %287 = vector.broadcast %285 : f32 to vector<8x80xf32>
    %288 = arith.mulf %287, %286 : vector<8x80xf32>
    %289 = arith.addf %284, %288 : vector<8x80xf32>
    %c22_48 = arith.constant 22 : index
    %290 = memref.load %arg7[%c22_48] : memref<81xf32, #tpu.memory_space<smem>>
    %291 = vector.extract_strided_slice %178 {offsets = [2, 11], sizes = [8, 80], strides = [1, 1]} : vector<10x128xf32> to vector<8x80xf32>
    %292 = vector.broadcast %290 : f32 to vector<8x80xf32>
    %293 = arith.mulf %292, %291 : vector<8x80xf32>
    %294 = arith.addf %289, %293 : vector<8x80xf32>
    %c23_49 = arith.constant 23 : index
    %295 = memref.load %arg7[%c23_49] : memref<81xf32, #tpu.memory_space<smem>>
    %296 = vector.extract_strided_slice %178 {offsets = [2, 12], sizes = [8, 80], strides = [1, 1]} : vector<10x128xf32> to vector<8x80xf32>
    %297 = vector.broadcast %295 : f32 to vector<8x80xf32>
    %298 = arith.mulf %297, %296 : vector<8x80xf32>
    %299 = arith.addf %294, %298 : vector<8x80xf32>
    %c24_50 = arith.constant 24 : index
    %300 = memref.load %arg7[%c24_50] : memref<81xf32, #tpu.memory_space<smem>>
    %301 = vector.extract_strided_slice %178 {offsets = [2, 20], sizes = [8, 80], strides = [1, 1]} : vector<10x128xf32> to vector<8x80xf32>
    %302 = vector.broadcast %300 : f32 to vector<8x80xf32>
    %303 = arith.mulf %302, %301 : vector<8x80xf32>
    %304 = arith.addf %299, %303 : vector<8x80xf32>
    %c25_51 = arith.constant 25 : index
    %305 = memref.load %arg7[%c25_51] : memref<81xf32, #tpu.memory_space<smem>>
    %306 = vector.extract_strided_slice %178 {offsets = [2, 21], sizes = [8, 80], strides = [1, 1]} : vector<10x128xf32> to vector<8x80xf32>
    %307 = vector.broadcast %305 : f32 to vector<8x80xf32>
    %308 = arith.mulf %307, %306 : vector<8x80xf32>
    %309 = arith.addf %304, %308 : vector<8x80xf32>
    %c26_52 = arith.constant 26 : index
    %310 = memref.load %arg7[%c26_52] : memref<81xf32, #tpu.memory_space<smem>>
    %311 = vector.extract_strided_slice %178 {offsets = [2, 22], sizes = [8, 80], strides = [1, 1]} : vector<10x128xf32> to vector<8x80xf32>
    %312 = vector.broadcast %310 : f32 to vector<8x80xf32>
    %313 = arith.mulf %312, %311 : vector<8x80xf32>
    %314 = arith.addf %309, %313 : vector<8x80xf32>
    %c0_53 = arith.constant 0 : index
    %315 = memref.load %arg8[%c0_53] : memref<3xf32, #tpu.memory_space<smem>>
    %316 = vector.broadcast %315 : f32 to vector<8x80xf32>
    %317 = arith.mulf %316, %314 : vector<8x80xf32>
    %c0_54 = arith.constant 0 : index
    %318 = memref.load %arg9[%c0_54] : memref<3xf32, #tpu.memory_space<smem>>
    %319 = vector.broadcast %318 : f32 to vector<8x80xf32>
    %320 = arith.addf %317, %319 : vector<8x80xf32>
    %cst_55 = arith.constant 0.000000e+00 : f32
    %321 = vector.broadcast %cst_55 : f32 to vector<8x80xf32>
    %322 = arith.maximumf %320, %321 : vector<8x80xf32>
    %323 = arith.addf %322, %157 : vector<8x80xf32>
    %324 = arith.mulf %323, %2 : vector<8x80xf32>
    %c1_56 = arith.constant 1 : index
    %c11_57 = arith.constant 11 : index
    %325 = vector.load %arg13[%c1_56, %c11_57] : memref<10x128xf32, #tpu.memory_space<vmem>>, vector<8x80xf32>
    tpu.vector_store %arg13[%c1_56, %c11_57], %324 {strides = array<i32>} : memref<10x128xf32, #tpu.memory_space<vmem>>, vector<8x80xf32>,
    %c0_58 = arith.constant 0 : index
    %c0_59 = arith.constant 0 : index
    %326 = vector.load %arg13[%c0_58, %c0_59] : memref<10x128xf32, #tpu.memory_space<vmem>>, vector<10x128xf32>
    %cst_60 = arith.constant 0.000000e+00 : f32
    %327 = vector.broadcast %cst_60 : f32 to vector<8x80xf32>
    %c27 = arith.constant 27 : index
    %328 = memref.load %arg7[%c27] : memref<81xf32, #tpu.memory_space<smem>>
    %329 = vector.extract_strided_slice %326 {offsets = [0, 0], sizes = [8, 80], strides = [1, 1]} : vector<10x128xf32> to vector<8x80xf32>
    %330 = vector.broadcast %328 : f32 to vector<8x80xf32>
    %331 = arith.mulf %330, %329 : vector<8x80xf32>
    %332 = arith.addf %327, %331 : vector<8x80xf32>
    %c28 = arith.constant 28 : index
    %333 = memref.load %arg7[%c28] : memref<81xf32, #tpu.memory_space<smem>>
    %334 = vector.extract_strided_slice %326 {offsets = [0, 1], sizes = [8, 80], strides = [1, 1]} : vector<10x128xf32> to vector<8x80xf32>
    %335 = vector.broadcast %333 : f32 to vector<8x80xf32>
    %336 = arith.mulf %335, %334 : vector<8x80xf32>
    %337 = arith.addf %332, %336 : vector<8x80xf32>
    %c29 = arith.constant 29 : index
    %338 = memref.load %arg7[%c29] : memref<81xf32, #tpu.memory_space<smem>>
    %339 = vector.extract_strided_slice %326 {offsets = [0, 2], sizes = [8, 80], strides = [1, 1]} : vector<10x128xf32> to vector<8x80xf32>
    %340 = vector.broadcast %338 : f32 to vector<8x80xf32>
    %341 = arith.mulf %340, %339 : vector<8x80xf32>
    %342 = arith.addf %337, %341 : vector<8x80xf32>
    %c30 = arith.constant 30 : index
    %343 = memref.load %arg7[%c30] : memref<81xf32, #tpu.memory_space<smem>>
    %344 = vector.extract_strided_slice %326 {offsets = [0, 10], sizes = [8, 80], strides = [1, 1]} : vector<10x128xf32> to vector<8x80xf32>
    %345 = vector.broadcast %343 : f32 to vector<8x80xf32>
    %346 = arith.mulf %345, %344 : vector<8x80xf32>
    %347 = arith.addf %342, %346 : vector<8x80xf32>
    %c31 = arith.constant 31 : index
    %348 = memref.load %arg7[%c31] : memref<81xf32, #tpu.memory_space<smem>>
    %349 = vector.extract_strided_slice %326 {offsets = [0, 11], sizes = [8, 80], strides = [1, 1]} : vector<10x128xf32> to vector<8x80xf32>
    %350 = vector.broadcast %348 : f32 to vector<8x80xf32>
    %351 = arith.mulf %350, %349 : vector<8x80xf32>
    %352 = arith.addf %347, %351 : vector<8x80xf32>
    %c32 = arith.constant 32 : index
    %353 = memref.load %arg7[%c32] : memref<81xf32, #tpu.memory_space<smem>>
    %354 = vector.extract_strided_slice %326 {offsets = [0, 12], sizes = [8, 80], strides = [1, 1]} : vector<10x128xf32> to vector<8x80xf32>
    %355 = vector.broadcast %353 : f32 to vector<8x80xf32>
    %356 = arith.mulf %355, %354 : vector<8x80xf32>
    %357 = arith.addf %352, %356 : vector<8x80xf32>
    %c33 = arith.constant 33 : index
    %358 = memref.load %arg7[%c33] : memref<81xf32, #tpu.memory_space<smem>>
    %359 = vector.extract_strided_slice %326 {offsets = [0, 20], sizes = [8, 80], strides = [1, 1]} : vector<10x128xf32> to vector<8x80xf32>
    %360 = vector.broadcast %358 : f32 to vector<8x80xf32>
    %361 = arith.mulf %360, %359 : vector<8x80xf32>
    %362 = arith.addf %357, %361 : vector<8x80xf32>
    %c34 = arith.constant 34 : index
    %363 = memref.load %arg7[%c34] : memref<81xf32, #tpu.memory_space<smem>>
    %364 = vector.extract_strided_slice %326 {offsets = [0, 21], sizes = [8, 80], strides = [1, 1]} : vector<10x128xf32> to vector<8x80xf32>
    %365 = vector.broadcast %363 : f32 to vector<8x80xf32>
    %366 = arith.mulf %365, %364 : vector<8x80xf32>
    %367 = arith.addf %362, %366 : vector<8x80xf32>
    %c35 = arith.constant 35 : index
    %368 = memref.load %arg7[%c35] : memref<81xf32, #tpu.memory_space<smem>>
    %369 = vector.extract_strided_slice %326 {offsets = [0, 22], sizes = [8, 80], strides = [1, 1]} : vector<10x128xf32> to vector<8x80xf32>
    %370 = vector.broadcast %368 : f32 to vector<8x80xf32>
    %371 = arith.mulf %370, %369 : vector<8x80xf32>
    %372 = arith.addf %367, %371 : vector<8x80xf32>
    %c36 = arith.constant 36 : index
    %373 = memref.load %arg7[%c36] : memref<81xf32, #tpu.memory_space<smem>>
    %374 = vector.extract_strided_slice %326 {offsets = [1, 0], sizes = [8, 80], strides = [1, 1]} : vector<10x128xf32> to vector<8x80xf32>
    %375 = vector.broadcast %373 : f32 to vector<8x80xf32>
    %376 = arith.mulf %375, %374 : vector<8x80xf32>
    %377 = arith.addf %372, %376 : vector<8x80xf32>
    %c37 = arith.constant 37 : index
    %378 = memref.load %arg7[%c37] : memref<81xf32, #tpu.memory_space<smem>>
    %379 = vector.extract_strided_slice %326 {offsets = [1, 1], sizes = [8, 80], strides = [1, 1]} : vector<10x128xf32> to vector<8x80xf32>
    %380 = vector.broadcast %378 : f32 to vector<8x80xf32>
    %381 = arith.mulf %380, %379 : vector<8x80xf32>
    %382 = arith.addf %377, %381 : vector<8x80xf32>
    %c38 = arith.constant 38 : index
    %383 = memref.load %arg7[%c38] : memref<81xf32, #tpu.memory_space<smem>>
    %384 = vector.extract_strided_slice %326 {offsets = [1, 2], sizes = [8, 80], strides = [1, 1]} : vector<10x128xf32> to vector<8x80xf32>
    %385 = vector.broadcast %383 : f32 to vector<8x80xf32>
    %386 = arith.mulf %385, %384 : vector<8x80xf32>
    %387 = arith.addf %382, %386 : vector<8x80xf32>
    %c39 = arith.constant 39 : index
    %388 = memref.load %arg7[%c39] : memref<81xf32, #tpu.memory_space<smem>>
    %389 = vector.extract_strided_slice %326 {offsets = [1, 10], sizes = [8, 80], strides = [1, 1]} : vector<10x128xf32> to vector<8x80xf32>
    %390 = vector.broadcast %388 : f32 to vector<8x80xf32>
    %391 = arith.mulf %390, %389 : vector<8x80xf32>
    %392 = arith.addf %387, %391 : vector<8x80xf32>
    %c40 = arith.constant 40 : index
    %393 = memref.load %arg7[%c40] : memref<81xf32, #tpu.memory_space<smem>>
    %394 = vector.extract_strided_slice %326 {offsets = [1, 11], sizes = [8, 80], strides = [1, 1]} : vector<10x128xf32> to vector<8x80xf32>
    %395 = vector.broadcast %393 : f32 to vector<8x80xf32>
    %396 = arith.mulf %395, %394 : vector<8x80xf32>
    %397 = arith.addf %392, %396 : vector<8x80xf32>
    %c41 = arith.constant 41 : index
    %398 = memref.load %arg7[%c41] : memref<81xf32, #tpu.memory_space<smem>>
    %399 = vector.extract_strided_slice %326 {offsets = [1, 12], sizes = [8, 80], strides = [1, 1]} : vector<10x128xf32> to vector<8x80xf32>
    %400 = vector.broadcast %398 : f32 to vector<8x80xf32>
    %401 = arith.mulf %400, %399 : vector<8x80xf32>
    %402 = arith.addf %397, %401 : vector<8x80xf32>
    %c42 = arith.constant 42 : index
    %403 = memref.load %arg7[%c42] : memref<81xf32, #tpu.memory_space<smem>>
    %404 = vector.extract_strided_slice %326 {offsets = [1, 20], sizes = [8, 80], strides = [1, 1]} : vector<10x128xf32> to vector<8x80xf32>
    %405 = vector.broadcast %403 : f32 to vector<8x80xf32>
    %406 = arith.mulf %405, %404 : vector<8x80xf32>
    %407 = arith.addf %402, %406 : vector<8x80xf32>
    %c43 = arith.constant 43 : index
    %408 = memref.load %arg7[%c43] : memref<81xf32, #tpu.memory_space<smem>>
    %409 = vector.extract_strided_slice %326 {offsets = [1, 21], sizes = [8, 80], strides = [1, 1]} : vector<10x128xf32> to vector<8x80xf32>
    %410 = vector.broadcast %408 : f32 to vector<8x80xf32>
    %411 = arith.mulf %410, %409 : vector<8x80xf32>
    %412 = arith.addf %407, %411 : vector<8x80xf32>
    %c44 = arith.constant 44 : index
    %413 = memref.load %arg7[%c44] : memref<81xf32, #tpu.memory_space<smem>>
    %414 = vector.extract_strided_slice %326 {offsets = [1, 22], sizes = [8, 80], strides = [1, 1]} : vector<10x128xf32> to vector<8x80xf32>
    %415 = vector.broadcast %413 : f32 to vector<8x80xf32>
    %416 = arith.mulf %415, %414 : vector<8x80xf32>
    %417 = arith.addf %412, %416 : vector<8x80xf32>
    %c45 = arith.constant 45 : index
    %418 = memref.load %arg7[%c45] : memref<81xf32, #tpu.memory_space<smem>>
    %419 = vector.extract_strided_slice %326 {offsets = [2, 0], sizes = [8, 80], strides = [1, 1]} : vector<10x128xf32> to vector<8x80xf32>
    %420 = vector.broadcast %418 : f32 to vector<8x80xf32>
    %421 = arith.mulf %420, %419 : vector<8x80xf32>
    %422 = arith.addf %417, %421 : vector<8x80xf32>
    %c46 = arith.constant 46 : index
    %423 = memref.load %arg7[%c46] : memref<81xf32, #tpu.memory_space<smem>>
    %424 = vector.extract_strided_slice %326 {offsets = [2, 1], sizes = [8, 80], strides = [1, 1]} : vector<10x128xf32> to vector<8x80xf32>
    %425 = vector.broadcast %423 : f32 to vector<8x80xf32>
    %426 = arith.mulf %425, %424 : vector<8x80xf32>
    %427 = arith.addf %422, %426 : vector<8x80xf32>
    %c47 = arith.constant 47 : index
    %428 = memref.load %arg7[%c47] : memref<81xf32, #tpu.memory_space<smem>>
    %429 = vector.extract_strided_slice %326 {offsets = [2, 2], sizes = [8, 80], strides = [1, 1]} : vector<10x128xf32> to vector<8x80xf32>
    %430 = vector.broadcast %428 : f32 to vector<8x80xf32>
    %431 = arith.mulf %430, %429 : vector<8x80xf32>
    %432 = arith.addf %427, %431 : vector<8x80xf32>
    %c48 = arith.constant 48 : index
    %433 = memref.load %arg7[%c48] : memref<81xf32, #tpu.memory_space<smem>>
    %434 = vector.extract_strided_slice %326 {offsets = [2, 10], sizes = [8, 80], strides = [1, 1]} : vector<10x128xf32> to vector<8x80xf32>
    %435 = vector.broadcast %433 : f32 to vector<8x80xf32>
    %436 = arith.mulf %435, %434 : vector<8x80xf32>
    %437 = arith.addf %432, %436 : vector<8x80xf32>
    %c49 = arith.constant 49 : index
    %438 = memref.load %arg7[%c49] : memref<81xf32, #tpu.memory_space<smem>>
    %439 = vector.extract_strided_slice %326 {offsets = [2, 11], sizes = [8, 80], strides = [1, 1]} : vector<10x128xf32> to vector<8x80xf32>
    %440 = vector.broadcast %438 : f32 to vector<8x80xf32>
    %441 = arith.mulf %440, %439 : vector<8x80xf32>
    %442 = arith.addf %437, %441 : vector<8x80xf32>
    %c50 = arith.constant 50 : index
    %443 = memref.load %arg7[%c50] : memref<81xf32, #tpu.memory_space<smem>>
    %444 = vector.extract_strided_slice %326 {offsets = [2, 12], sizes = [8, 80], strides = [1, 1]} : vector<10x128xf32> to vector<8x80xf32>
    %445 = vector.broadcast %443 : f32 to vector<8x80xf32>
    %446 = arith.mulf %445, %444 : vector<8x80xf32>
    %447 = arith.addf %442, %446 : vector<8x80xf32>
    %c51 = arith.constant 51 : index
    %448 = memref.load %arg7[%c51] : memref<81xf32, #tpu.memory_space<smem>>
    %449 = vector.extract_strided_slice %326 {offsets = [2, 20], sizes = [8, 80], strides = [1, 1]} : vector<10x128xf32> to vector<8x80xf32>
    %450 = vector.broadcast %448 : f32 to vector<8x80xf32>
    %451 = arith.mulf %450, %449 : vector<8x80xf32>
    %452 = arith.addf %447, %451 : vector<8x80xf32>
    %c52 = arith.constant 52 : index
    %453 = memref.load %arg7[%c52] : memref<81xf32, #tpu.memory_space<smem>>
    %454 = vector.extract_strided_slice %326 {offsets = [2, 21], sizes = [8, 80], strides = [1, 1]} : vector<10x128xf32> to vector<8x80xf32>
    %455 = vector.broadcast %453 : f32 to vector<8x80xf32>
    %456 = arith.mulf %455, %454 : vector<8x80xf32>
    %457 = arith.addf %452, %456 : vector<8x80xf32>
    %c53 = arith.constant 53 : index
    %458 = memref.load %arg7[%c53] : memref<81xf32, #tpu.memory_space<smem>>
    %459 = vector.extract_strided_slice %326 {offsets = [2, 22], sizes = [8, 80], strides = [1, 1]} : vector<10x128xf32> to vector<8x80xf32>
    %460 = vector.broadcast %458 : f32 to vector<8x80xf32>
    %461 = arith.mulf %460, %459 : vector<8x80xf32>
    %462 = arith.addf %457, %461 : vector<8x80xf32>
    %c1_61 = arith.constant 1 : index
    %463 = memref.load %arg8[%c1_61] : memref<3xf32, #tpu.memory_space<smem>>
    %464 = vector.broadcast %463 : f32 to vector<8x80xf32>
    %465 = arith.mulf %464, %462 : vector<8x80xf32>
    %c1_62 = arith.constant 1 : index
    %466 = memref.load %arg9[%c1_62] : memref<3xf32, #tpu.memory_space<smem>>
    %467 = vector.broadcast %466 : f32 to vector<8x80xf32>
    %468 = arith.addf %465, %467 : vector<8x80xf32>
    %cst_63 = arith.constant 0.000000e+00 : f32
    %469 = vector.broadcast %cst_63 : f32 to vector<8x80xf32>
    %470 = arith.maximumf %468, %469 : vector<8x80xf32>
    %471 = arith.addf %470, %165 : vector<8x80xf32>
    %472 = arith.mulf %471, %2 : vector<8x80xf32>
    %c1_64 = arith.constant 1 : index
    %c11_65 = arith.constant 11 : index
    %473 = vector.load %arg13[%c1_64, %c11_65] : memref<10x128xf32, #tpu.memory_space<vmem>>, vector<8x80xf32>
    tpu.vector_store %arg13[%c1_64, %c11_65], %472 {strides = array<i32>} : memref<10x128xf32, #tpu.memory_space<vmem>>, vector<8x80xf32>,
    %c0_66 = arith.constant 0 : index
    %c0_67 = arith.constant 0 : index
    %474 = vector.load %arg13[%c0_66, %c0_67] : memref<10x128xf32, #tpu.memory_space<vmem>>, vector<10x128xf32>
    %cst_68 = arith.constant 0.000000e+00 : f32
    %475 = vector.broadcast %cst_68 : f32 to vector<8x80xf32>
    %c54 = arith.constant 54 : index
    %476 = memref.load %arg7[%c54] : memref<81xf32, #tpu.memory_space<smem>>
    %477 = vector.extract_strided_slice %474 {offsets = [0, 0], sizes = [8, 80], strides = [1, 1]} : vector<10x128xf32> to vector<8x80xf32>
    %478 = vector.broadcast %476 : f32 to vector<8x80xf32>
    %479 = arith.mulf %478, %477 : vector<8x80xf32>
    %480 = arith.addf %475, %479 : vector<8x80xf32>
    %c55 = arith.constant 55 : index
    %481 = memref.load %arg7[%c55] : memref<81xf32, #tpu.memory_space<smem>>
    %482 = vector.extract_strided_slice %474 {offsets = [0, 1], sizes = [8, 80], strides = [1, 1]} : vector<10x128xf32> to vector<8x80xf32>
    %483 = vector.broadcast %481 : f32 to vector<8x80xf32>
    %484 = arith.mulf %483, %482 : vector<8x80xf32>
    %485 = arith.addf %480, %484 : vector<8x80xf32>
    %c56 = arith.constant 56 : index
    %486 = memref.load %arg7[%c56] : memref<81xf32, #tpu.memory_space<smem>>
    %487 = vector.extract_strided_slice %474 {offsets = [0, 2], sizes = [8, 80], strides = [1, 1]} : vector<10x128xf32> to vector<8x80xf32>
    %488 = vector.broadcast %486 : f32 to vector<8x80xf32>
    %489 = arith.mulf %488, %487 : vector<8x80xf32>
    %490 = arith.addf %485, %489 : vector<8x80xf32>
    %c57 = arith.constant 57 : index
    %491 = memref.load %arg7[%c57] : memref<81xf32, #tpu.memory_space<smem>>
    %492 = vector.extract_strided_slice %474 {offsets = [0, 10], sizes = [8, 80], strides = [1, 1]} : vector<10x128xf32> to vector<8x80xf32>
    %493 = vector.broadcast %491 : f32 to vector<8x80xf32>
    %494 = arith.mulf %493, %492 : vector<8x80xf32>
    %495 = arith.addf %490, %494 : vector<8x80xf32>
    %c58 = arith.constant 58 : index
    %496 = memref.load %arg7[%c58] : memref<81xf32, #tpu.memory_space<smem>>
    %497 = vector.extract_strided_slice %474 {offsets = [0, 11], sizes = [8, 80], strides = [1, 1]} : vector<10x128xf32> to vector<8x80xf32>
    %498 = vector.broadcast %496 : f32 to vector<8x80xf32>
    %499 = arith.mulf %498, %497 : vector<8x80xf32>
    %500 = arith.addf %495, %499 : vector<8x80xf32>
    %c59 = arith.constant 59 : index
    %501 = memref.load %arg7[%c59] : memref<81xf32, #tpu.memory_space<smem>>
    %502 = vector.extract_strided_slice %474 {offsets = [0, 12], sizes = [8, 80], strides = [1, 1]} : vector<10x128xf32> to vector<8x80xf32>
    %503 = vector.broadcast %501 : f32 to vector<8x80xf32>
    %504 = arith.mulf %503, %502 : vector<8x80xf32>
    %505 = arith.addf %500, %504 : vector<8x80xf32>
    %c60 = arith.constant 60 : index
    %506 = memref.load %arg7[%c60] : memref<81xf32, #tpu.memory_space<smem>>
    %507 = vector.extract_strided_slice %474 {offsets = [0, 20], sizes = [8, 80], strides = [1, 1]} : vector<10x128xf32> to vector<8x80xf32>
    %508 = vector.broadcast %506 : f32 to vector<8x80xf32>
    %509 = arith.mulf %508, %507 : vector<8x80xf32>
    %510 = arith.addf %505, %509 : vector<8x80xf32>
    %c61 = arith.constant 61 : index
    %511 = memref.load %arg7[%c61] : memref<81xf32, #tpu.memory_space<smem>>
    %512 = vector.extract_strided_slice %474 {offsets = [0, 21], sizes = [8, 80], strides = [1, 1]} : vector<10x128xf32> to vector<8x80xf32>
    %513 = vector.broadcast %511 : f32 to vector<8x80xf32>
    %514 = arith.mulf %513, %512 : vector<8x80xf32>
    %515 = arith.addf %510, %514 : vector<8x80xf32>
    %c62 = arith.constant 62 : index
    %516 = memref.load %arg7[%c62] : memref<81xf32, #tpu.memory_space<smem>>
    %517 = vector.extract_strided_slice %474 {offsets = [0, 22], sizes = [8, 80], strides = [1, 1]} : vector<10x128xf32> to vector<8x80xf32>
    %518 = vector.broadcast %516 : f32 to vector<8x80xf32>
    %519 = arith.mulf %518, %517 : vector<8x80xf32>
    %520 = arith.addf %515, %519 : vector<8x80xf32>
    %c63 = arith.constant 63 : index
    %521 = memref.load %arg7[%c63] : memref<81xf32, #tpu.memory_space<smem>>
    %522 = vector.extract_strided_slice %474 {offsets = [1, 0], sizes = [8, 80], strides = [1, 1]} : vector<10x128xf32> to vector<8x80xf32>
    %523 = vector.broadcast %521 : f32 to vector<8x80xf32>
    %524 = arith.mulf %523, %522 : vector<8x80xf32>
    %525 = arith.addf %520, %524 : vector<8x80xf32>
    %c64 = arith.constant 64 : index
    %526 = memref.load %arg7[%c64] : memref<81xf32, #tpu.memory_space<smem>>
    %527 = vector.extract_strided_slice %474 {offsets = [1, 1], sizes = [8, 80], strides = [1, 1]} : vector<10x128xf32> to vector<8x80xf32>
    %528 = vector.broadcast %526 : f32 to vector<8x80xf32>
    %529 = arith.mulf %528, %527 : vector<8x80xf32>
    %530 = arith.addf %525, %529 : vector<8x80xf32>
    %c65 = arith.constant 65 : index
    %531 = memref.load %arg7[%c65] : memref<81xf32, #tpu.memory_space<smem>>
    %532 = vector.extract_strided_slice %474 {offsets = [1, 2], sizes = [8, 80], strides = [1, 1]} : vector<10x128xf32> to vector<8x80xf32>
    %533 = vector.broadcast %531 : f32 to vector<8x80xf32>
    %534 = arith.mulf %533, %532 : vector<8x80xf32>
    %535 = arith.addf %530, %534 : vector<8x80xf32>
    %c66 = arith.constant 66 : index
    %536 = memref.load %arg7[%c66] : memref<81xf32, #tpu.memory_space<smem>>
    %537 = vector.extract_strided_slice %474 {offsets = [1, 10], sizes = [8, 80], strides = [1, 1]} : vector<10x128xf32> to vector<8x80xf32>
    %538 = vector.broadcast %536 : f32 to vector<8x80xf32>
    %539 = arith.mulf %538, %537 : vector<8x80xf32>
    %540 = arith.addf %535, %539 : vector<8x80xf32>
    %c67 = arith.constant 67 : index
    %541 = memref.load %arg7[%c67] : memref<81xf32, #tpu.memory_space<smem>>
    %542 = vector.extract_strided_slice %474 {offsets = [1, 11], sizes = [8, 80], strides = [1, 1]} : vector<10x128xf32> to vector<8x80xf32>
    %543 = vector.broadcast %541 : f32 to vector<8x80xf32>
    %544 = arith.mulf %543, %542 : vector<8x80xf32>
    %545 = arith.addf %540, %544 : vector<8x80xf32>
    %c68 = arith.constant 68 : index
    %546 = memref.load %arg7[%c68] : memref<81xf32, #tpu.memory_space<smem>>
    %547 = vector.extract_strided_slice %474 {offsets = [1, 12], sizes = [8, 80], strides = [1, 1]} : vector<10x128xf32> to vector<8x80xf32>
    %548 = vector.broadcast %546 : f32 to vector<8x80xf32>
    %549 = arith.mulf %548, %547 : vector<8x80xf32>
    %550 = arith.addf %545, %549 : vector<8x80xf32>
    %c69 = arith.constant 69 : index
    %551 = memref.load %arg7[%c69] : memref<81xf32, #tpu.memory_space<smem>>
    %552 = vector.extract_strided_slice %474 {offsets = [1, 20], sizes = [8, 80], strides = [1, 1]} : vector<10x128xf32> to vector<8x80xf32>
    %553 = vector.broadcast %551 : f32 to vector<8x80xf32>
    %554 = arith.mulf %553, %552 : vector<8x80xf32>
    %555 = arith.addf %550, %554 : vector<8x80xf32>
    %c70 = arith.constant 70 : index
    %556 = memref.load %arg7[%c70] : memref<81xf32, #tpu.memory_space<smem>>
    %557 = vector.extract_strided_slice %474 {offsets = [1, 21], sizes = [8, 80], strides = [1, 1]} : vector<10x128xf32> to vector<8x80xf32>
    %558 = vector.broadcast %556 : f32 to vector<8x80xf32>
    %559 = arith.mulf %558, %557 : vector<8x80xf32>
    %560 = arith.addf %555, %559 : vector<8x80xf32>
    %c71 = arith.constant 71 : index
    %561 = memref.load %arg7[%c71] : memref<81xf32, #tpu.memory_space<smem>>
    %562 = vector.extract_strided_slice %474 {offsets = [1, 22], sizes = [8, 80], strides = [1, 1]} : vector<10x128xf32> to vector<8x80xf32>
    %563 = vector.broadcast %561 : f32 to vector<8x80xf32>
    %564 = arith.mulf %563, %562 : vector<8x80xf32>
    %565 = arith.addf %560, %564 : vector<8x80xf32>
    %c72 = arith.constant 72 : index
    %566 = memref.load %arg7[%c72] : memref<81xf32, #tpu.memory_space<smem>>
    %567 = vector.extract_strided_slice %474 {offsets = [2, 0], sizes = [8, 80], strides = [1, 1]} : vector<10x128xf32> to vector<8x80xf32>
    %568 = vector.broadcast %566 : f32 to vector<8x80xf32>
    %569 = arith.mulf %568, %567 : vector<8x80xf32>
    %570 = arith.addf %565, %569 : vector<8x80xf32>
    %c73 = arith.constant 73 : index
    %571 = memref.load %arg7[%c73] : memref<81xf32, #tpu.memory_space<smem>>
    %572 = vector.extract_strided_slice %474 {offsets = [2, 1], sizes = [8, 80], strides = [1, 1]} : vector<10x128xf32> to vector<8x80xf32>
    %573 = vector.broadcast %571 : f32 to vector<8x80xf32>
    %574 = arith.mulf %573, %572 : vector<8x80xf32>
    %575 = arith.addf %570, %574 : vector<8x80xf32>
    %c74 = arith.constant 74 : index
    %576 = memref.load %arg7[%c74] : memref<81xf32, #tpu.memory_space<smem>>
    %577 = vector.extract_strided_slice %474 {offsets = [2, 2], sizes = [8, 80], strides = [1, 1]} : vector<10x128xf32> to vector<8x80xf32>
    %578 = vector.broadcast %576 : f32 to vector<8x80xf32>
    %579 = arith.mulf %578, %577 : vector<8x80xf32>
    %580 = arith.addf %575, %579 : vector<8x80xf32>
    %c75 = arith.constant 75 : index
    %581 = memref.load %arg7[%c75] : memref<81xf32, #tpu.memory_space<smem>>
    %582 = vector.extract_strided_slice %474 {offsets = [2, 10], sizes = [8, 80], strides = [1, 1]} : vector<10x128xf32> to vector<8x80xf32>
    %583 = vector.broadcast %581 : f32 to vector<8x80xf32>
    %584 = arith.mulf %583, %582 : vector<8x80xf32>
    %585 = arith.addf %580, %584 : vector<8x80xf32>
    %c76 = arith.constant 76 : index
    %586 = memref.load %arg7[%c76] : memref<81xf32, #tpu.memory_space<smem>>
    %587 = vector.extract_strided_slice %474 {offsets = [2, 11], sizes = [8, 80], strides = [1, 1]} : vector<10x128xf32> to vector<8x80xf32>
    %588 = vector.broadcast %586 : f32 to vector<8x80xf32>
    %589 = arith.mulf %588, %587 : vector<8x80xf32>
    %590 = arith.addf %585, %589 : vector<8x80xf32>
    %c77 = arith.constant 77 : index
    %591 = memref.load %arg7[%c77] : memref<81xf32, #tpu.memory_space<smem>>
    %592 = vector.extract_strided_slice %474 {offsets = [2, 12], sizes = [8, 80], strides = [1, 1]} : vector<10x128xf32> to vector<8x80xf32>
    %593 = vector.broadcast %591 : f32 to vector<8x80xf32>
    %594 = arith.mulf %593, %592 : vector<8x80xf32>
    %595 = arith.addf %590, %594 : vector<8x80xf32>
    %c78 = arith.constant 78 : index
    %596 = memref.load %arg7[%c78] : memref<81xf32, #tpu.memory_space<smem>>
    %597 = vector.extract_strided_slice %474 {offsets = [2, 20], sizes = [8, 80], strides = [1, 1]} : vector<10x128xf32> to vector<8x80xf32>
    %598 = vector.broadcast %596 : f32 to vector<8x80xf32>
    %599 = arith.mulf %598, %597 : vector<8x80xf32>
    %600 = arith.addf %595, %599 : vector<8x80xf32>
    %c79 = arith.constant 79 : index
    %601 = memref.load %arg7[%c79] : memref<81xf32, #tpu.memory_space<smem>>
    %602 = vector.extract_strided_slice %474 {offsets = [2, 21], sizes = [8, 80], strides = [1, 1]} : vector<10x128xf32> to vector<8x80xf32>
    %603 = vector.broadcast %601 : f32 to vector<8x80xf32>
    %604 = arith.mulf %603, %602 : vector<8x80xf32>
    %605 = arith.addf %600, %604 : vector<8x80xf32>
    %c80 = arith.constant 80 : index
    %606 = memref.load %arg7[%c80] : memref<81xf32, #tpu.memory_space<smem>>
    %607 = vector.extract_strided_slice %474 {offsets = [2, 22], sizes = [8, 80], strides = [1, 1]} : vector<10x128xf32> to vector<8x80xf32>
    %608 = vector.broadcast %606 : f32 to vector<8x80xf32>
    %609 = arith.mulf %608, %607 : vector<8x80xf32>
    %610 = arith.addf %605, %609 : vector<8x80xf32>
    %c2_69 = arith.constant 2 : index
    %611 = memref.load %arg8[%c2_69] : memref<3xf32, #tpu.memory_space<smem>>
    %612 = vector.broadcast %611 : f32 to vector<8x80xf32>
    %613 = arith.mulf %612, %610 : vector<8x80xf32>
    %c2_70 = arith.constant 2 : index
    %614 = memref.load %arg9[%c2_70] : memref<3xf32, #tpu.memory_space<smem>>
    %615 = vector.broadcast %614 : f32 to vector<8x80xf32>
    %616 = arith.addf %613, %615 : vector<8x80xf32>
    %cst_71 = arith.constant 0.000000e+00 : f32
    %617 = vector.broadcast %cst_71 : f32 to vector<8x80xf32>
    %618 = arith.maximumf %616, %617 : vector<8x80xf32>
    %c0_72 = arith.constant 0 : index
    %619 = memref.load %arg10[%c0_72] : memref<48xf32, #tpu.memory_space<smem>>
    %620 = vector.broadcast %619 : f32 to vector<8x80xf32>
    %621 = arith.mulf %620, %322 : vector<8x80xf32>
    %c1_73 = arith.constant 1 : index
    %622 = memref.load %arg10[%c1_73] : memref<48xf32, #tpu.memory_space<smem>>
    %623 = vector.broadcast %622 : f32 to vector<8x80xf32>
    %624 = arith.mulf %623, %470 : vector<8x80xf32>
    %625 = arith.addf %621, %624 : vector<8x80xf32>
    %c2_74 = arith.constant 2 : index
    %626 = memref.load %arg10[%c2_74] : memref<48xf32, #tpu.memory_space<smem>>
    %627 = vector.broadcast %626 : f32 to vector<8x80xf32>
    %628 = arith.mulf %627, %618 : vector<8x80xf32>
    %629 = arith.addf %625, %628 : vector<8x80xf32>
    %c3_75 = arith.constant 3 : index
    %630 = memref.load %arg10[%c3_75] : memref<48xf32, #tpu.memory_space<smem>>
    %631 = vector.broadcast %630 : f32 to vector<8x80xf32>
    %632 = arith.mulf %631, %173 : vector<8x80xf32>
    %633 = arith.addf %629, %632 : vector<8x80xf32>
    %c0_76 = arith.constant 0 : index
    %634 = memref.load %arg11[%c0_76] : memref<12xf32, #tpu.memory_space<smem>>
    %635 = vector.broadcast %634 : f32 to vector<8x80xf32>
    %636 = arith.addf %633, %635 : vector<8x80xf32>
    %637 = arith.addf %636, %141 : vector<8x80xf32>
    %cst_77 = arith.constant 0.000000e+00 : f32
    %638 = vector.broadcast %cst_77 : f32 to vector<8x80xf32>
    %639 = arith.maximumf %637, %638 : vector<8x80xf32>
    %c0_78 = arith.constant 0 : index
    %c0_79 = arith.constant 0 : index
    %c0_80 = arith.constant 0 : index
    %c0_81 = arith.constant 0 : index
    %640 = vector.load %arg12[%c0_78, %c0_79, %c0_80, %c0_81] : memref<1x12x8x80xf32, #tpu.memory_space<vmem>>, vector<1x1x8x80xf32>
    %641 = vector.shape_cast %640 : vector<1x1x8x80xf32> to vector<8x80xf32>
    %642 = vector.shape_cast %639 : vector<8x80xf32> to vector<1x1x8x80xf32>
    tpu.vector_store %arg12[%c0_78, %c0_79, %c0_80, %c0_81], %642 {strides = array<i32>} : memref<1x12x8x80xf32, #tpu.memory_space<vmem>>, vector<1x1x8x80xf32>,
    %c4_82 = arith.constant 4 : index
    %643 = memref.load %arg10[%c4_82] : memref<48xf32, #tpu.memory_space<smem>>
    %644 = vector.broadcast %643 : f32 to vector<8x80xf32>
    %645 = arith.mulf %644, %322 : vector<8x80xf32>
    %c5_83 = arith.constant 5 : index
    %646 = memref.load %arg10[%c5_83] : memref<48xf32, #tpu.memory_space<smem>>
    %647 = vector.broadcast %646 : f32 to vector<8x80xf32>
    %648 = arith.mulf %647, %470 : vector<8x80xf32>
    %649 = arith.addf %645, %648 : vector<8x80xf32>
    %c6_84 = arith.constant 6 : index
    %650 = memref.load %arg10[%c6_84] : memref<48xf32, #tpu.memory_space<smem>>
    %651 = vector.broadcast %650 : f32 to vector<8x80xf32>
    %652 = arith.mulf %651, %618 : vector<8x80xf32>
    %653 = arith.addf %649, %652 : vector<8x80xf32>
    %c7_85 = arith.constant 7 : index
    %654 = memref.load %arg10[%c7_85] : memref<48xf32, #tpu.memory_space<smem>>
    %655 = vector.broadcast %654 : f32 to vector<8x80xf32>
    %656 = arith.mulf %655, %173 : vector<8x80xf32>
    %657 = arith.addf %653, %656 : vector<8x80xf32>
    %c1_86 = arith.constant 1 : index
    %658 = memref.load %arg11[%c1_86] : memref<12xf32, #tpu.memory_space<smem>>
    %659 = vector.broadcast %658 : f32 to vector<8x80xf32>
    %660 = arith.addf %657, %659 : vector<8x80xf32>
    %661 = arith.addf %660, %141 : vector<8x80xf32>
    %cst_87 = arith.constant 0.000000e+00 : f32
    %662 = vector.broadcast %cst_87 : f32 to vector<8x80xf32>
    %663 = arith.maximumf %661, %662 : vector<8x80xf32>
    %c0_88 = arith.constant 0 : index
    %c1_89 = arith.constant 1 : index
    %c0_90 = arith.constant 0 : index
    %c0_91 = arith.constant 0 : index
    %664 = vector.load %arg12[%c0_88, %c1_89, %c0_90, %c0_91] : memref<1x12x8x80xf32, #tpu.memory_space<vmem>>, vector<1x1x8x80xf32>
    %665 = vector.shape_cast %664 : vector<1x1x8x80xf32> to vector<8x80xf32>
    %666 = vector.shape_cast %663 : vector<8x80xf32> to vector<1x1x8x80xf32>
    tpu.vector_store %arg12[%c0_88, %c1_89, %c0_90, %c0_91], %666 {strides = array<i32>} : memref<1x12x8x80xf32, #tpu.memory_space<vmem>>, vector<1x1x8x80xf32>,
    %c8_92 = arith.constant 8 : index
    %667 = memref.load %arg10[%c8_92] : memref<48xf32, #tpu.memory_space<smem>>
    %668 = vector.broadcast %667 : f32 to vector<8x80xf32>
    %669 = arith.mulf %668, %322 : vector<8x80xf32>
    %c9_93 = arith.constant 9 : index
    %670 = memref.load %arg10[%c9_93] : memref<48xf32, #tpu.memory_space<smem>>
    %671 = vector.broadcast %670 : f32 to vector<8x80xf32>
    %672 = arith.mulf %671, %470 : vector<8x80xf32>
    %673 = arith.addf %669, %672 : vector<8x80xf32>
    %c10_94 = arith.constant 10 : index
    %674 = memref.load %arg10[%c10_94] : memref<48xf32, #tpu.memory_space<smem>>
    %675 = vector.broadcast %674 : f32 to vector<8x80xf32>
    %676 = arith.mulf %675, %618 : vector<8x80xf32>
    %677 = arith.addf %673, %676 : vector<8x80xf32>
    %c11_95 = arith.constant 11 : index
    %678 = memref.load %arg10[%c11_95] : memref<48xf32, #tpu.memory_space<smem>>
    %679 = vector.broadcast %678 : f32 to vector<8x80xf32>
    %680 = arith.mulf %679, %173 : vector<8x80xf32>
    %681 = arith.addf %677, %680 : vector<8x80xf32>
    %c2_96 = arith.constant 2 : index
    %682 = memref.load %arg11[%c2_96] : memref<12xf32, #tpu.memory_space<smem>>
    %683 = vector.broadcast %682 : f32 to vector<8x80xf32>
    %684 = arith.addf %681, %683 : vector<8x80xf32>
    %685 = arith.addf %684, %141 : vector<8x80xf32>
    %cst_97 = arith.constant 0.000000e+00 : f32
    %686 = vector.broadcast %cst_97 : f32 to vector<8x80xf32>
    %687 = arith.maximumf %685, %686 : vector<8x80xf32>
    %c0_98 = arith.constant 0 : index
    %c2_99 = arith.constant 2 : index
    %c0_100 = arith.constant 0 : index
    %c0_101 = arith.constant 0 : index
    %688 = vector.load %arg12[%c0_98, %c2_99, %c0_100, %c0_101] : memref<1x12x8x80xf32, #tpu.memory_space<vmem>>, vector<1x1x8x80xf32>
    %689 = vector.shape_cast %688 : vector<1x1x8x80xf32> to vector<8x80xf32>
    %690 = vector.shape_cast %687 : vector<8x80xf32> to vector<1x1x8x80xf32>
    tpu.vector_store %arg12[%c0_98, %c2_99, %c0_100, %c0_101], %690 {strides = array<i32>} : memref<1x12x8x80xf32, #tpu.memory_space<vmem>>, vector<1x1x8x80xf32>,
    %c12_102 = arith.constant 12 : index
    %691 = memref.load %arg10[%c12_102] : memref<48xf32, #tpu.memory_space<smem>>
    %692 = vector.broadcast %691 : f32 to vector<8x80xf32>
    %693 = arith.mulf %692, %322 : vector<8x80xf32>
    %c13_103 = arith.constant 13 : index
    %694 = memref.load %arg10[%c13_103] : memref<48xf32, #tpu.memory_space<smem>>
    %695 = vector.broadcast %694 : f32 to vector<8x80xf32>
    %696 = arith.mulf %695, %470 : vector<8x80xf32>
    %697 = arith.addf %693, %696 : vector<8x80xf32>
    %c14_104 = arith.constant 14 : index
    %698 = memref.load %arg10[%c14_104] : memref<48xf32, #tpu.memory_space<smem>>
    %699 = vector.broadcast %698 : f32 to vector<8x80xf32>
    %700 = arith.mulf %699, %618 : vector<8x80xf32>
    %701 = arith.addf %697, %700 : vector<8x80xf32>
    %c15_105 = arith.constant 15 : index
    %702 = memref.load %arg10[%c15_105] : memref<48xf32, #tpu.memory_space<smem>>
    %703 = vector.broadcast %702 : f32 to vector<8x80xf32>
    %704 = arith.mulf %703, %173 : vector<8x80xf32>
    %705 = arith.addf %701, %704 : vector<8x80xf32>
    %c3_106 = arith.constant 3 : index
    %706 = memref.load %arg11[%c3_106] : memref<12xf32, #tpu.memory_space<smem>>
    %707 = vector.broadcast %706 : f32 to vector<8x80xf32>
    %708 = arith.addf %705, %707 : vector<8x80xf32>
    %709 = arith.addf %708, %141 : vector<8x80xf32>
    %cst_107 = arith.constant 0.000000e+00 : f32
    %710 = vector.broadcast %cst_107 : f32 to vector<8x80xf32>
    %711 = arith.maximumf %709, %710 : vector<8x80xf32>
    %c0_108 = arith.constant 0 : index
    %c3_109 = arith.constant 3 : index
    %c0_110 = arith.constant 0 : index
    %c0_111 = arith.constant 0 : index
    %712 = vector.load %arg12[%c0_108, %c3_109, %c0_110, %c0_111] : memref<1x12x8x80xf32, #tpu.memory_space<vmem>>, vector<1x1x8x80xf32>
    %713 = vector.shape_cast %712 : vector<1x1x8x80xf32> to vector<8x80xf32>
    %714 = vector.shape_cast %711 : vector<8x80xf32> to vector<1x1x8x80xf32>
    tpu.vector_store %arg12[%c0_108, %c3_109, %c0_110, %c0_111], %714 {strides = array<i32>} : memref<1x12x8x80xf32, #tpu.memory_space<vmem>>, vector<1x1x8x80xf32>,
    %c16_112 = arith.constant 16 : index
    %715 = memref.load %arg10[%c16_112] : memref<48xf32, #tpu.memory_space<smem>>
    %716 = vector.broadcast %715 : f32 to vector<8x80xf32>
    %717 = arith.mulf %716, %322 : vector<8x80xf32>
    %c17_113 = arith.constant 17 : index
    %718 = memref.load %arg10[%c17_113] : memref<48xf32, #tpu.memory_space<smem>>
    %719 = vector.broadcast %718 : f32 to vector<8x80xf32>
    %720 = arith.mulf %719, %470 : vector<8x80xf32>
    %721 = arith.addf %717, %720 : vector<8x80xf32>
    %c18_114 = arith.constant 18 : index
    %722 = memref.load %arg10[%c18_114] : memref<48xf32, #tpu.memory_space<smem>>
    %723 = vector.broadcast %722 : f32 to vector<8x80xf32>
    %724 = arith.mulf %723, %618 : vector<8x80xf32>
    %725 = arith.addf %721, %724 : vector<8x80xf32>
    %c19_115 = arith.constant 19 : index
    %726 = memref.load %arg10[%c19_115] : memref<48xf32, #tpu.memory_space<smem>>
    %727 = vector.broadcast %726 : f32 to vector<8x80xf32>
    %728 = arith.mulf %727, %173 : vector<8x80xf32>
    %729 = arith.addf %725, %728 : vector<8x80xf32>
    %c4_116 = arith.constant 4 : index
    %730 = memref.load %arg11[%c4_116] : memref<12xf32, #tpu.memory_space<smem>>
    %731 = vector.broadcast %730 : f32 to vector<8x80xf32>
    %732 = arith.addf %729, %731 : vector<8x80xf32>
    %733 = arith.addf %732, %141 : vector<8x80xf32>
    %cst_117 = arith.constant 0.000000e+00 : f32
    %734 = vector.broadcast %cst_117 : f32 to vector<8x80xf32>
    %735 = arith.maximumf %733, %734 : vector<8x80xf32>
    %c0_118 = arith.constant 0 : index
    %c4_119 = arith.constant 4 : index
    %c0_120 = arith.constant 0 : index
    %c0_121 = arith.constant 0 : index
    %736 = vector.load %arg12[%c0_118, %c4_119, %c0_120, %c0_121] : memref<1x12x8x80xf32, #tpu.memory_space<vmem>>, vector<1x1x8x80xf32>
    %737 = vector.shape_cast %736 : vector<1x1x8x80xf32> to vector<8x80xf32>
    %738 = vector.shape_cast %735 : vector<8x80xf32> to vector<1x1x8x80xf32>
    tpu.vector_store %arg12[%c0_118, %c4_119, %c0_120, %c0_121], %738 {strides = array<i32>} : memref<1x12x8x80xf32, #tpu.memory_space<vmem>>, vector<1x1x8x80xf32>,
    %c20_122 = arith.constant 20 : index
    %739 = memref.load %arg10[%c20_122] : memref<48xf32, #tpu.memory_space<smem>>
    %740 = vector.broadcast %739 : f32 to vector<8x80xf32>
    %741 = arith.mulf %740, %322 : vector<8x80xf32>
    %c21_123 = arith.constant 21 : index
    %742 = memref.load %arg10[%c21_123] : memref<48xf32, #tpu.memory_space<smem>>
    %743 = vector.broadcast %742 : f32 to vector<8x80xf32>
    %744 = arith.mulf %743, %470 : vector<8x80xf32>
    %745 = arith.addf %741, %744 : vector<8x80xf32>
    %c22_124 = arith.constant 22 : index
    %746 = memref.load %arg10[%c22_124] : memref<48xf32, #tpu.memory_space<smem>>
    %747 = vector.broadcast %746 : f32 to vector<8x80xf32>
    %748 = arith.mulf %747, %618 : vector<8x80xf32>
    %749 = arith.addf %745, %748 : vector<8x80xf32>
    %c23_125 = arith.constant 23 : index
    %750 = memref.load %arg10[%c23_125] : memref<48xf32, #tpu.memory_space<smem>>
    %751 = vector.broadcast %750 : f32 to vector<8x80xf32>
    %752 = arith.mulf %751, %173 : vector<8x80xf32>
    %753 = arith.addf %749, %752 : vector<8x80xf32>
    %c5_126 = arith.constant 5 : index
    %754 = memref.load %arg11[%c5_126] : memref<12xf32, #tpu.memory_space<smem>>
    %755 = vector.broadcast %754 : f32 to vector<8x80xf32>
    %756 = arith.addf %753, %755 : vector<8x80xf32>
    %757 = arith.addf %756, %141 : vector<8x80xf32>
    %cst_127 = arith.constant 0.000000e+00 : f32
    %758 = vector.broadcast %cst_127 : f32 to vector<8x80xf32>
    %759 = arith.maximumf %757, %758 : vector<8x80xf32>
    %c0_128 = arith.constant 0 : index
    %c5_129 = arith.constant 5 : index
    %c0_130 = arith.constant 0 : index
    %c0_131 = arith.constant 0 : index
    %760 = vector.load %arg12[%c0_128, %c5_129, %c0_130, %c0_131] : memref<1x12x8x80xf32, #tpu.memory_space<vmem>>, vector<1x1x8x80xf32>
    %761 = vector.shape_cast %760 : vector<1x1x8x80xf32> to vector<8x80xf32>
    %762 = vector.shape_cast %759 : vector<8x80xf32> to vector<1x1x8x80xf32>
    tpu.vector_store %arg12[%c0_128, %c5_129, %c0_130, %c0_131], %762 {strides = array<i32>} : memref<1x12x8x80xf32, #tpu.memory_space<vmem>>, vector<1x1x8x80xf32>,
    %c24_132 = arith.constant 24 : index
    %763 = memref.load %arg10[%c24_132] : memref<48xf32, #tpu.memory_space<smem>>
    %764 = vector.broadcast %763 : f32 to vector<8x80xf32>
    %765 = arith.mulf %764, %322 : vector<8x80xf32>
    %c25_133 = arith.constant 25 : index
    %766 = memref.load %arg10[%c25_133] : memref<48xf32, #tpu.memory_space<smem>>
    %767 = vector.broadcast %766 : f32 to vector<8x80xf32>
    %768 = arith.mulf %767, %470 : vector<8x80xf32>
    %769 = arith.addf %765, %768 : vector<8x80xf32>
    %c26_134 = arith.constant 26 : index
    %770 = memref.load %arg10[%c26_134] : memref<48xf32, #tpu.memory_space<smem>>
    %771 = vector.broadcast %770 : f32 to vector<8x80xf32>
    %772 = arith.mulf %771, %618 : vector<8x80xf32>
    %773 = arith.addf %769, %772 : vector<8x80xf32>
    %c27_135 = arith.constant 27 : index
    %774 = memref.load %arg10[%c27_135] : memref<48xf32, #tpu.memory_space<smem>>
    %775 = vector.broadcast %774 : f32 to vector<8x80xf32>
    %776 = arith.mulf %775, %173 : vector<8x80xf32>
    %777 = arith.addf %773, %776 : vector<8x80xf32>
    %c6_136 = arith.constant 6 : index
    %778 = memref.load %arg11[%c6_136] : memref<12xf32, #tpu.memory_space<smem>>
    %779 = vector.broadcast %778 : f32 to vector<8x80xf32>
    %780 = arith.addf %777, %779 : vector<8x80xf32>
    %781 = arith.addf %780, %141 : vector<8x80xf32>
    %cst_137 = arith.constant 0.000000e+00 : f32
    %782 = vector.broadcast %cst_137 : f32 to vector<8x80xf32>
    %783 = arith.maximumf %781, %782 : vector<8x80xf32>
    %c0_138 = arith.constant 0 : index
    %c6_139 = arith.constant 6 : index
    %c0_140 = arith.constant 0 : index
    %c0_141 = arith.constant 0 : index
    %784 = vector.load %arg12[%c0_138, %c6_139, %c0_140, %c0_141] : memref<1x12x8x80xf32, #tpu.memory_space<vmem>>, vector<1x1x8x80xf32>
    %785 = vector.shape_cast %784 : vector<1x1x8x80xf32> to vector<8x80xf32>
    %786 = vector.shape_cast %783 : vector<8x80xf32> to vector<1x1x8x80xf32>
    tpu.vector_store %arg12[%c0_138, %c6_139, %c0_140, %c0_141], %786 {strides = array<i32>} : memref<1x12x8x80xf32, #tpu.memory_space<vmem>>, vector<1x1x8x80xf32>,
    %c28_142 = arith.constant 28 : index
    %787 = memref.load %arg10[%c28_142] : memref<48xf32, #tpu.memory_space<smem>>
    %788 = vector.broadcast %787 : f32 to vector<8x80xf32>
    %789 = arith.mulf %788, %322 : vector<8x80xf32>
    %c29_143 = arith.constant 29 : index
    %790 = memref.load %arg10[%c29_143] : memref<48xf32, #tpu.memory_space<smem>>
    %791 = vector.broadcast %790 : f32 to vector<8x80xf32>
    %792 = arith.mulf %791, %470 : vector<8x80xf32>
    %793 = arith.addf %789, %792 : vector<8x80xf32>
    %c30_144 = arith.constant 30 : index
    %794 = memref.load %arg10[%c30_144] : memref<48xf32, #tpu.memory_space<smem>>
    %795 = vector.broadcast %794 : f32 to vector<8x80xf32>
    %796 = arith.mulf %795, %618 : vector<8x80xf32>
    %797 = arith.addf %793, %796 : vector<8x80xf32>
    %c31_145 = arith.constant 31 : index
    %798 = memref.load %arg10[%c31_145] : memref<48xf32, #tpu.memory_space<smem>>
    %799 = vector.broadcast %798 : f32 to vector<8x80xf32>
    %800 = arith.mulf %799, %173 : vector<8x80xf32>
    %801 = arith.addf %797, %800 : vector<8x80xf32>
    %c7_146 = arith.constant 7 : index
    %802 = memref.load %arg11[%c7_146] : memref<12xf32, #tpu.memory_space<smem>>
    %803 = vector.broadcast %802 : f32 to vector<8x80xf32>
    %804 = arith.addf %801, %803 : vector<8x80xf32>
    %805 = arith.addf %804, %141 : vector<8x80xf32>
    %cst_147 = arith.constant 0.000000e+00 : f32
    %806 = vector.broadcast %cst_147 : f32 to vector<8x80xf32>
    %807 = arith.maximumf %805, %806 : vector<8x80xf32>
    %c0_148 = arith.constant 0 : index
    %c7_149 = arith.constant 7 : index
    %c0_150 = arith.constant 0 : index
    %c0_151 = arith.constant 0 : index
    %808 = vector.load %arg12[%c0_148, %c7_149, %c0_150, %c0_151] : memref<1x12x8x80xf32, #tpu.memory_space<vmem>>, vector<1x1x8x80xf32>
    %809 = vector.shape_cast %808 : vector<1x1x8x80xf32> to vector<8x80xf32>
    %810 = vector.shape_cast %807 : vector<8x80xf32> to vector<1x1x8x80xf32>
    tpu.vector_store %arg12[%c0_148, %c7_149, %c0_150, %c0_151], %810 {strides = array<i32>} : memref<1x12x8x80xf32, #tpu.memory_space<vmem>>, vector<1x1x8x80xf32>,
    %c32_152 = arith.constant 32 : index
    %811 = memref.load %arg10[%c32_152] : memref<48xf32, #tpu.memory_space<smem>>
    %812 = vector.broadcast %811 : f32 to vector<8x80xf32>
    %813 = arith.mulf %812, %322 : vector<8x80xf32>
    %c33_153 = arith.constant 33 : index
    %814 = memref.load %arg10[%c33_153] : memref<48xf32, #tpu.memory_space<smem>>
    %815 = vector.broadcast %814 : f32 to vector<8x80xf32>
    %816 = arith.mulf %815, %470 : vector<8x80xf32>
    %817 = arith.addf %813, %816 : vector<8x80xf32>
    %c34_154 = arith.constant 34 : index
    %818 = memref.load %arg10[%c34_154] : memref<48xf32, #tpu.memory_space<smem>>
    %819 = vector.broadcast %818 : f32 to vector<8x80xf32>
    %820 = arith.mulf %819, %618 : vector<8x80xf32>
    %821 = arith.addf %817, %820 : vector<8x80xf32>
    %c35_155 = arith.constant 35 : index
    %822 = memref.load %arg10[%c35_155] : memref<48xf32, #tpu.memory_space<smem>>
    %823 = vector.broadcast %822 : f32 to vector<8x80xf32>
    %824 = arith.mulf %823, %173 : vector<8x80xf32>
    %825 = arith.addf %821, %824 : vector<8x80xf32>
    %c8_156 = arith.constant 8 : index
    %826 = memref.load %arg11[%c8_156] : memref<12xf32, #tpu.memory_space<smem>>
    %827 = vector.broadcast %826 : f32 to vector<8x80xf32>
    %828 = arith.addf %825, %827 : vector<8x80xf32>
    %829 = arith.addf %828, %141 : vector<8x80xf32>
    %cst_157 = arith.constant 0.000000e+00 : f32
    %830 = vector.broadcast %cst_157 : f32 to vector<8x80xf32>
    %831 = arith.maximumf %829, %830 : vector<8x80xf32>
    %c0_158 = arith.constant 0 : index
    %c8_159 = arith.constant 8 : index
    %c0_160 = arith.constant 0 : index
    %c0_161 = arith.constant 0 : index
    %832 = vector.load %arg12[%c0_158, %c8_159, %c0_160, %c0_161] : memref<1x12x8x80xf32, #tpu.memory_space<vmem>>, vector<1x1x8x80xf32>
    %833 = vector.shape_cast %832 : vector<1x1x8x80xf32> to vector<8x80xf32>
    %834 = vector.shape_cast %831 : vector<8x80xf32> to vector<1x1x8x80xf32>
    tpu.vector_store %arg12[%c0_158, %c8_159, %c0_160, %c0_161], %834 {strides = array<i32>} : memref<1x12x8x80xf32, #tpu.memory_space<vmem>>, vector<1x1x8x80xf32>,
    %c36_162 = arith.constant 36 : index
    %835 = memref.load %arg10[%c36_162] : memref<48xf32, #tpu.memory_space<smem>>
    %836 = vector.broadcast %835 : f32 to vector<8x80xf32>
    %837 = arith.mulf %836, %322 : vector<8x80xf32>
    %c37_163 = arith.constant 37 : index
    %838 = memref.load %arg10[%c37_163] : memref<48xf32, #tpu.memory_space<smem>>
    %839 = vector.broadcast %838 : f32 to vector<8x80xf32>
    %840 = arith.mulf %839, %470 : vector<8x80xf32>
    %841 = arith.addf %837, %840 : vector<8x80xf32>
    %c38_164 = arith.constant 38 : index
    %842 = memref.load %arg10[%c38_164] : memref<48xf32, #tpu.memory_space<smem>>
    %843 = vector.broadcast %842 : f32 to vector<8x80xf32>
    %844 = arith.mulf %843, %618 : vector<8x80xf32>
    %845 = arith.addf %841, %844 : vector<8x80xf32>
    %c39_165 = arith.constant 39 : index
    %846 = memref.load %arg10[%c39_165] : memref<48xf32, #tpu.memory_space<smem>>
    %847 = vector.broadcast %846 : f32 to vector<8x80xf32>
    %848 = arith.mulf %847, %173 : vector<8x80xf32>
    %849 = arith.addf %845, %848 : vector<8x80xf32>
    %c9_166 = arith.constant 9 : index
    %850 = memref.load %arg11[%c9_166] : memref<12xf32, #tpu.memory_space<smem>>
    %851 = vector.broadcast %850 : f32 to vector<8x80xf32>
    %852 = arith.addf %849, %851 : vector<8x80xf32>
    %853 = arith.addf %852, %141 : vector<8x80xf32>
    %cst_167 = arith.constant 0.000000e+00 : f32
    %854 = vector.broadcast %cst_167 : f32 to vector<8x80xf32>
    %855 = arith.maximumf %853, %854 : vector<8x80xf32>
    %c0_168 = arith.constant 0 : index
    %c9_169 = arith.constant 9 : index
    %c0_170 = arith.constant 0 : index
    %c0_171 = arith.constant 0 : index
    %856 = vector.load %arg12[%c0_168, %c9_169, %c0_170, %c0_171] : memref<1x12x8x80xf32, #tpu.memory_space<vmem>>, vector<1x1x8x80xf32>
    %857 = vector.shape_cast %856 : vector<1x1x8x80xf32> to vector<8x80xf32>
    %858 = vector.shape_cast %855 : vector<8x80xf32> to vector<1x1x8x80xf32>
    tpu.vector_store %arg12[%c0_168, %c9_169, %c0_170, %c0_171], %858 {strides = array<i32>} : memref<1x12x8x80xf32, #tpu.memory_space<vmem>>, vector<1x1x8x80xf32>,
    %c40_172 = arith.constant 40 : index
    %859 = memref.load %arg10[%c40_172] : memref<48xf32, #tpu.memory_space<smem>>
    %860 = vector.broadcast %859 : f32 to vector<8x80xf32>
    %861 = arith.mulf %860, %322 : vector<8x80xf32>
    %c41_173 = arith.constant 41 : index
    %862 = memref.load %arg10[%c41_173] : memref<48xf32, #tpu.memory_space<smem>>
    %863 = vector.broadcast %862 : f32 to vector<8x80xf32>
    %864 = arith.mulf %863, %470 : vector<8x80xf32>
    %865 = arith.addf %861, %864 : vector<8x80xf32>
    %c42_174 = arith.constant 42 : index
    %866 = memref.load %arg10[%c42_174] : memref<48xf32, #tpu.memory_space<smem>>
    %867 = vector.broadcast %866 : f32 to vector<8x80xf32>
    %868 = arith.mulf %867, %618 : vector<8x80xf32>
    %869 = arith.addf %865, %868 : vector<8x80xf32>
    %c43_175 = arith.constant 43 : index
    %870 = memref.load %arg10[%c43_175] : memref<48xf32, #tpu.memory_space<smem>>
    %871 = vector.broadcast %870 : f32 to vector<8x80xf32>
    %872 = arith.mulf %871, %173 : vector<8x80xf32>
    %873 = arith.addf %869, %872 : vector<8x80xf32>
    %c10_176 = arith.constant 10 : index
    %874 = memref.load %arg11[%c10_176] : memref<12xf32, #tpu.memory_space<smem>>
    %875 = vector.broadcast %874 : f32 to vector<8x80xf32>
    %876 = arith.addf %873, %875 : vector<8x80xf32>
    %877 = arith.addf %876, %141 : vector<8x80xf32>
    %cst_177 = arith.constant 0.000000e+00 : f32
    %878 = vector.broadcast %cst_177 : f32 to vector<8x80xf32>
    %879 = arith.maximumf %877, %878 : vector<8x80xf32>
    %c0_178 = arith.constant 0 : index
    %c10_179 = arith.constant 10 : index
    %c0_180 = arith.constant 0 : index
    %c0_181 = arith.constant 0 : index
    %880 = vector.load %arg12[%c0_178, %c10_179, %c0_180, %c0_181] : memref<1x12x8x80xf32, #tpu.memory_space<vmem>>, vector<1x1x8x80xf32>
    %881 = vector.shape_cast %880 : vector<1x1x8x80xf32> to vector<8x80xf32>
    %882 = vector.shape_cast %879 : vector<8x80xf32> to vector<1x1x8x80xf32>
    tpu.vector_store %arg12[%c0_178, %c10_179, %c0_180, %c0_181], %882 {strides = array<i32>} : memref<1x12x8x80xf32, #tpu.memory_space<vmem>>, vector<1x1x8x80xf32>,
    %c44_182 = arith.constant 44 : index
    %883 = memref.load %arg10[%c44_182] : memref<48xf32, #tpu.memory_space<smem>>
    %884 = vector.broadcast %883 : f32 to vector<8x80xf32>
    %885 = arith.mulf %884, %322 : vector<8x80xf32>
    %c45_183 = arith.constant 45 : index
    %886 = memref.load %arg10[%c45_183] : memref<48xf32, #tpu.memory_space<smem>>
    %887 = vector.broadcast %886 : f32 to vector<8x80xf32>
    %888 = arith.mulf %887, %470 : vector<8x80xf32>
    %889 = arith.addf %885, %888 : vector<8x80xf32>
    %c46_184 = arith.constant 46 : index
    %890 = memref.load %arg10[%c46_184] : memref<48xf32, #tpu.memory_space<smem>>
    %891 = vector.broadcast %890 : f32 to vector<8x80xf32>
    %892 = arith.mulf %891, %618 : vector<8x80xf32>
    %893 = arith.addf %889, %892 : vector<8x80xf32>
    %c47_185 = arith.constant 47 : index
    %894 = memref.load %arg10[%c47_185] : memref<48xf32, #tpu.memory_space<smem>>
    %895 = vector.broadcast %894 : f32 to vector<8x80xf32>
    %896 = arith.mulf %895, %173 : vector<8x80xf32>
    %897 = arith.addf %893, %896 : vector<8x80xf32>
    %c11_186 = arith.constant 11 : index
    %898 = memref.load %arg11[%c11_186] : memref<12xf32, #tpu.memory_space<smem>>
    %899 = vector.broadcast %898 : f32 to vector<8x80xf32>
    %900 = arith.addf %897, %899 : vector<8x80xf32>
    %901 = arith.addf %900, %141 : vector<8x80xf32>
    %cst_187 = arith.constant 0.000000e+00 : f32
    %902 = vector.broadcast %cst_187 : f32 to vector<8x80xf32>
    %903 = arith.maximumf %901, %902 : vector<8x80xf32>
    %c0_188 = arith.constant 0 : index
    %c11_189 = arith.constant 11 : index
    %c0_190 = arith.constant 0 : index
    %c0_191 = arith.constant 0 : index
    %904 = vector.load %arg12[%c0_188, %c11_189, %c0_190, %c0_191] : memref<1x12x8x80xf32, #tpu.memory_space<vmem>>, vector<1x1x8x80xf32>
    %905 = vector.shape_cast %904 : vector<1x1x8x80xf32> to vector<8x80xf32>
    %906 = vector.shape_cast %903 : vector<8x80xf32> to vector<1x1x8x80xf32>
    tpu.vector_store %arg12[%c0_188, %c11_189, %c0_190, %c0_191], %906 {strides = array<i32>} : memref<1x12x8x80xf32, #tpu.memory_space<vmem>>, vector<1x1x8x80xf32>,
    return
  }
  func.func @transform_0(%arg0: i32) -> (i32, i32, i32) {
    %c0_i32 = arith.constant 0 : i32
    %c0_i32_0 = arith.constant 0 : i32
    %c0_i32_1 = arith.constant 0 : i32
    return %arg0, %c0_i32, %c0_i32_0 : i32, i32, i32
  }
  func.func @transform_1(%arg0: i32) -> (i32, i32) {
    %c0_i32 = arith.constant 0 : i32
    %c0_i32_0 = arith.constant 0 : i32
    %c0_i32_1 = arith.constant 0 : i32
    return %c0_i32, %c0_i32_0 : i32, i32
  }
  func.func @transform_2(%arg0: i32) -> i32 {
    %c0_i32 = arith.constant 0 : i32
    %c0_i32_0 = arith.constant 0 : i32
    return %c0_i32 : i32
  }
  func.func @transform_3(%arg0: i32) -> i32 {
    %c0_i32 = arith.constant 0 : i32
    %c0_i32_0 = arith.constant 0 : i32
    return %c0_i32 : i32
  }
  func.func @transform_4(%arg0: i32) -> i32 {
    %c0_i32 = arith.constant 0 : i32
    %c0_i32_0 = arith.constant 0 : i32
    return %c0_i32 : i32
  }
  func.func @transform_5(%arg0: i32) -> i32 {
    %c0_i32 = arith.constant 0 : i32
    %c0_i32_0 = arith.constant 0 : i32
    return %c0_i32 : i32
  }
  func.func @transform_6(%arg0: i32) -> i32 {
    %c0_i32 = arith.constant 0 : i32
    %c0_i32_0 = arith.constant 0 : i32
    return %c0_i32 : i32
  }
  func.func @transform_7(%arg0: i32) -> i32 {
    %c0_i32 = arith.constant 0 : i32
    %c0_i32_0 = arith.constant 0 : i32
    return %c0_i32 : i32
  }
  func.func @transform_8(%arg0: i32) -> i32 {
    %c0_i32 = arith.constant 0 : i32
    %c0_i32_0 = arith.constant 0 : i32
    return %c0_i32 : i32
  }
  func.func @transform_9(%arg0: i32) -> i32 {
    %c0_i32 = arith.constant 0 : i32
    %c0_i32_0 = arith.constant 0 : i32
    return %c0_i32 : i32
  }
  func.func @transform_10(%arg0: i32) -> i32 {
    %c0_i32 = arith.constant 0 : i32
    %c0_i32_0 = arith.constant 0 : i32
    return %c0_i32 : i32
  }
  func.func @transform_11(%arg0: i32) -> (i32, i32, i32, i32) {
    %c0_i32 = arith.constant 0 : i32
    %c0_i32_0 = arith.constant 0 : i32
    %c0_i32_1 = arith.constant 0 : i32
    %c0_i32_2 = arith.constant 0 : i32
    return %arg0, %c0_i32, %c0_i32_0, %c0_i32_1 : i32, i32, i32, i32
  }
}

module attributes {stable_mosaic.version = 11 : i64} {
  func.func @_head_kernel(%arg0: memref<2x6144xf32, #tpu.memory_space<vmem>>, %arg1: memref<6144x50xf32, #tpu.memory_space<vmem>>, %arg2: memref<1x50xf32, #tpu.memory_space<vmem>>, %arg3: memref<50x1xf32, #tpu.memory_space<vmem>>, %arg4: memref<1x1xf32, #tpu.memory_space<vmem>>, %arg5: memref<2x1xf32, #tpu.memory_space<vmem>>) attributes {dimension_semantics = [], scalar_prefetch = 0 : i64, scratch_operands = 0 : i64, tpu.core_type = #tpu.core_type<tc>} {
    %c0 = arith.constant 0 : index
    %c0_0 = arith.constant 0 : index
    %0 = vector.load %arg0[%c0, %c0_0] : memref<2x6144xf32, #tpu.memory_space<vmem>>, vector<2x6144xf32>
    %c0_1 = arith.constant 0 : index
    %c0_2 = arith.constant 0 : index
    %1 = vector.load %arg1[%c0_1, %c0_2] : memref<6144x50xf32, #tpu.memory_space<vmem>>, vector<6144x50xf32>
    %cst = arith.constant dense<0.000000e+00> : vector<2x50xf32>
    %2 = tpu.matmul %0, %1, %cst {dimension_numbers = #tpu.dot_dimension_numbers<[1], [0], [0], [1], [0, 0, 1, 1], [], []>} : vector<2x6144xf32>, vector<6144x50xf32>, vector<2x50xf32> -> vector<2x50xf32>
    %c0_3 = arith.constant 0 : index
    %c0_4 = arith.constant 0 : index
    %3 = vector.load %arg2[%c0_3, %c0_4] : memref<1x50xf32, #tpu.memory_space<vmem>>, vector<1x50xf32>
    %4 = vector.broadcast %3 : vector<1x50xf32> to vector<2x50xf32>
    %5 = arith.addf %2, %4 : vector<2x50xf32>
    %cst_5 = arith.constant 0.000000e+00 : f32
    %6 = vector.broadcast %cst_5 : f32 to vector<2x50xf32>
    %7 = arith.maximumf %5, %6 : vector<2x50xf32>
    %c0_6 = arith.constant 0 : index
    %c0_7 = arith.constant 0 : index
    %8 = vector.load %arg3[%c0_6, %c0_7] : memref<50x1xf32, #tpu.memory_space<vmem>>, vector<50x1xf32>
    %cst_8 = arith.constant dense<0.000000e+00> : vector<2x1xf32>
    %9 = tpu.matmul %7, %8, %cst_8 {dimension_numbers = #tpu.dot_dimension_numbers<[1], [0], [0], [1], [0, 0, 1, 1], [], []>} : vector<2x50xf32>, vector<50x1xf32>, vector<2x1xf32> -> vector<2x1xf32>
    %c0_9 = arith.constant 0 : index
    %c0_10 = arith.constant 0 : index
    %10 = vector.load %arg4[%c0_9, %c0_10] : memref<1x1xf32, #tpu.memory_space<vmem>>, vector<1x1xf32>
    %11 = vector.broadcast %10 : vector<1x1xf32> to vector<2x1xf32>
    %12 = arith.addf %9, %11 : vector<2x1xf32>
    %13 = arith.negf %12 : vector<2x1xf32>
    %14 = math.exp %13 : vector<2x1xf32>
    %cst_11 = arith.constant 1.000000e+00 : f32
    %15 = vector.broadcast %cst_11 : f32 to vector<2x1xf32>
    %16 = arith.addf %15, %14 : vector<2x1xf32>
    %17 = arith.divf %15, %16 : vector<2x1xf32>
    %c0_12 = arith.constant 0 : index
    %c0_13 = arith.constant 0 : index
    %18 = vector.load %arg5[%c0_12, %c0_13] : memref<2x1xf32, #tpu.memory_space<vmem>>, vector<2x1xf32>
    tpu.vector_store %arg5[%c0_12, %c0_13], %17 {strides = array<i32>} : memref<2x1xf32, #tpu.memory_space<vmem>>, vector<2x1xf32>,
    return
  }
}

</mosaic_0001>

<llo_original>
// kernel: forward.2
$region0: #{forward.2}
  #allocation0 [shape = 'u32[]', space=smem, size = 0x4, offset = 0x4, fixed_abs, tag = 'smem constant byte address 0x4 - core index']
  #allocation1 [shape = 'u32[144,128]{1,0:T(1,128)}', space=vmem, size = 0x12000, scoped, tag = 'internal scratch']
  #allocation2 [shape = 'f32[10,128]{1,0:T(8,128)}', space=vmem, size = 0x2000, scoped, tag = 'scratch operand']
  #allocation3 [shape = 'f32[1]{0:T(128)S(6)}', space=smem, size = 0x200, scoped, tag = 'scoped memory for forward.2']
  %s0 = inlined_call_operand.vmem [shape: f32[2,10,128], index: 0, kind: input, shape index: {}]
  %s1 = inlined_call_operand.vmem [shape: f32[8,80], index: 1, kind: input, shape index: {}]
  %s2 = inlined_call_operand.hbm [shape: f32[27], index: 2, kind: input, shape index: {}]
  %s3 = inlined_call_operand.<no memory space> [shape: f32[1], index: 3, kind: input, shape index: {}]
  %s4 = inlined_call_operand.hbm [shape: f32[4], index: 4, kind: input, shape index: {}]
  %s5 = inlined_call_operand.hbm [shape: f32[4], index: 5, kind: input, shape index: {}]
  %s6 = inlined_call_operand.hbm [shape: f32[81], index: 6, kind: input, shape index: {}]
  %s7 = inlined_call_operand.hbm [shape: f32[3], index: 7, kind: input, shape index: {}]
  %s8 = inlined_call_operand.hbm [shape: f32[3], index: 8, kind: input, shape index: {}]
  %s9 = inlined_call_operand.hbm [shape: f32[48], index: 9, kind: input, shape index: {}]
  %s10 = inlined_call_operand.hbm [shape: f32[12], index: 10, kind: input, shape index: {}]
  %s11 = inlined_call_operand.vmem [shape: f32[2,12,8,80], index: 11, kind: output, shape index: {}]
  %s12 = sld [smem:[#allocation0]]
  $region109: #{forward.2} parent=0
    _
  %s14 = ssub.s32 1, %s12
  %s15 = scalar_select 0, %s14, %s12
  %16 = sst [smem:[#allocation3]] %s3
  $region1: #{forward.2} parent=0
    #allocation4 [shape = 'u8[512]{0}', space=smem, size = 0x200, scoped, tag = 'input window, operand 2, single buffered']
    #allocation5 [shape = 's32[2]{0}', space=sflag, size = 0x8, scoped, tag = 'scoped memory for forward.2']
    #allocation6 [shape = 'u8[512]{0}', space=smem, size = 0x200, scoped, tag = 'input window, operand 4, single buffered']
    #allocation7 [shape = 's32[1]{0}', space=sflag, size = 0x4, scoped, tag = 'scoped memory for forward.2']
    #allocation8 [shape = 'u8[512]{0}', space=smem, size = 0x200, scoped, tag = 'input window, operand 5, single buffered']
    #allocation9 [shape = 'u8[512]{0}', space=smem, size = 0x200, scoped, tag = 'input window, operand 6, single buffered']
    #allocation10 [shape = 's32[1]{0}', space=sflag, size = 0x4, scoped, tag = 'scoped memory for forward.2']
    #allocation11 [shape = 'u8[512]{0}', space=smem, size = 0x200, scoped, tag = 'input window, operand 7, single buffered']
    #allocation12 [shape = 'u8[512]{0}', space=smem, size = 0x200, scoped, tag = 'input window, operand 8, single buffered']
    #allocation13 [shape = 's32[1]{0}', space=sflag, size = 0x4, scoped, tag = 'scoped memory for forward.2']
    #allocation14 [shape = 'u8[512]{0}', space=smem, size = 0x200, scoped, tag = 'input window, operand 9, single buffered']
    #allocation15 [shape = 'u8[512]{0}', space=smem, size = 0x200, scoped, tag = 'input window, operand 10, single buffered']
    #allocation16 [shape = 's32[1]{0}', space=sflag, size = 0x4, scoped, tag = 'scoped memory for forward.2']
    %17 = vsyncpa [#allocation5], 0
    %18 = vsyncpa [#allocation7], 0
    %19 = vsyncpa [#allocation10], 0
    %20 = vsyncpa [#allocation13], 0
    %21 = vsyncpa [#allocation16], 0
    loop: start=0, step=1, limit=4
    $region2: #{forward.2} parent=1 // loop_pre_header
      _
    $region3: #{forward.2} parent=1 // loop_header
      %s23 = sphi 0, %s27
      %p24 = scmp.ge.s32.totalorder %s23, 4
      %s33 = sphi 0, %s35
      %s36 = sphi 0, %s33
      %s37 = sphi 0, %s36
      %s53 = sphi 0, %s37
      %s57 = sphi 0, %s57
      %s59 = sphi 0, %s57
      %s60 = sphi 0, %s59
      %s74 = sphi 0, %s60
      %s78 = sphi 0, %s78
      %s80 = sphi 0, %s78
      %s81 = sphi 0, %s80
      %s95 = sphi 0, %s81
      %s99 = sphi 0, %s99
      %s101 = sphi 0, %s99
      %s102 = sphi 0, %s101
      %s116 = sphi 0, %s102
      %s120 = sphi 0, %s120
      %s122 = sphi 0, %s120
      %s123 = sphi 0, %s122
      %s137 = sphi 0, %s123
      %s141 = sphi 0, %s141
      %s143 = sphi 0, %s141
      %s144 = sphi 0, %s143
      %s158 = sphi 0, %s144
      %s162 = sphi 0, %s162
      %s164 = sphi 0, %s162
      %s165 = sphi 0, %s164
      %s179 = sphi 0, %s165
      %s183 = sphi 0, %s183
      %s185 = sphi 0, %s183
      %s186 = sphi 0, %s185
      %s200 = sphi 0, %s186
      %s204 = sphi 0, %s204
      %s206 = sphi 0, %s204
      %s207 = sphi 0, %s206
      %s221 = sphi 0, %s207
      %s225 = sphi 0, %s225
      %s227 = sphi 0, %s225
      %s228 = sphi 0, %s227
      %s242 = sphi 0, %s228
      %s246 = sphi 0, %s246
      %s248 = sphi 0, %s246
      %s249 = sphi 0, %s248
      %s263 = sphi 0, %s249
      %s269 = sphi 0, %s271
      %s272 = sphi 0, %s269
      %s273 = sphi 0, %s272
      %s289 = sphi 0, %s273
    $region4: #{forward.2} parent=1 // loop_header_branch
      %26 = sbr.rel (%p24) target = $region8
    $region5: #{forward.2} parent=1 // loop_body
      %s28 = ssub.s32 %s23, 1
      %s29 = ssub.s32 %s23, 2
      %s30 = sadd.s32 %s23, 1
      %s31 = ssub.s32 %s23, %s30
      %p32 = scmp.eq.s32.totalorder %s31, 0
      %s34 = sadd.s32 %s33, 1
      %s35 = scalar_select %p32, %s33, %s34
      %p38 = pneg %p32
      %p39 = scmp.eq.s32.totalorder %s23, 1
      %p40 = por %p38, %p39
      %p41 = scmp.ne.s32.totalorder %s33, %s36
      %p42 = scmp.eq.s32.totalorder %s23, 0
      %p43 = por %p41, %p42
      %p44 = scmp.ne.s32.totalorder %s33, %s36
      %p45 = scmp.eq.s32.totalorder %s28, 1
      %p46 = por %p44, %p45
      %p47 = scmp.ne.s32.totalorder %s36, %s37
      %p48 = scmp.eq.s32.totalorder %s28, 0
      %p49 = por %p47, %p48
      %p50 = scmp.ne.s32.totalorder %s36, %s37
      %p51 = scmp.eq.s32.totalorder %s29, 1
      %p52 = por %p50, %p51
      %p54 = scmp.ne.s32.totalorder %s37, %s53
      %p55 = scmp.eq.s32.totalorder %s29, 0
      %p56 = por %p54, %p55
      %s58 = sadd.s32 %s57, 1
      %p61 = scmp.eq.s32.totalorder %s23, 1
      %p62 = scmp.ne.s32.totalorder %s57, %s59
      %p63 = scmp.eq.s32.totalorder %s23, 0
      %p64 = por %p62, %p63
      %p65 = scmp.ne.s32.totalorder %s57, %s59
      %p66 = scmp.eq.s32.totalorder %s28, 1
      %p67 = por %p65, %p66
      %p68 = scmp.ne.s32.totalorder %s59, %s60
      %p69 = scmp.eq.s32.totalorder %s28, 0
      %p70 = por %p68, %p69
      %p71 = scmp.ne.s32.totalorder %s59, %s60
      %p72 = scmp.eq.s32.totalorder %s29, 1
      %p73 = por %p71, %p72
      %p75 = scmp.ne.s32.totalorder %s60, %s74
      %p76 = scmp.eq.s32.totalorder %s29, 0
      %p77 = por %p75, %p76
      %s79 = sadd.s32 %s78, 1
      %p82 = scmp.eq.s32.totalorder %s23, 1
      %p83 = scmp.ne.s32.totalorder %s78, %s80
      %p84 = scmp.eq.s32.totalorder %s23, 0
      %p85 = por %p83, %p84
      %p86 = scmp.ne.s32.totalorder %s78, %s80
      %p87 = scmp.eq.s32.totalorder %s28, 1
      %p88 = por %p86, %p87
      %p89 = scmp.ne.s32.totalorder %s80, %s81
      %p90 = scmp.eq.s32.totalorder %s28, 0
      %p91 = por %p89, %p90
      %p92 = scmp.ne.s32.totalorder %s80, %s81
      %p93 = scmp.eq.s32.totalorder %s29, 1
      %p94 = por %p92, %p93
      %p96 = scmp.ne.s32.totalorder %s81, %s95
      %p97 = scmp.eq.s32.totalorder %s29, 0
      %p98 = por %p96, %p97
      %s100 = sadd.s32 %s99, 1
      %p103 = scmp.eq.s32.totalorder %s23, 1
      %p104 = scmp.ne.s32.totalorder %s99, %s101
      %p105 = scmp.eq.s32.totalorder %s23, 0
      %p106 = por %p104, %p105
      %p107 = scmp.ne.s32.totalorder %s99, %s101
      %p108 = scmp.eq.s32.totalorder %s28, 1
      %p109 = por %p107, %p108
      %p110 = scmp.ne.s32.totalorder %s101, %s102
      %p111 = scmp.eq.s32.totalorder %s28, 0
      %p112 = por %p110, %p111
      %p113 = scmp.ne.s32.totalorder %s101, %s102
      %p114 = scmp.eq.s32.totalorder %s29, 1
      %p115 = por %p113, %p114
      %p117 = scmp.ne.s32.totalorder %s102, %s116
      %p118 = scmp.eq.s32.totalorder %s29, 0
      %p119 = por %p117, %p118
      %s121 = sadd.s32 %s120, 1
      %p124 = scmp.eq.s32.totalorder %s23, 1
      %p125 = scmp.ne.s32.totalorder %s120, %s122
      %p126 = scmp.eq.s32.totalorder %s23, 0
      %p127 = por %p125, %p126
      %p128 = scmp.ne.s32.totalorder %s120, %s122
      %p129 = scmp.eq.s32.totalorder %s28, 1
      %p130 = por %p128, %p129
      %p131 = scmp.ne.s32.totalorder %s122, %s123
      %p132 = scmp.eq.s32.totalorder %s28, 0
      %p133 = por %p131, %p132
      %p134 = scmp.ne.s32.totalorder %s122, %s123
      %p135 = scmp.eq.s32.totalorder %s29, 1
      %p136 = por %p134, %p135
      %p138 = scmp.ne.s32.totalorder %s123, %s137
      %p139 = scmp.eq.s32.totalorder %s29, 0
      %p140 = por %p138, %p139
      %s142 = sadd.s32 %s141, 1
      %p145 = scmp.eq.s32.totalorder %s23, 1
      %p146 = scmp.ne.s32.totalorder %s141, %s143
      %p147 = scmp.eq.s32.totalorder %s23, 0
      %p148 = por %p146, %p147
      %p149 = scmp.ne.s32.totalorder %s141, %s143
      %p150 = scmp.eq.s32.totalorder %s28, 1
      %p151 = por %p149, %p150
      %p152 = scmp.ne.s32.totalorder %s143, %s144
      %p153 = scmp.eq.s32.totalorder %s28, 0
      %p154 = por %p152, %p153
      %p155 = scmp.ne.s32.totalorder %s143, %s144
      %p156 = scmp.eq.s32.totalorder %s29, 1
      %p157 = por %p155, %p156
      %p159 = scmp.ne.s32.totalorder %s144, %s158
      %p160 = scmp.eq.s32.totalorder %s29, 0
      %p161 = por %p159, %p160
      %s163 = sadd.s32 %s162, 1
      %p166 = scmp.eq.s32.totalorder %s23, 1
      %p167 = scmp.ne.s32.totalorder %s162, %s164
      %p168 = scmp.eq.s32.totalorder %s23, 0
      %p169 = por %p167, %p168
      %p170 = scmp.ne.s32.totalorder %s162, %s164
      %p171 = scmp.eq.s32.totalorder %s28, 1
      %p172 = por %p170, %p171
      %p173 = scmp.ne.s32.totalorder %s164, %s165
      %p174 = scmp.eq.s32.totalorder %s28, 0
      %p175 = por %p173, %p174
      %p176 = scmp.ne.s32.totalorder %s164, %s165
      %p177 = scmp.eq.s32.totalorder %s29, 1
      %p178 = por %p176, %p177
      %p180 = scmp.ne.s32.totalorder %s165, %s179
      %p181 = scmp.eq.s32.totalorder %s29, 0
      %p182 = por %p180, %p181
      %s184 = sadd.s32 %s183, 1
      %p187 = scmp.eq.s32.totalorder %s23, 1
      %p188 = scmp.ne.s32.totalorder %s183, %s185
      %p189 = scmp.eq.s32.totalorder %s23, 0
      %p190 = por %p188, %p189
      %p191 = scmp.ne.s32.totalorder %s183, %s185
      %p192 = scmp.eq.s32.totalorder %s28, 1
      %p193 = por %p191, %p192
      %p194 = scmp.ne.s32.totalorder %s185, %s186
      %p195 = scmp.eq.s32.totalorder %s28, 0
      %p196 = por %p194, %p195
      %p197 = scmp.ne.s32.totalorder %s185, %s186
      %p198 = scmp.eq.s32.totalorder %s29, 1
      %p199 = por %p197, %p198
      %p201 = scmp.ne.s32.totalorder %s186, %s200
      %p202 = scmp.eq.s32.totalorder %s29, 0
      %p203 = por %p201, %p202
      %s205 = sadd.s32 %s204, 1
      %p208 = scmp.eq.s32.totalorder %s23, 1
      %p209 = scmp.ne.s32.totalorder %s204, %s206
      %p210 = scmp.eq.s32.totalorder %s23, 0
      %p211 = por %p209, %p210
      %p212 = scmp.ne.s32.totalorder %s204, %s206
      %p213 = scmp.eq.s32.totalorder %s28, 1
      %p214 = por %p212, %p213
      %p215 = scmp.ne.s32.totalorder %s206, %s207
      %p216 = scmp.eq.s32.totalorder %s28, 0
      %p217 = por %p215, %p216
      %p218 = scmp.ne.s32.totalorder %s206, %s207
      %p219 = scmp.eq.s32.totalorder %s29, 1
      %p220 = por %p218, %p219
      %p222 = scmp.ne.s32.totalorder %s207, %s221
      %p223 = scmp.eq.s32.totalorder %s29, 0
      %p224 = por %p222, %p223
      %s226 = sadd.s32 %s225, 1
      %p229 = scmp.eq.s32.totalorder %s23, 1
      %p230 = scmp.ne.s32.totalorder %s225, %s227
      %p231 = scmp.eq.s32.totalorder %s23, 0
      %p232 = por %p230, %p231
      %p233 = scmp.ne.s32.totalorder %s225, %s227
      %p234 = scmp.eq.s32.totalorder %s28, 1
      %p235 = por %p233, %p234
      %p236 = scmp.ne.s32.totalorder %s227, %s228
      %p237 = scmp.eq.s32.totalorder %s28, 0
      %p238 = por %p236, %p237
      %p239 = scmp.ne.s32.totalorder %s227, %s228
      %p240 = scmp.eq.s32.totalorder %s29, 1
      %p241 = por %p239, %p240
      %p243 = scmp.ne.s32.totalorder %s228, %s242
      %p244 = scmp.eq.s32.totalorder %s29, 0
      %p245 = por %p243, %p244
      %s247 = sadd.s32 %s246, 1
      %p250 = scmp.eq.s32.totalorder %s23, 1
      %p251 = scmp.ne.s32.totalorder %s246, %s248
      %p252 = scmp.eq.s32.totalorder %s23, 0
      %p253 = por %p251, %p252
      %p254 = scmp.ne.s32.totalorder %s246, %s248
      %p255 = scmp.eq.s32.totalorder %s28, 1
      %p256 = por %p254, %p255
      %p257 = scmp.ne.s32.totalorder %s248, %s249
      %p258 = scmp.eq.s32.totalorder %s28, 0
      %p259 = por %p257, %p258
      %p260 = scmp.ne.s32.totalorder %s248, %s249
      %p261 = scmp.eq.s32.totalorder %s29, 1
      %p262 = por %p260, %p261
      %p264 = scmp.ne.s32.totalorder %s249, %s263
      %p265 = scmp.eq.s32.totalorder %s29, 0
      %p266 = por %p264, %p265
      %s267 = ssub.s32 %s23, %s30
      %p268 = scmp.eq.s32.totalorder %s267, 0
      %s270 = sadd.s32 %s269, 1
      %s271 = scalar_select %p268, %s269, %s270
      %p274 = pneg %p268
      %p275 = scmp.eq.s32.totalorder %s23, 1
      %p276 = por %p274, %p275
      %p277 = scmp.ne.s32.totalorder %s269, %s272
      %p278 = scmp.eq.s32.totalorder %s23, 0
      %p279 = por %p277, %p278
      %p280 = scmp.ne.s32.totalorder %s269, %s272
      %p281 = scmp.eq.s32.totalorder %s28, 1
      %p282 = por %p280, %p281
      %p283 = scmp.ne.s32.totalorder %s272, %s273
      %p284 = scmp.eq.s32.totalorder %s28, 0
      %p285 = por %p283, %p284
      %p286 = scmp.ne.s32.totalorder %s272, %s273
      %p287 = scmp.eq.s32.totalorder %s29, 1
      %p288 = por %p286, %p287
      %p290 = scmp.ne.s32.totalorder %s273, %s289
      %p291 = scmp.eq.s32.totalorder %s29, 0
      %p292 = por %p290, %p291
      %p293 = scmp.le.s32.totalorder 1, %s23
      %p294 = scmp.lt.s32.totalorder %s23, 3
      %p295 = pnand %p293, %p294
      %p296 = pneg %p295
      // Predicated region
      $region9: #{forward.2} parent=5 // pred_check
        _
      $region10: #{forward.2} parent=5 // pred_check_branch
        %298 = sbr.rel (%p295) target = $region12
      $region11: #{forward.2} parent=5 // pred_region
        %s299 = ssub.s32 %s23, 1
        // Predicated region
        $region13: #{forward.2} parent=11 // pred_check
          %p300 = pneg %p70
        $region14: #{forward.2} parent=11 // pred_check_branch
          %302 = sbr.rel (%p300) target = $region16
        $region15: #{forward.2} parent=11 // pred_region
          _
        $region16: #{forward.2} parent=11 // pred_fallthru
          _
        // Predicated region
        $region17: #{forward.2} parent=11 // pred_check
          %p303 = pneg %p91
        $region18: #{forward.2} parent=11 // pred_check_branch
          %305 = sbr.rel (%p303) target = $region20
        $region19: #{forward.2} parent=11 // pred_region
          %s307 = ssub.s32 16, 16
          %308 = vsyncadd [#allocation5], %s307
          %311 = dma.hbm_to_smem %s2, 16, [#allocation4], [#allocation5]
        $region20: #{forward.2} parent=11 // pred_fallthru
          _
        // Predicated region
        $region21: #{forward.2} parent=11 // pred_check
          %p312 = pneg %p112
        $region22: #{forward.2} parent=11 // pred_check_branch
          %314 = sbr.rel (%p312) target = $region24
        $region23: #{forward.2} parent=11 // pred_region
          _
        $region24: #{forward.2} parent=11 // pred_fallthru
          _
        // Predicated region
        $region25: #{forward.2} parent=11 // pred_check
          %p315 = pneg %p133
        $region26: #{forward.2} parent=11 // pred_check_branch
          %317 = sbr.rel (%p315) target = $region28
        $region27: #{forward.2} parent=11 // pred_region
          %s319 = ssub.s32 16, 16
          %320 = vsyncadd [#allocation7], %s319
          %323 = dma.hbm_to_smem %s4, 16, [#allocation6], [#allocation7]
        $region28: #{forward.2} parent=11 // pred_fallthru
          _
        // Predicated region
        $region29: #{forward.2} parent=11 // pred_check
          %p324 = pneg %p154
        $region30: #{forward.2} parent=11 // pred_check_branch
          %326 = sbr.rel (%p324) target = $region32
        $region31: #{forward.2} parent=11 // pred_region
          %s328 = ssub.s32 16, 16
          %329 = vsyncadd [#allocation7], %s328
          %332 = dma.hbm_to_smem %s5, 16, [#allocation8], [#allocation7]
        $region32: #{forward.2} parent=11 // pred_fallthru
          _
        // Predicated region
        $region33: #{forward.2} parent=11 // pred_check
          %p333 = pneg %p175
        $region34: #{forward.2} parent=11 // pred_check_branch
          %335 = sbr.rel (%p333) target = $region36
        $region35: #{forward.2} parent=11 // pred_region
          %s337 = ssub.s32 16, 16
          %338 = vsyncadd [#allocation10], %s337
          %341 = dma.hbm_to_smem %s6, 16, [#allocation9], [#allocation10]
        $region36: #{forward.2} parent=11 // pred_fallthru
          _
        // Predicated region
        $region37: #{forward.2} parent=11 // pred_check
          %p342 = pneg %p196
        $region38: #{forward.2} parent=11 // pred_check_branch
          %344 = sbr.rel (%p342) target = $region40
        $region39: #{forward.2} parent=11 // pred_region
          %s346 = ssub.s32 16, 16
          %347 = vsyncadd [#allocation10], %s346
          %350 = dma.hbm_to_smem %s7, 16, [#allocation11], [#allocation10]
        $region40: #{forward.2} parent=11 // pred_fallthru
          _
        // Predicated region
        $region41: #{forward.2} parent=11 // pred_check
          %p351 = pneg %p217
        $region42: #{forward.2} parent=11 // pred_check_branch
          %353 = sbr.rel (%p351) target = $region44
        $region43: #{forward.2} parent=11 // pred_region
          %s355 = ssub.s32 16, 16
          %356 = vsyncadd [#allocation13], %s355
          %359 = dma.hbm_to_smem %s8, 16, [#allocation12], [#allocation13]
        $region44: #{forward.2} parent=11 // pred_fallthru
          _
        // Predicated region
        $region45: #{forward.2} parent=11 // pred_check
          %p360 = pneg %p238
        $region46: #{forward.2} parent=11 // pred_check_branch
          %362 = sbr.rel (%p360) target = $region48
        $region47: #{forward.2} parent=11 // pred_region
          %s364 = ssub.s32 16, 16
          %365 = vsyncadd [#allocation13], %s364
          %368 = dma.hbm_to_smem %s9, 16, [#allocation14], [#allocation13]
        $region48: #{forward.2} parent=11 // pred_fallthru
          _
        // Predicated region
        $region49: #{forward.2} parent=11 // pred_check
          %p369 = pneg %p259
        $region50: #{forward.2} parent=11 // pred_check_branch
          %371 = sbr.rel (%p369) target = $region52
        $region51: #{forward.2} parent=11 // pred_region
          %s373 = ssub.s32 16, 16
          %374 = vsyncadd [#allocation16], %s373
          %377 = dma.hbm_to_smem %s10, 16, [#allocation15], [#allocation16]
        $region52: #{forward.2} parent=11 // pred_fallthru
          _
      $region12: #{forward.2} parent=5 // pred_fallthru
        _
      %p378 = scmp.lt.s32.totalorder %s23, 2
      // Predicated region
      $region53: #{forward.2} parent=5 // pred_check
        %p379 = pneg %p378
      $region54: #{forward.2} parent=5 // pred_check_branch
        %381 = sbr.rel (%p379) target = $region56
      $region55: #{forward.2} parent=5 // pred_region
        // Predicated region
        $region57: #{forward.2} parent=55 // pred_check
          %p382 = pneg %p43
        $region58: #{forward.2} parent=55 // pred_check_branch
          %384 = sbr.rel (%p382) target = $region60
        $region59: #{forward.2} parent=55 // pred_region
          %p385 = scmp.lt.s32.totalorder %s23, 1
          %s386 = scalar_select %p385, %s23, 1
          %s387 = smul.addr %s386, 2
          %s388 = smul.addr %s387, 8
          %s389 = scalar_lea.vmem %s0, %s388
        $region60: #{forward.2} parent=55 // pred_fallthru
          _
      $region56: #{forward.2} parent=5 // pred_fallthru
        _
      %p390 = scmp.le.s32.totalorder 1, %s23
      %p391 = scmp.lt.s32.totalorder %s23, 3
      %p392 = pnand %p390, %p391
      %p393 = pneg %p392
      // Predicated region
      $region61: #{forward.2} parent=5 // pred_check
        _
      $region62: #{forward.2} parent=5 // pred_check_branch
        %395 = sbr.rel (%p392) target = $region64
      $region63: #{forward.2} parent=5 // pred_region
        %s396 = ssub.s32 %s23, 1
        // Predicated region
        $region65: #{forward.2} parent=63 // pred_check
          %p397 = pneg %p91
        $region66: #{forward.2} parent=63 // pred_check_branch
          %399 = sbr.rel (%p397) target = $region68
        $region67: #{forward.2} parent=63 // pred_region
          %400 = dma.done [#allocation5], 16
        $region68: #{forward.2} parent=63 // pred_fallthru
          _
        // Predicated region
        $region69: #{forward.2} parent=63 // pred_check
          %p401 = pneg %p133
        $region70: #{forward.2} parent=63 // pred_check_branch
          %403 = sbr.rel (%p401) target = $region72
        $region71: #{forward.2} parent=63 // pred_region
          %404 = dma.done [#allocation7], 16
        $region72: #{forward.2} parent=63 // pred_fallthru
          _
        // Predicated region
        $region73: #{forward.2} parent=63 // pred_check
          %p405 = pneg %p154
        $region74: #{forward.2} parent=63 // pred_check_branch
          %407 = sbr.rel (%p405) target = $region76
        $region75: #{forward.2} parent=63 // pred_region
          %408 = dma.done [#allocation7], 16
        $region76: #{forward.2} parent=63 // pred_fallthru
          _
        // Predicated region
        $region77: #{forward.2} parent=63 // pred_check
          %p409 = pneg %p175
        $region78: #{forward.2} parent=63 // pred_check_branch
          %411 = sbr.rel (%p409) target = $region80
        $region79: #{forward.2} parent=63 // pred_region
          %412 = dma.done [#allocation10], 16
        $region80: #{forward.2} parent=63 // pred_fallthru
          _
        // Predicated region
        $region81: #{forward.2} parent=63 // pred_check
          %p413 = pneg %p196
        $region82: #{forward.2} parent=63 // pred_check_branch
          %415 = sbr.rel (%p413) target = $region84
        $region83: #{forward.2} parent=63 // pred_region
          %416 = dma.done [#allocation10], 16
        $region84: #{forward.2} parent=63 // pred_fallthru
          _
        // Predicated region
        $region85: #{forward.2} parent=63 // pred_check
          %p417 = pneg %p217
        $region86: #{forward.2} parent=63 // pred_check_branch
          %419 = sbr.rel (%p417) target = $region88
        $region87: #{forward.2} parent=63 // pred_region
          %420 = dma.done [#allocation13], 16
        $region88: #{forward.2} parent=63 // pred_fallthru
          _
        // Predicated region
        $region89: #{forward.2} parent=63 // pred_check
          %p421 = pneg %p238
        $region90: #{forward.2} parent=63 // pred_check_branch
          %423 = sbr.rel (%p421) target = $region92
        $region91: #{forward.2} parent=63 // pred_region
          %424 = dma.done [#allocation13], 16
        $region92: #{forward.2} parent=63 // pred_fallthru
          _
        // Predicated region
        $region93: #{forward.2} parent=63 // pred_check
          %p425 = pneg %p259
        $region94: #{forward.2} parent=63 // pred_check_branch
          %427 = sbr.rel (%p425) target = $region96
        $region95: #{forward.2} parent=63 // pred_region
          %428 = dma.done [#allocation16], 16
        $region96: #{forward.2} parent=63 // pred_fallthru
          _
        %429 = sfence
        %p430 = scmp.lt.s32.totalorder %s28, 1
        %s431 = scalar_select %p430, %s28, 1
        %s432 = smul.addr %s431, 2
        %s433 = smul.addr %s432, 8
        %s434 = scalar_lea.vmem %s0, %s433
        %p435 = pneg %p49
        %p436 = pneg %p46
        %p437 = pneg %p70
        %p438 = pneg %p67
        %p439 = pneg %p91
        %p440 = pneg %p88
        %p441 = pneg %p112
        %p442 = pneg %p109
        %p443 = pneg %p133
        %p444 = pneg %p130
        %p445 = pneg %p154
        %p446 = pneg %p151
        %p447 = pneg %p175
        %p448 = pneg %p172
        %p449 = pneg %p196
        %p450 = pneg %p193
        %p451 = pneg %p217
        %p452 = pneg %p214
        %p453 = pneg %p238
        %p454 = pneg %p235
        %p455 = pneg %p259
        %p456 = pneg %p256
        %p457 = pneg %p285
        %p458 = pneg %p282
        %p459 = scmp.lt.s32.totalorder %s28, 1
        %s460 = scalar_select %p459, %s28, 1
        %s461 = smul.addr %s460, 12
        %s462 = smul.addr %s461, 8
        %s463 = scalar_lea.vmem %s11, %s462
        %p464 = scmp.lt.s32.totalorder %s28, 1
        %s465 = scalar_select %p464, %s28, 1
        %s466 = smul.addr %s465, 2
        %s467 = smul.addr %s466, 8
        %s468 = scalar_lea.vmem %s0, %s467
        %p469 = scmp.lt.s32.totalorder %s28, 1
        %s470 = scalar_select %p469, %s28, 1
        %s471 = smul.addr %s470, 12
        %s472 = smul.addr %s471, 8
        %s473 = scalar_lea.vmem %s11, %s472
        %v474 = vld [vmem:[%s468] sm:$0xff]
        %v475 = vld [vmem:[%s468 + $0x8] sm:$0x3]
        %v476 = vld [vmem:[%s1] sm:$0xff]
        %s477 = sld [smem:[#allocation4]]
        %v478 = vstv %s477
        %v479 = vmul.f32 %v478, %v474
        %v480 = vadd.f32 %v479, 0.0
        %s481 = sld [smem:[#allocation4 + $0x1]]
        %v482 = vstv %s481
        %v483 = vmul.f32 %v482, %v474
        %485 = vrot.lane.b32.xlu0 %v483, 127
        %v486 = vpop.permute.xlu0 %485
        %v488 = vadd.f32 %v480, %v486
        %s489 = sld [smem:[#allocation4 + $0x2]]
        %v490 = vstv %s489
        %v491 = vmul.f32 %v490, %v474
        %493 = vrot.lane.b32.xlu0 %v491, 126
        %v494 = vpop.permute.xlu0 %493
        %v496 = vadd.f32 %v488, %v494
        %s497 = sld [smem:[#allocation4 + $0x3]]
        %v498 = vstv %s497
        %v499 = vmul.f32 %v498, %v474
        %501 = vrot.lane.b32.xlu0 %v499, 118
        %v502 = vpop.permute.xlu0 %501
        %v504 = vadd.f32 %v496, %v502
        %s505 = sld [smem:[#allocation4 + $0x4]]
        %v506 = vstv %s505
        %v507 = vmul.f32 %v506, %v474
        %509 = vrot.lane.b32.xlu0 %v507, 117
        %v510 = vpop.permute.xlu0 %509
        %v512 = vadd.f32 %v504, %v510
        %s513 = sld [smem:[#allocation4 + $0x5]]
        %v514 = vstv %s513
        %v515 = vmul.f32 %v514, %v474
        %517 = vrot.lane.b32.xlu0 %v515, 116
        %v518 = vpop.permute.xlu0 %517
        %v520 = vadd.f32 %v512, %v518
        %s521 = sld [smem:[#allocation4 + $0x6]]
        %v522 = vstv %s521
        %v523 = vmul.f32 %v522, %v474
        %525 = vrot.lane.b32.xlu0 %v523, 108
        %v526 = vpop.permute.xlu0 %525
        %v528 = vadd.f32 %v520, %v526
        %s529 = sld [smem:[#allocation4 + $0x7]]
        %v530 = vstv %s529
        %v531 = vmul.f32 %v530, %v474
        %533 = vrot.lane.b32.xlu0 %v531, 107
        %v534 = vpop.permute.xlu0 %533
        %v536 = vadd.f32 %v528, %v534
        %s537 = sld [smem:[#allocation4 + $0x8]]
        %v538 = vstv %s537
        %v539 = vmul.f32 %v538, %v474
        %541 = vrot.lane.b32.xlu0 %v539, 106
        %v542 = vpop.permute.xlu0 %541
        %v544 = vadd.f32 %v536, %v542
        %s545 = sld [smem:[#allocation4 + $0x9]]
        %v546 = vstv %s545
        %v547 = vmul.f32 %v546, %v474
        %v548 = vmul.f32 %v546, %v475
        %vm551 = vcmask 1046528
        %v552 = vrot.slane %v547, 1
        %v553 = vrot.slane %v548, 1
        %v554 = vsel %vm551, %v552, %v553
        %v556 = vadd.f32 %v544, %v554
        %s557 = sld [smem:[#allocation4 + $0xa]]
        %v558 = vstv %s557
        %v559 = vmul.f32 %v558, %v474
        %v560 = vmul.f32 %v558, %v475
        %v563 = vrot.slane %v559, 1
        %v564 = vrot.slane %v560, 1
        %v565 = vsel %vm551, %v563, %v564
        %566 = vrot.lane.b32.xlu0 %v565, 127
        %v567 = vpop.permute.xlu0 %566
        %v569 = vadd.f32 %v556, %v567
        %s570 = sld [smem:[#allocation4 + $0xb]]
        %v571 = vstv %s570
        %v572 = vmul.f32 %v571, %v474
        %v573 = vmul.f32 %v571, %v475
        %v576 = vrot.slane %v572, 1
        %v577 = vrot.slane %v573, 1
        %v578 = vsel %vm551, %v576, %v577
        %579 = vrot.lane.b32.xlu0 %v578, 126
        %v580 = vpop.permute.xlu0 %579
        %v582 = vadd.f32 %v569, %v580
        %s583 = sld [smem:[#allocation4 + $0xc]]
        %v584 = vstv %s583
        %v585 = vmul.f32 %v584, %v474
        %v586 = vmul.f32 %v584, %v475
        %v589 = vrot.slane %v585, 1
        %v590 = vrot.slane %v586, 1
        %v591 = vsel %vm551, %v589, %v590
        %592 = vrot.lane.b32.xlu0 %v591, 118
        %v593 = vpop.permute.xlu0 %592
        %v595 = vadd.f32 %v582, %v593
        %s596 = sld [smem:[#allocation4 + $0xd]]
        %v597 = vstv %s596
        %v598 = vmul.f32 %v597, %v474
        %v599 = vmul.f32 %v597, %v475
        %v602 = vrot.slane %v598, 1
        %v603 = vrot.slane %v599, 1
        %v604 = vsel %vm551, %v602, %v603
        %605 = vrot.lane.b32.xlu0 %v604, 117
        %v606 = vpop.permute.xlu0 %605
        %v608 = vadd.f32 %v595, %v606
        %s609 = sld [smem:[#allocation4 + $0xe]]
        %v610 = vstv %s609
        %v611 = vmul.f32 %v610, %v474
        %v612 = vmul.f32 %v610, %v475
        %v615 = vrot.slane %v611, 1
        %v616 = vrot.slane %v612, 1
        %v617 = vsel %vm551, %v615, %v616
        %618 = vrot.lane.b32.xlu0 %v617, 116
        %v619 = vpop.permute.xlu0 %618
        %v621 = vadd.f32 %v608, %v619
        %s622 = sld [smem:[#allocation4 + $0xf]]
        %v623 = vstv %s622
        %v624 = vmul.f32 %v623, %v474
        %v625 = vmul.f32 %v623, %v475
        %v628 = vrot.slane %v624, 1
        %v629 = vrot.slane %v625, 1
        %v630 = vsel %vm551, %v628, %v629
        %631 = vrot.lane.b32.xlu0 %v630, 108
        %v632 = vpop.permute.xlu0 %631
        %v634 = vadd.f32 %v621, %v632
        %s635 = sld [smem:[#allocation4 + $0x10]]
        %v636 = vstv %s635
        %v637 = vmul.f32 %v636, %v474
        %v638 = vmul.f32 %v636, %v475
        %v641 = vrot.slane %v637, 1
        %v642 = vrot.slane %v638, 1
        %v643 = vsel %vm551, %v641, %v642
        %644 = vrot.lane.b32.xlu0 %v643, 107
        %v645 = vpop.permute.xlu0 %644
        %v647 = vadd.f32 %v634, %v645
        %s648 = sld [smem:[#allocation4 + $0x11]]
        %v649 = vstv %s648
        %v650 = vmul.f32 %v649, %v474
        %v651 = vmul.f32 %v649, %v475
        %v654 = vrot.slane %v650, 1
        %v655 = vrot.slane %v651, 1
        %v656 = vsel %vm551, %v654, %v655
        %657 = vrot.lane.b32.xlu0 %v656, 106
        %v658 = vpop.permute.xlu0 %657
        %v660 = vadd.f32 %v647, %v658
        %s661 = sld [smem:[#allocation4 + $0x12]]
        %v662 = vstv %s661
        %v663 = vmul.f32 %v662, %v474
        %v664 = vmul.f32 %v662, %v475
        %vm667 = vcmask 1045504
        %v668 = vrot.slane %v663, 2
        %v669 = vrot.slane %v664, 2
        %v670 = vsel %vm667, %v668, %v669
        %v672 = vadd.f32 %v660, %v670
        %s673 = sld [smem:[#allocation4 + $0x13]]
        %v674 = vstv %s673
        %v675 = vmul.f32 %v674, %v474
        %v676 = vmul.f32 %v674, %v475
        %v679 = vrot.slane %v675, 2
        %v680 = vrot.slane %v676, 2
        %v681 = vsel %vm667, %v679, %v680
        %682 = vrot.lane.b32.xlu0 %v681, 127
        %v683 = vpop.permute.xlu0 %682
        %v685 = vadd.f32 %v672, %v683
        %s686 = sld [smem:[#allocation4 + $0x14]]
        %v687 = vstv %s686
        %v688 = vmul.f32 %v687, %v474
        %v689 = vmul.f32 %v687, %v475
        %v692 = vrot.slane %v688, 2
        %v693 = vrot.slane %v689, 2
        %v694 = vsel %vm667, %v692, %v693
        %695 = vrot.lane.b32.xlu0 %v694, 126
        %v696 = vpop.permute.xlu0 %695
        %v698 = vadd.f32 %v685, %v696
        %s699 = sld [smem:[#allocation4 + $0x15]]
        %v700 = vstv %s699
        %v701 = vmul.f32 %v700, %v474
        %v702 = vmul.f32 %v700, %v475
        %v705 = vrot.slane %v701, 2
        %v706 = vrot.slane %v702, 2
        %v707 = vsel %vm667, %v705, %v706
        %708 = vrot.lane.b32.xlu0 %v707, 118
        %v709 = vpop.permute.xlu0 %708
        %v711 = vadd.f32 %v698, %v709
        %s712 = sld [smem:[#allocation4 + $0x16]]
        %v713 = vstv %s712
        %v714 = vmul.f32 %v713, %v474
        %v715 = vmul.f32 %v713, %v475
        %v718 = vrot.slane %v714, 2
        %v719 = vrot.slane %v715, 2
        %v720 = vsel %vm667, %v718, %v719
        %721 = vrot.lane.b32.xlu0 %v720, 117
        %v722 = vpop.permute.xlu0 %721
        %v724 = vadd.f32 %v711, %v722
        %s725 = sld [smem:[#allocation4 + $0x17]]
        %v726 = vstv %s725
        %v727 = vmul.f32 %v726, %v474
        %v728 = vmul.f32 %v726, %v475
        %v731 = vrot.slane %v727, 2
        %v732 = vrot.slane %v728, 2
        %v733 = vsel %vm667, %v731, %v732
        %734 = vrot.lane.b32.xlu0 %v733, 116
        %v735 = vpop.permute.xlu0 %734
        %v737 = vadd.f32 %v724, %v735
        %s738 = sld [smem:[#allocation4 + $0x18]]
        %v739 = vstv %s738
        %v740 = vmul.f32 %v739, %v474
        %v741 = vmul.f32 %v739, %v475
        %v744 = vrot.slane %v740, 2
        %v745 = vrot.slane %v741, 2
        %v746 = vsel %vm667, %v744, %v745
        %747 = vrot.lane.b32.xlu0 %v746, 108
        %v748 = vpop.permute.xlu0 %747
        %v750 = vadd.f32 %v737, %v748
        %s751 = sld [smem:[#allocation4 + $0x19]]
        %v752 = vstv %s751
        %v753 = vmul.f32 %v752, %v474
        %v754 = vmul.f32 %v752, %v475
        %v757 = vrot.slane %v753, 2
        %v758 = vrot.slane %v754, 2
        %v759 = vsel %vm667, %v757, %v758
        %760 = vrot.lane.b32.xlu0 %v759, 107
        %v761 = vpop.permute.xlu0 %760
        %v763 = vadd.f32 %v750, %v761
        %s764 = sld [smem:[#allocation4 + $0x1a]]
        %v765 = vstv %s764
        %v766 = vmul.f32 %v765, %v474
        %v767 = vmul.f32 %v765, %v475
        %v770 = vrot.slane %v766, 2
        %v771 = vrot.slane %v767, 2
        %v772 = vsel %vm667, %v770, %v771
        %773 = vrot.lane.b32.xlu0 %v772, 106
        %v774 = vpop.permute.xlu0 %773
        %v776 = vadd.f32 %v763, %v774
        %s777 = sld [smem:[#allocation3]]
        %v778 = vstv %s777
        %v779 = vadd.f32 %v776, %v778
        %s780 = sld [smem:[#allocation6]]
        %v781 = vstv %s780
        %v782 = vmul.f32 %v781, %v779
        %s783 = sld [smem:[#allocation8]]
        %v784 = vstv %s783
        %v785 = vadd.f32 %v782, %v784
        %v786 = vmax.f32 %v785, 0.0
        %s787 = sld [smem:[#allocation6 + $0x1]]
        %v788 = vstv %s787
        %v789 = vmul.f32 %v788, %v779
        %s790 = sld [smem:[#allocation8 + $0x1]]
        %v791 = vstv %s790
        %v792 = vadd.f32 %v789, %v791
        %v793 = vmax.f32 %v792, 0.0
        %s794 = sld [smem:[#allocation6 + $0x2]]
        %v795 = vstv %s794
        %v796 = vmul.f32 %v795, %v779
        %s797 = sld [smem:[#allocation8 + $0x2]]
        %v798 = vstv %s797
        %v799 = vadd.f32 %v796, %v798
        %v800 = vmax.f32 %v799, 0.0
        %s801 = sld [smem:[#allocation6 + $0x3]]
        %v802 = vstv %s801
        %v803 = vmul.f32 %v802, %v779
        %s804 = sld [smem:[#allocation8 + $0x3]]
        %v805 = vstv %s804
        %v806 = vadd.f32 %v803, %v805
        %v807 = vmax.f32 %v806, 0.0
        %808 = vst [vmem:[#allocation2] sm:$0xff] 0.0
        %809 = vst [vmem:[#allocation2 + $0x8] sm:$0x3] 0.0
        %v810 = vmul.f32 %v786, %v476
        %812 = vrot.lane.b32.xlu0 %v810, 11
        %v813 = vpop.permute.xlu0 %812
        %vm815 = vcmask 744536
        %816 = vst.msk [vmem:[#allocation2 + $0x1] sm:$0xff] %vm815, %v813
        %v817 = vld [vmem:[#allocation2] sm:$0xff]
        %v818 = vld [vmem:[#allocation2 + $0x8] sm:$0x3]
        %s819 = sld [smem:[#allocation9]]
        %v820 = vstv %s819
        %v821 = vmul.f32 %v820, %v817
        %v822 = vadd.f32 %v821, 0.0
        %s823 = sld [smem:[#allocation9 + $0x1]]
        %v824 = vstv %s823
        %v825 = vmul.f32 %v824, %v817
        %827 = vrot.lane.b32.xlu0 %v825, 127
        %v828 = vpop.permute.xlu0 %827
        %v830 = vadd.f32 %v822, %v828
        %s831 = sld [smem:[#allocation9 + $0x2]]
        %v832 = vstv %s831
        %v833 = vmul.f32 %v832, %v817
        %835 = vrot.lane.b32.xlu0 %v833, 126
        %v836 = vpop.permute.xlu0 %835
        %v838 = vadd.f32 %v830, %v836
        %s839 = sld [smem:[#allocation9 + $0x3]]
        %v840 = vstv %s839
        %v841 = vmul.f32 %v840, %v817
        %843 = vrot.lane.b32.xlu0 %v841, 118
        %v844 = vpop.permute.xlu0 %843
        %v846 = vadd.f32 %v838, %v844
        %s847 = sld [smem:[#allocation9 + $0x4]]
        %v848 = vstv %s847
        %v849 = vmul.f32 %v848, %v817
        %851 = vrot.lane.b32.xlu0 %v849, 117
        %v852 = vpop.permute.xlu0 %851
        %v854 = vadd.f32 %v846, %v852
        %s855 = sld [smem:[#allocation9 + $0x5]]
        %v856 = vstv %s855
        %v857 = vmul.f32 %v856, %v817
        %859 = vrot.lane.b32.xlu0 %v857, 116
        %v860 = vpop.permute.xlu0 %859
        %v862 = vadd.f32 %v854, %v860
        %s863 = sld [smem:[#allocation9 + $0x6]]
        %v864 = vstv %s863
        %v865 = vmul.f32 %v864, %v817
        %867 = vrot.lane.b32.xlu0 %v865, 108
        %v868 = vpop.permute.xlu0 %867
        %v870 = vadd.f32 %v862, %v868
        %s871 = sld [smem:[#allocation9 + $0x7]]
        %v872 = vstv %s871
        %v873 = vmul.f32 %v872, %v817
        %875 = vrot.lane.b32.xlu0 %v873, 107
        %v876 = vpop.permute.xlu0 %875
        %v878 = vadd.f32 %v870, %v876
        %s879 = sld [smem:[#allocation9 + $0x8]]
        %v880 = vstv %s879
        %v881 = vmul.f32 %v880, %v817
        %883 = vrot.lane.b32.xlu0 %v881, 106
        %v884 = vpop.permute.xlu0 %883
        %v886 = vadd.f32 %v878, %v884
        %s887 = sld [smem:[#allocation9 + $0x9]]
        %v888 = vstv %s887
        %v889 = vmul.f32 %v888, %v817
        %v890 = vmul.f32 %v888, %v818
        %v893 = vrot.slane %v889, 1
        %v894 = vrot.slane %v890, 1
        %v895 = vsel %vm551, %v893, %v894
        %v897 = vadd.f32 %v886, %v895
        %s898 = sld [smem:[#allocation9 + $0xa]]
        %v899 = vstv %s898
        %v900 = vmul.f32 %v899, %v817
        %v901 = vmul.f32 %v899, %v818
        %v904 = vrot.slane %v900, 1
        %v905 = vrot.slane %v901, 1
        %v906 = vsel %vm551, %v904, %v905
        %907 = vrot.lane.b32.xlu0 %v906, 127
        %v908 = vpop.permute.xlu0 %907
        %v910 = vadd.f32 %v897, %v908
        %s911 = sld [smem:[#allocation9 + $0xb]]
        %v912 = vstv %s911
        %v913 = vmul.f32 %v912, %v817
        %v914 = vmul.f32 %v912, %v818
        %v917 = vrot.slane %v913, 1
        %v918 = vrot.slane %v914, 1
        %v919 = vsel %vm551, %v917, %v918
        %920 = vrot.lane.b32.xlu0 %v919, 126
        %v921 = vpop.permute.xlu0 %920
        %v923 = vadd.f32 %v910, %v921
        %s924 = sld [smem:[#allocation9 + $0xc]]
        %v925 = vstv %s924
        %v926 = vmul.f32 %v925, %v817
        %v927 = vmul.f32 %v925, %v818
        %v930 = vrot.slane %v926, 1
        %v931 = vrot.slane %v927, 1
        %v932 = vsel %vm551, %v930, %v931
        %933 = vrot.lane.b32.xlu0 %v932, 118
        %v934 = vpop.permute.xlu0 %933
        %v936 = vadd.f32 %v923, %v934
        %s937 = sld [smem:[#allocation9 + $0xd]]
        %v938 = vstv %s937
        %v939 = vmul.f32 %v938, %v817
        %v940 = vmul.f32 %v938, %v818
        %v943 = vrot.slane %v939, 1
        %v944 = vrot.slane %v940, 1
        %v945 = vsel %vm551, %v943, %v944
        %946 = vrot.lane.b32.xlu0 %v945, 117
        %v947 = vpop.permute.xlu0 %946
        %v949 = vadd.f32 %v936, %v947
        %s950 = sld [smem:[#allocation9 + $0xe]]
        %v951 = vstv %s950
        %v952 = vmul.f32 %v951, %v817
        %v953 = vmul.f32 %v951, %v818
        %v956 = vrot.slane %v952, 1
        %v957 = vrot.slane %v953, 1
        %v958 = vsel %vm551, %v956, %v957
        %959 = vrot.lane.b32.xlu0 %v958, 116
        %v960 = vpop.permute.xlu0 %959
        %v962 = vadd.f32 %v949, %v960
        %s963 = sld [smem:[#allocation9 + $0xf]]
        %v964 = vstv %s963
        %v965 = vmul.f32 %v964, %v817
        %v966 = vmul.f32 %v964, %v818
        %v969 = vrot.slane %v965, 1
        %v970 = vrot.slane %v966, 1
        %v971 = vsel %vm551, %v969, %v970
        %972 = vrot.lane.b32.xlu0 %v971, 108
        %v973 = vpop.permute.xlu0 %972
        %v975 = vadd.f32 %v962, %v973
        %s976 = sld [smem:[#allocation9 + $0x10]]
        %v977 = vstv %s976
        %v978 = vmul.f32 %v977, %v817
        %v979 = vmul.f32 %v977, %v818
        %v982 = vrot.slane %v978, 1
        %v983 = vrot.slane %v979, 1
        %v984 = vsel %vm551, %v982, %v983
        %985 = vrot.lane.b32.xlu0 %v984, 107
        %v986 = vpop.permute.xlu0 %985
        %v988 = vadd.f32 %v975, %v986
        %s989 = sld [smem:[#allocation9 + $0x11]]
        %v990 = vstv %s989
        %v991 = vmul.f32 %v990, %v817
        %v992 = vmul.f32 %v990, %v818
        %v995 = vrot.slane %v991, 1
        %v996 = vrot.slane %v992, 1
        %v997 = vsel %vm551, %v995, %v996
        %998 = vrot.lane.b32.xlu0 %v997, 106
        %v999 = vpop.permute.xlu0 %998
        %v1001 = vadd.f32 %v988, %v999
        %s1002 = sld [smem:[#allocation9 + $0x12]]
        %v1003 = vstv %s1002
        %v1004 = vmul.f32 %v1003, %v817
        %v1005 = vmul.f32 %v1003, %v818
        %v1008 = vrot.slane %v1004, 2
        %v1009 = vrot.slane %v1005, 2
        %v1010 = vsel %vm667, %v1008, %v1009
        %v1012 = vadd.f32 %v1001, %v1010
        %s1013 = sld [smem:[#allocation9 + $0x13]]
        %v1014 = vstv %s1013
        %v1015 = vmul.f32 %v1014, %v817
        %v1016 = vmul.f32 %v1014, %v818
        %v1019 = vrot.slane %v1015, 2
        %v1020 = vrot.slane %v1016, 2
        %v1021 = vsel %vm667, %v1019, %v1020
        %1022 = vrot.lane.b32.xlu0 %v1021, 127
        %v1023 = vpop.permute.xlu0 %1022
        %v1025 = vadd.f32 %v1012, %v1023
        %s1026 = sld [smem:[#allocation9 + $0x14]]
        %v1027 = vstv %s1026
        %v1028 = vmul.f32 %v1027, %v817
        %v1029 = vmul.f32 %v1027, %v818
        %v1032 = vrot.slane %v1028, 2
        %v1033 = vrot.slane %v1029, 2
        %v1034 = vsel %vm667, %v1032, %v1033
        %1035 = vrot.lane.b32.xlu0 %v1034, 126
        %v1036 = vpop.permute.xlu0 %1035
        %v1038 = vadd.f32 %v1025, %v1036
        %s1039 = sld [smem:[#allocation9 + $0x15]]
        %v1040 = vstv %s1039
        %v1041 = vmul.f32 %v1040, %v817
        %v1042 = vmul.f32 %v1040, %v818
        %v1045 = vrot.slane %v1041, 2
        %v1046 = vrot.slane %v1042, 2
        %v1047 = vsel %vm667, %v1045, %v1046
        %1048 = vrot.lane.b32.xlu0 %v1047, 118
        %v1049 = vpop.permute.xlu0 %1048
        %v1051 = vadd.f32 %v1038, %v1049
        %s1052 = sld [smem:[#allocation9 + $0x16]]
        %v1053 = vstv %s1052
        %v1054 = vmul.f32 %v1053, %v817
        %v1055 = vmul.f32 %v1053, %v818
        %v1058 = vrot.slane %v1054, 2
        %v1059 = vrot.slane %v1055, 2
        %v1060 = vsel %vm667, %v1058, %v1059
        %1061 = vrot.lane.b32.xlu0 %v1060, 117
        %v1062 = vpop.permute.xlu0 %1061
        %v1064 = vadd.f32 %v1051, %v1062
        %s1065 = sld [smem:[#allocation9 + $0x17]]
        %v1066 = vstv %s1065
        %v1067 = vmul.f32 %v1066, %v817
        %v1068 = vmul.f32 %v1066, %v818
        %v1071 = vrot.slane %v1067, 2
        %v1072 = vrot.slane %v1068, 2
        %v1073 = vsel %vm667, %v1071, %v1072
        %1074 = vrot.lane.b32.xlu0 %v1073, 116
        %v1075 = vpop.permute.xlu0 %1074
        %v1077 = vadd.f32 %v1064, %v1075
        %s1078 = sld [smem:[#allocation9 + $0x18]]
        %v1079 = vstv %s1078
        %v1080 = vmul.f32 %v1079, %v817
        %v1081 = vmul.f32 %v1079, %v818
        %v1084 = vrot.slane %v1080, 2
        %v1085 = vrot.slane %v1081, 2
        %v1086 = vsel %vm667, %v1084, %v1085
        %1087 = vrot.lane.b32.xlu0 %v1086, 108
        %v1088 = vpop.permute.xlu0 %1087
        %v1090 = vadd.f32 %v1077, %v1088
        %s1091 = sld [smem:[#allocation9 + $0x19]]
        %v1092 = vstv %s1091
        %v1093 = vmul.f32 %v1092, %v817
        %v1094 = vmul.f32 %v1092, %v818
        %v1097 = vrot.slane %v1093, 2
        %v1098 = vrot.slane %v1094, 2
        %v1099 = vsel %vm667, %v1097, %v1098
        %1100 = vrot.lane.b32.xlu0 %v1099, 107
        %v1101 = vpop.permute.xlu0 %1100
        %v1103 = vadd.f32 %v1090, %v1101
        %s1104 = sld [smem:[#allocation9 + $0x1a]]
        %v1105 = vstv %s1104
        %v1106 = vmul.f32 %v1105, %v817
        %v1107 = vmul.f32 %v1105, %v818
        %v1110 = vrot.slane %v1106, 2
        %v1111 = vrot.slane %v1107, 2
        %v1112 = vsel %vm667, %v1110, %v1111
        %1113 = vrot.lane.b32.xlu0 %v1112, 106
        %v1114 = vpop.permute.xlu0 %1113
        %v1116 = vadd.f32 %v1103, %v1114
        %s1117 = sld [smem:[#allocation11]]
        %v1118 = vstv %s1117
        %v1119 = vmul.f32 %v1118, %v1116
        %s1120 = sld [smem:[#allocation12]]
        %v1121 = vstv %s1120
        %v1122 = vadd.f32 %v1119, %v1121
        %v1123 = vmax.f32 %v1122, 0.0
        %v1124 = vadd.f32 %v1123, %v793
        %v1125 = vmul.f32 %v1124, %v476
        %1127 = vrot.lane.b32.xlu0 %v1125, 11
        %v1128 = vpop.permute.xlu0 %1127
        %1130 = vst.msk [vmem:[#allocation2 + $0x1] sm:$0xff] %vm815, %v1128
        %v1131 = vld [vmem:[#allocation2] sm:$0xff]
        %v1132 = vld [vmem:[#allocation2 + $0x8] sm:$0x3]
        %s1133 = sld [smem:[#allocation9 + $0x1b]]
        %v1134 = vstv %s1133
        %v1135 = vmul.f32 %v1134, %v1131
        %v1136 = vadd.f32 %v1135, 0.0
        %s1137 = sld [smem:[#allocation9 + $0x1c]]
        %v1138 = vstv %s1137
        %v1139 = vmul.f32 %v1138, %v1131
        %1141 = vrot.lane.b32.xlu0 %v1139, 127
        %v1142 = vpop.permute.xlu0 %1141
        %v1144 = vadd.f32 %v1136, %v1142
        %s1145 = sld [smem:[#allocation9 + $0x1d]]
        %v1146 = vstv %s1145
        %v1147 = vmul.f32 %v1146, %v1131
        %1149 = vrot.lane.b32.xlu0 %v1147, 126
        %v1150 = vpop.permute.xlu0 %1149
        %v1152 = vadd.f32 %v1144, %v1150
        %s1153 = sld [smem:[#allocation9 + $0x1e]]
        %v1154 = vstv %s1153
        %v1155 = vmul.f32 %v1154, %v1131
        %1157 = vrot.lane.b32.xlu0 %v1155, 118
        %v1158 = vpop.permute.xlu0 %1157
        %v1160 = vadd.f32 %v1152, %v1158
        %s1161 = sld [smem:[#allocation9 + $0x1f]]
        %v1162 = vstv %s1161
        %v1163 = vmul.f32 %v1162, %v1131
        %1165 = vrot.lane.b32.xlu0 %v1163, 117
        %v1166 = vpop.permute.xlu0 %1165
        %v1168 = vadd.f32 %v1160, %v1166
        %s1169 = sld [smem:[#allocation9 + $0x20]]
        %v1170 = vstv %s1169
        %v1171 = vmul.f32 %v1170, %v1131
        %1173 = vrot.lane.b32.xlu0 %v1171, 116
        %v1174 = vpop.permute.xlu0 %1173
        %v1176 = vadd.f32 %v1168, %v1174
        %s1177 = sld [smem:[#allocation9 + $0x21]]
        %v1178 = vstv %s1177
        %v1179 = vmul.f32 %v1178, %v1131
        %1181 = vrot.lane.b32.xlu0 %v1179, 108
        %v1182 = vpop.permute.xlu0 %1181
        %v1184 = vadd.f32 %v1176, %v1182
        %s1185 = sld [smem:[#allocation9 + $0x22]]
        %v1186 = vstv %s1185
        %v1187 = vmul.f32 %v1186, %v1131
        %1189 = vrot.lane.b32.xlu0 %v1187, 107
        %v1190 = vpop.permute.xlu0 %1189
        %v1192 = vadd.f32 %v1184, %v1190
        %s1193 = sld [smem:[#allocation9 + $0x23]]
        %v1194 = vstv %s1193
        %v1195 = vmul.f32 %v1194, %v1131
        %1197 = vrot.lane.b32.xlu0 %v1195, 106
        %v1198 = vpop.permute.xlu0 %1197
        %v1200 = vadd.f32 %v1192, %v1198
        %s1201 = sld [smem:[#allocation9 + $0x24]]
        %v1202 = vstv %s1201
        %v1203 = vmul.f32 %v1202, %v1131
        %v1204 = vmul.f32 %v1202, %v1132
        %v1207 = vrot.slane %v1203, 1
        %v1208 = vrot.slane %v1204, 1
        %v1209 = vsel %vm551, %v1207, %v1208
        %v1211 = vadd.f32 %v1200, %v1209
        %s1212 = sld [smem:[#allocation9 + $0x25]]
        %v1213 = vstv %s1212
        %v1214 = vmul.f32 %v1213, %v1131
        %v1215 = vmul.f32 %v1213, %v1132
        %v1218 = vrot.slane %v1214, 1
        %v1219 = vrot.slane %v1215, 1
        %v1220 = vsel %vm551, %v1218, %v1219
        %1221 = vrot.lane.b32.xlu0 %v1220, 127
        %v1222 = vpop.permute.xlu0 %1221
        %v1224 = vadd.f32 %v1211, %v1222
        %s1225 = sld [smem:[#allocation9 + $0x26]]
        %v1226 = vstv %s1225
        %v1227 = vmul.f32 %v1226, %v1131
        %v1228 = vmul.f32 %v1226, %v1132
        %v1231 = vrot.slane %v1227, 1
        %v1232 = vrot.slane %v1228, 1
        %v1233 = vsel %vm551, %v1231, %v1232
        %1234 = vrot.lane.b32.xlu0 %v1233, 126
        %v1235 = vpop.permute.xlu0 %1234
        %v1237 = vadd.f32 %v1224, %v1235
        %s1238 = sld [smem:[#allocation9 + $0x27]]
        %v1239 = vstv %s1238
        %v1240 = vmul.f32 %v1239, %v1131
        %v1241 = vmul.f32 %v1239, %v1132
        %v1244 = vrot.slane %v1240, 1
        %v1245 = vrot.slane %v1241, 1
        %v1246 = vsel %vm551, %v1244, %v1245
        %1247 = vrot.lane.b32.xlu0 %v1246, 118
        %v1248 = vpop.permute.xlu0 %1247
        %v1250 = vadd.f32 %v1237, %v1248
        %s1251 = sld [smem:[#allocation9 + $0x28]]
        %v1252 = vstv %s1251
        %v1253 = vmul.f32 %v1252, %v1131
        %v1254 = vmul.f32 %v1252, %v1132
        %v1257 = vrot.slane %v1253, 1
        %v1258 = vrot.slane %v1254, 1
        %v1259 = vsel %vm551, %v1257, %v1258
        %1260 = vrot.lane.b32.xlu0 %v1259, 117
        %v1261 = vpop.permute.xlu0 %1260
        %v1263 = vadd.f32 %v1250, %v1261
        %s1264 = sld [smem:[#allocation9 + $0x29]]
        %v1265 = vstv %s1264
        %v1266 = vmul.f32 %v1265, %v1131
        %v1267 = vmul.f32 %v1265, %v1132
        %v1270 = vrot.slane %v1266, 1
        %v1271 = vrot.slane %v1267, 1
        %v1272 = vsel %vm551, %v1270, %v1271
        %1273 = vrot.lane.b32.xlu0 %v1272, 116
        %v1274 = vpop.permute.xlu0 %1273
        %v1276 = vadd.f32 %v1263, %v1274
        %s1277 = sld [smem:[#allocation9 + $0x2a]]
        %v1278 = vstv %s1277
        %v1279 = vmul.f32 %v1278, %v1131
        %v1280 = vmul.f32 %v1278, %v1132
        %v1283 = vrot.slane %v1279, 1
        %v1284 = vrot.slane %v1280, 1
        %v1285 = vsel %vm551, %v1283, %v1284
        %1286 = vrot.lane.b32.xlu0 %v1285, 108
        %v1287 = vpop.permute.xlu0 %1286
        %v1289 = vadd.f32 %v1276, %v1287
        %s1290 = sld [smem:[#allocation9 + $0x2b]]
        %v1291 = vstv %s1290
        %v1292 = vmul.f32 %v1291, %v1131
        %v1293 = vmul.f32 %v1291, %v1132
        %v1296 = vrot.slane %v1292, 1
        %v1297 = vrot.slane %v1293, 1
        %v1298 = vsel %vm551, %v1296, %v1297
        %1299 = vrot.lane.b32.xlu0 %v1298, 107
        %v1300 = vpop.permute.xlu0 %1299
        %v1302 = vadd.f32 %v1289, %v1300
        %s1303 = sld [smem:[#allocation9 + $0x2c]]
        %v1304 = vstv %s1303
        %v1305 = vmul.f32 %v1304, %v1131
        %v1306 = vmul.f32 %v1304, %v1132
        %v1309 = vrot.slane %v1305, 1
        %v1310 = vrot.slane %v1306, 1
        %v1311 = vsel %vm551, %v1309, %v1310
        %1312 = vrot.lane.b32.xlu0 %v1311, 106
        %v1313 = vpop.permute.xlu0 %1312
        %v1315 = vadd.f32 %v1302, %v1313
        %s1316 = sld [smem:[#allocation9 + $0x2d]]
        %v1317 = vstv %s1316
        %v1318 = vmul.f32 %v1317, %v1131
        %v1319 = vmul.f32 %v1317, %v1132
        %v1322 = vrot.slane %v1318, 2
        %v1323 = vrot.slane %v1319, 2
        %v1324 = vsel %vm667, %v1322, %v1323
        %v1326 = vadd.f32 %v1315, %v1324
        %s1327 = sld [smem:[#allocation9 + $0x2e]]
        %v1328 = vstv %s1327
        %v1329 = vmul.f32 %v1328, %v1131
        %v1330 = vmul.f32 %v1328, %v1132
        %v1333 = vrot.slane %v1329, 2
        %v1334 = vrot.slane %v1330, 2
        %v1335 = vsel %vm667, %v1333, %v1334
        %1336 = vrot.lane.b32.xlu0 %v1335, 127
        %v1337 = vpop.permute.xlu0 %1336
        %v1339 = vadd.f32 %v1326, %v1337
        %s1340 = sld [smem:[#allocation9 + $0x2f]]
        %v1341 = vstv %s1340
        %v1342 = vmul.f32 %v1341, %v1131
        %v1343 = vmul.f32 %v1341, %v1132
        %v1346 = vrot.slane %v1342, 2
        %v1347 = vrot.slane %v1343, 2
        %v1348 = vsel %vm667, %v1346, %v1347
        %1349 = vrot.lane.b32.xlu0 %v1348, 126
        %v1350 = vpop.permute.xlu0 %1349
        %v1352 = vadd.f32 %v1339, %v1350
        %s1353 = sld [smem:[#allocation9 + $0x30]]
        %v1354 = vstv %s1353
        %v1355 = vmul.f32 %v1354, %v1131
        %v1356 = vmul.f32 %v1354, %v1132
        %v1359 = vrot.slane %v1355, 2
        %v1360 = vrot.slane %v1356, 2
        %v1361 = vsel %vm667, %v1359, %v1360
        %1362 = vrot.lane.b32.xlu0 %v1361, 118
        %v1363 = vpop.permute.xlu0 %1362
        %v1365 = vadd.f32 %v1352, %v1363
        %s1366 = sld [smem:[#allocation9 + $0x31]]
        %v1367 = vstv %s1366
        %v1368 = vmul.f32 %v1367, %v1131
        %v1369 = vmul.f32 %v1367, %v1132
        %v1372 = vrot.slane %v1368, 2
        %v1373 = vrot.slane %v1369, 2
        %v1374 = vsel %vm667, %v1372, %v1373
        %1375 = vrot.lane.b32.xlu0 %v1374, 117
        %v1376 = vpop.permute.xlu0 %1375
        %v1378 = vadd.f32 %v1365, %v1376
        %s1379 = sld [smem:[#allocation9 + $0x32]]
        %v1380 = vstv %s1379
        %v1381 = vmul.f32 %v1380, %v1131
        %v1382 = vmul.f32 %v1380, %v1132
        %v1385 = vrot.slane %v1381, 2
        %v1386 = vrot.slane %v1382, 2
        %v1387 = vsel %vm667, %v1385, %v1386
        %1388 = vrot.lane.b32.xlu0 %v1387, 116
        %v1389 = vpop.permute.xlu0 %1388
        %v1391 = vadd.f32 %v1378, %v1389
        %s1392 = sld [smem:[#allocation9 + $0x33]]
        %v1393 = vstv %s1392
        %v1394 = vmul.f32 %v1393, %v1131
        %v1395 = vmul.f32 %v1393, %v1132
        %v1398 = vrot.slane %v1394, 2
        %v1399 = vrot.slane %v1395, 2
        %v1400 = vsel %vm667, %v1398, %v1399
        %1401 = vrot.lane.b32.xlu0 %v1400, 108
        %v1402 = vpop.permute.xlu0 %1401
        %v1404 = vadd.f32 %v1391, %v1402
        %s1405 = sld [smem:[#allocation9 + $0x34]]
        %v1406 = vstv %s1405
        %v1407 = vmul.f32 %v1406, %v1131
        %v1408 = vmul.f32 %v1406, %v1132
        %v1411 = vrot.slane %v1407, 2
        %v1412 = vrot.slane %v1408, 2
        %v1413 = vsel %vm667, %v1411, %v1412
        %1414 = vrot.lane.b32.xlu0 %v1413, 107
        %v1415 = vpop.permute.xlu0 %1414
        %v1417 = vadd.f32 %v1404, %v1415
        %s1418 = sld [smem:[#allocation9 + $0x35]]
        %v1419 = vstv %s1418
        %v1420 = vmul.f32 %v1419, %v1131
        %v1421 = vmul.f32 %v1419, %v1132
        %v1424 = vrot.slane %v1420, 2
        %v1425 = vrot.slane %v1421, 2
        %v1426 = vsel %vm667, %v1424, %v1425
        %1427 = vrot.lane.b32.xlu0 %v1426, 106
        %v1428 = vpop.permute.xlu0 %1427
        %v1430 = vadd.f32 %v1417, %v1428
        %s1431 = sld [smem:[#allocation11 + $0x1]]
        %v1432 = vstv %s1431
        %v1433 = vmul.f32 %v1432, %v1430
        %s1434 = sld [smem:[#allocation12 + $0x1]]
        %v1435 = vstv %s1434
        %v1436 = vadd.f32 %v1433, %v1435
        %v1437 = vmax.f32 %v1436, 0.0
        %v1438 = vadd.f32 %v1437, %v800
        %v1439 = vmul.f32 %v1438, %v476
        %1441 = vrot.lane.b32.xlu0 %v1439, 11
        %v1442 = vpop.permute.xlu0 %1441
        %1444 = vst.msk [vmem:[#allocation2 + $0x1] sm:$0xff] %vm815, %v1442
        %v1445 = vld [vmem:[#allocation2] sm:$0xff]
        %v1446 = vld [vmem:[#allocation2 + $0x8] sm:$0x3]
        %s1447 = sld [smem:[#allocation9 + $0x36]]
        %v1448 = vstv %s1447
        %v1449 = vmul.f32 %v1448, %v1445
        %v1450 = vadd.f32 %v1449, 0.0
        %s1451 = sld [smem:[#allocation9 + $0x37]]
        %v1452 = vstv %s1451
        %v1453 = vmul.f32 %v1452, %v1445
        %1455 = vrot.lane.b32.xlu0 %v1453, 127
        %v1456 = vpop.permute.xlu0 %1455
        %v1458 = vadd.f32 %v1450, %v1456
        %s1459 = sld [smem:[#allocation9 + $0x38]]
        %v1460 = vstv %s1459
        %v1461 = vmul.f32 %v1460, %v1445
        %1463 = vrot.lane.b32.xlu0 %v1461, 126
        %v1464 = vpop.permute.xlu0 %1463
        %v1466 = vadd.f32 %v1458, %v1464
        %s1467 = sld [smem:[#allocation9 + $0x39]]
        %v1468 = vstv %s1467
        %v1469 = vmul.f32 %v1468, %v1445
        %1471 = vrot.lane.b32.xlu0 %v1469, 118
        %v1472 = vpop.permute.xlu0 %1471
        %v1474 = vadd.f32 %v1466, %v1472
        %s1475 = sld [smem:[#allocation9 + $0x3a]]
        %v1476 = vstv %s1475
        %v1477 = vmul.f32 %v1476, %v1445
        %1479 = vrot.lane.b32.xlu0 %v1477, 117
        %v1480 = vpop.permute.xlu0 %1479
        %v1482 = vadd.f32 %v1474, %v1480
        %s1483 = sld [smem:[#allocation9 + $0x3b]]
        %v1484 = vstv %s1483
        %v1485 = vmul.f32 %v1484, %v1445
        %1487 = vrot.lane.b32.xlu0 %v1485, 116
        %v1488 = vpop.permute.xlu0 %1487
        %v1490 = vadd.f32 %v1482, %v1488
        %s1491 = sld [smem:[#allocation9 + $0x3c]]
        %v1492 = vstv %s1491
        %v1493 = vmul.f32 %v1492, %v1445
        %1495 = vrot.lane.b32.xlu0 %v1493, 108
        %v1496 = vpop.permute.xlu0 %1495
        %v1498 = vadd.f32 %v1490, %v1496
        %s1499 = sld [smem:[#allocation9 + $0x3d]]
        %v1500 = vstv %s1499
        %v1501 = vmul.f32 %v1500, %v1445
        %1503 = vrot.lane.b32.xlu0 %v1501, 107
        %v1504 = vpop.permute.xlu0 %1503
        %v1506 = vadd.f32 %v1498, %v1504
        %s1507 = sld [smem:[#allocation9 + $0x3e]]
        %v1508 = vstv %s1507
        %v1509 = vmul.f32 %v1508, %v1445
        %1511 = vrot.lane.b32.xlu0 %v1509, 106
        %v1512 = vpop.permute.xlu0 %1511
        %v1514 = vadd.f32 %v1506, %v1512
        %s1515 = sld [smem:[#allocation9 + $0x3f]]
        %v1516 = vstv %s1515
        %v1517 = vmul.f32 %v1516, %v1445
        %v1518 = vmul.f32 %v1516, %v1446
        %v1521 = vrot.slane %v1517, 1
        %v1522 = vrot.slane %v1518, 1
        %v1523 = vsel %vm551, %v1521, %v1522
        %v1525 = vadd.f32 %v1514, %v1523
        %s1526 = sld [smem:[#allocation9 + $0x40]]
        %v1527 = vstv %s1526
        %v1528 = vmul.f32 %v1527, %v1445
        %v1529 = vmul.f32 %v1527, %v1446
        %v1532 = vrot.slane %v1528, 1
        %v1533 = vrot.slane %v1529, 1
        %v1534 = vsel %vm551, %v1532, %v1533
        %1535 = vrot.lane.b32.xlu0 %v1534, 127
        %v1536 = vpop.permute.xlu0 %1535
        %v1538 = vadd.f32 %v1525, %v1536
        %s1539 = sld [smem:[#allocation9 + $0x41]]
        %v1540 = vstv %s1539
        %v1541 = vmul.f32 %v1540, %v1445
        %v1542 = vmul.f32 %v1540, %v1446
        %v1545 = vrot.slane %v1541, 1
        %v1546 = vrot.slane %v1542, 1
        %v1547 = vsel %vm551, %v1545, %v1546
        %1548 = vrot.lane.b32.xlu0 %v1547, 126
        %v1549 = vpop.permute.xlu0 %1548
        %v1551 = vadd.f32 %v1538, %v1549
        %s1552 = sld [smem:[#allocation9 + $0x42]]
        %v1553 = vstv %s1552
        %v1554 = vmul.f32 %v1553, %v1445
        %v1555 = vmul.f32 %v1553, %v1446
        %v1558 = vrot.slane %v1554, 1
        %v1559 = vrot.slane %v1555, 1
        %v1560 = vsel %vm551, %v1558, %v1559
        %1561 = vrot.lane.b32.xlu0 %v1560, 118
        %v1562 = vpop.permute.xlu0 %1561
        %v1564 = vadd.f32 %v1551, %v1562
        %s1565 = sld [smem:[#allocation9 + $0x43]]
        %v1566 = vstv %s1565
        %v1567 = vmul.f32 %v1566, %v1445
        %v1568 = vmul.f32 %v1566, %v1446
        %v1571 = vrot.slane %v1567, 1
        %v1572 = vrot.slane %v1568, 1
        %v1573 = vsel %vm551, %v1571, %v1572
        %1574 = vrot.lane.b32.xlu0 %v1573, 117
        %v1575 = vpop.permute.xlu0 %1574
        %v1577 = vadd.f32 %v1564, %v1575
        %s1578 = sld [smem:[#allocation9 + $0x44]]
        %v1579 = vstv %s1578
        %v1580 = vmul.f32 %v1579, %v1445
        %v1581 = vmul.f32 %v1579, %v1446
        %v1584 = vrot.slane %v1580, 1
        %v1585 = vrot.slane %v1581, 1
        %v1586 = vsel %vm551, %v1584, %v1585
        %1587 = vrot.lane.b32.xlu0 %v1586, 116
        %v1588 = vpop.permute.xlu0 %1587
        %v1590 = vadd.f32 %v1577, %v1588
        %s1591 = sld [smem:[#allocation9 + $0x45]]
        %v1592 = vstv %s1591
        %v1593 = vmul.f32 %v1592, %v1445
        %v1594 = vmul.f32 %v1592, %v1446
        %v1597 = vrot.slane %v1593, 1
        %v1598 = vrot.slane %v1594, 1
        %v1599 = vsel %vm551, %v1597, %v1598
        %1600 = vrot.lane.b32.xlu0 %v1599, 108
        %v1601 = vpop.permute.xlu0 %1600
        %v1603 = vadd.f32 %v1590, %v1601
        %s1604 = sld [smem:[#allocation9 + $0x46]]
        %v1605 = vstv %s1604
        %v1606 = vmul.f32 %v1605, %v1445
        %v1607 = vmul.f32 %v1605, %v1446
        %v1610 = vrot.slane %v1606, 1
        %v1611 = vrot.slane %v1607, 1
        %v1612 = vsel %vm551, %v1610, %v1611
        %1613 = vrot.lane.b32.xlu0 %v1612, 107
        %v1614 = vpop.permute.xlu0 %1613
        %v1616 = vadd.f32 %v1603, %v1614
        %s1617 = sld [smem:[#allocation9 + $0x47]]
        %v1618 = vstv %s1617
        %v1619 = vmul.f32 %v1618, %v1445
        %v1620 = vmul.f32 %v1618, %v1446
        %v1623 = vrot.slane %v1619, 1
        %v1624 = vrot.slane %v1620, 1
        %v1625 = vsel %vm551, %v1623, %v1624
        %1626 = vrot.lane.b32.xlu0 %v1625, 106
        %v1627 = vpop.permute.xlu0 %1626
        %v1629 = vadd.f32 %v1616, %v1627
        %s1630 = sld [smem:[#allocation9 + $0x48]]
        %v1631 = vstv %s1630
        %v1632 = vmul.f32 %v1631, %v1445
        %v1633 = vmul.f32 %v1631, %v1446
        %v1636 = vrot.slane %v1632, 2
        %v1637 = vrot.slane %v1633, 2
        %v1638 = vsel %vm667, %v1636, %v1637
        %v1640 = vadd.f32 %v1629, %v1638
        %s1641 = sld [smem:[#allocation9 + $0x49]]
        %v1642 = vstv %s1641
        %v1643 = vmul.f32 %v1642, %v1445
        %v1644 = vmul.f32 %v1642, %v1446
        %v1647 = vrot.slane %v1643, 2
        %v1648 = vrot.slane %v1644, 2
        %v1649 = vsel %vm667, %v1647, %v1648
        %1650 = vrot.lane.b32.xlu0 %v1649, 127
        %v1651 = vpop.permute.xlu0 %1650
        %v1653 = vadd.f32 %v1640, %v1651
        %s1654 = sld [smem:[#allocation9 + $0x4a]]
        %v1655 = vstv %s1654
        %v1656 = vmul.f32 %v1655, %v1445
        %v1657 = vmul.f32 %v1655, %v1446
        %v1660 = vrot.slane %v1656, 2
        %v1661 = vrot.slane %v1657, 2
        %v1662 = vsel %vm667, %v1660, %v1661
        %1663 = vrot.lane.b32.xlu0 %v1662, 126
        %v1664 = vpop.permute.xlu0 %1663
        %v1666 = vadd.f32 %v1653, %v1664
        %s1667 = sld [smem:[#allocation9 + $0x4b]]
        %v1668 = vstv %s1667
        %v1669 = vmul.f32 %v1668, %v1445
        %v1670 = vmul.f32 %v1668, %v1446
        %v1673 = vrot.slane %v1669, 2
        %v1674 = vrot.slane %v1670, 2
        %v1675 = vsel %vm667, %v1673, %v1674
        %1676 = vrot.lane.b32.xlu0 %v1675, 118
        %v1677 = vpop.permute.xlu0 %1676
        %v1679 = vadd.f32 %v1666, %v1677
        %s1680 = sld [smem:[#allocation9 + $0x4c]]
        %v1681 = vstv %s1680
        %v1682 = vmul.f32 %v1681, %v1445
        %v1683 = vmul.f32 %v1681, %v1446
        %v1686 = vrot.slane %v1682, 2
        %v1687 = vrot.slane %v1683, 2
        %v1688 = vsel %vm667, %v1686, %v1687
        %1689 = vrot.lane.b32.xlu0 %v1688, 117
        %v1690 = vpop.permute.xlu0 %1689
        %v1692 = vadd.f32 %v1679, %v1690
        %s1693 = sld [smem:[#allocation9 + $0x4d]]
        %v1694 = vstv %s1693
        %v1695 = vmul.f32 %v1694, %v1445
        %v1696 = vmul.f32 %v1694, %v1446
        %v1699 = vrot.slane %v1695, 2
        %v1700 = vrot.slane %v1696, 2
        %v1701 = vsel %vm667, %v1699, %v1700
        %1702 = vrot.lane.b32.xlu0 %v1701, 116
        %v1703 = vpop.permute.xlu0 %1702
        %v1705 = vadd.f32 %v1692, %v1703
        %s1706 = sld [smem:[#allocation9 + $0x4e]]
        %v1707 = vstv %s1706
        %v1708 = vmul.f32 %v1707, %v1445
        %v1709 = vmul.f32 %v1707, %v1446
        %v1712 = vrot.slane %v1708, 2
        %v1713 = vrot.slane %v1709, 2
        %v1714 = vsel %vm667, %v1712, %v1713
        %1715 = vrot.lane.b32.xlu0 %v1714, 108
        %v1716 = vpop.permute.xlu0 %1715
        %v1718 = vadd.f32 %v1705, %v1716
        %s1719 = sld [smem:[#allocation9 + $0x4f]]
        %v1720 = vstv %s1719
        %v1721 = vmul.f32 %v1720, %v1445
        %v1722 = vmul.f32 %v1720, %v1446
        %v1725 = vrot.slane %v1721, 2
        %v1726 = vrot.slane %v1722, 2
        %v1727 = vsel %vm667, %v1725, %v1726
        %1728 = vrot.lane.b32.xlu0 %v1727, 107
        %v1729 = vpop.permute.xlu0 %1728
        %v1731 = vadd.f32 %v1718, %v1729
        %s1732 = sld [smem:[#allocation9 + $0x50]]
        %v1733 = vstv %s1732
        %v1734 = vmul.f32 %v1733, %v1445
        %v1735 = vmul.f32 %v1733, %v1446
        %v1738 = vrot.slane %v1734, 2
        %v1739 = vrot.slane %v1735, 2
        %v1740 = vsel %vm667, %v1738, %v1739
        %1741 = vrot.lane.b32.xlu0 %v1740, 106
        %v1742 = vpop.permute.xlu0 %1741
        %v1744 = vadd.f32 %v1731, %v1742
        %s1745 = sld [smem:[#allocation11 + $0x2]]
        %v1746 = vstv %s1745
        %v1747 = vmul.f32 %v1746, %v1744
        %s1748 = sld [smem:[#allocation12 + $0x2]]
        %v1749 = vstv %s1748
        %v1750 = vadd.f32 %v1747, %v1749
        %v1751 = vmax.f32 %v1750, 0.0
        %s1752 = sld [smem:[#allocation14]]
        %v1753 = vstv %s1752
        %v1754 = vmul.f32 %v1753, %v1123
        %s1755 = sld [smem:[#allocation14 + $0x1]]
        %v1756 = vstv %s1755
        %v1757 = vmul.f32 %v1756, %v1437
        %v1758 = vadd.f32 %v1754, %v1757
        %s1759 = sld [smem:[#allocation14 + $0x2]]
        %v1760 = vstv %s1759
        %v1761 = vmul.f32 %v1760, %v1751
        %v1762 = vadd.f32 %v1758, %v1761
        %s1763 = sld [smem:[#allocation14 + $0x3]]
        %v1764 = vstv %s1763
        %v1765 = vmul.f32 %v1764, %v807
        %v1766 = vadd.f32 %v1762, %v1765
        %s1767 = sld [smem:[#allocation15]]
        %v1768 = vstv %s1767
        %v1769 = vadd.f32 %v1766, %v1768
        %v1770 = vadd.f32 %v1769, %v779
        %v1771 = vmax.f32 %v1770, 0.0
        %vm1772 = vcmask 654336
        %1773 = vst.msk [vmem:[%s473] sm:$0xff] %vm1772, %v1771
        %s1774 = sld [smem:[#allocation14 + $0x4]]
        %v1775 = vstv %s1774
        %v1776 = vmul.f32 %v1775, %v1123
        %s1777 = sld [smem:[#allocation14 + $0x5]]
        %v1778 = vstv %s1777
        %v1779 = vmul.f32 %v1778, %v1437
        %v1780 = vadd.f32 %v1776, %v1779
        %s1781 = sld [smem:[#allocation14 + $0x6]]
        %v1782 = vstv %s1781
        %v1783 = vmul.f32 %v1782, %v1751
        %v1784 = vadd.f32 %v1780, %v1783
        %s1785 = sld [smem:[#allocation14 + $0x7]]
        %v1786 = vstv %s1785
        %v1787 = vmul.f32 %v1786, %v807
        %v1788 = vadd.f32 %v1784, %v1787
        %s1789 = sld [smem:[#allocation15 + $0x1]]
        %v1790 = vstv %s1789
        %v1791 = vadd.f32 %v1788, %v1790
        %v1792 = vadd.f32 %v1791, %v779
        %v1793 = vmax.f32 %v1792, 0.0
        %s1794 = scalar_lea.vmem %s473, 8
        %1795 = vst.msk [vmem:[%s1794] sm:$0xff] %vm1772, %v1793
        %s1796 = sld [smem:[#allocation14 + $0x8]]
        %v1797 = vstv %s1796
        %v1798 = vmul.f32 %v1797, %v1123
        %s1799 = sld [smem:[#allocation14 + $0x9]]
        %v1800 = vstv %s1799
        %v1801 = vmul.f32 %v1800, %v1437
        %v1802 = vadd.f32 %v1798, %v1801
        %s1803 = sld [smem:[#allocation14 + $0xa]]
        %v1804 = vstv %s1803
        %v1805 = vmul.f32 %v1804, %v1751
        %v1806 = vadd.f32 %v1802, %v1805
        %s1807 = sld [smem:[#allocation14 + $0xb]]
        %v1808 = vstv %s1807
        %v1809 = vmul.f32 %v1808, %v807
        %v1810 = vadd.f32 %v1806, %v1809
        %s1811 = sld [smem:[#allocation15 + $0x2]]
        %v1812 = vstv %s1811
        %v1813 = vadd.f32 %v1810, %v1812
        %v1814 = vadd.f32 %v1813, %v779
        %v1815 = vmax.f32 %v1814, 0.0
        %s1816 = scalar_lea.vmem %s473, 16
        %1817 = vst.msk [vmem:[%s1816] sm:$0xff] %vm1772, %v1815
        %s1818 = sld [smem:[#allocation14 + $0xc]]
        %v1819 = vstv %s1818
        %v1820 = vmul.f32 %v1819, %v1123
        %s1821 = sld [smem:[#allocation14 + $0xd]]
        %v1822 = vstv %s1821
        %v1823 = vmul.f32 %v1822, %v1437
        %v1824 = vadd.f32 %v1820, %v1823
        %s1825 = sld [smem:[#allocation14 + $0xe]]
        %v1826 = vstv %s1825
        %v1827 = vmul.f32 %v1826, %v1751
        %v1828 = vadd.f32 %v1824, %v1827
        %s1829 = sld [smem:[#allocation14 + $0xf]]
        %v1830 = vstv %s1829
        %v1831 = vmul.f32 %v1830, %v807
        %v1832 = vadd.f32 %v1828, %v1831
        %s1833 = sld [smem:[#allocation15 + $0x3]]
        %v1834 = vstv %s1833
        %v1835 = vadd.f32 %v1832, %v1834
        %v1836 = vadd.f32 %v1835, %v779
        %v1837 = vmax.f32 %v1836, 0.0
        %s1838 = scalar_lea.vmem %s473, 24
        %1839 = vst.msk [vmem:[%s1838] sm:$0xff] %vm1772, %v1837
        %s1840 = sld [smem:[#allocation14 + $0x10]]
        %v1841 = vstv %s1840
        %v1842 = vmul.f32 %v1841, %v1123
        %s1843 = sld [smem:[#allocation14 + $0x11]]
        %v1844 = vstv %s1843
        %v1845 = vmul.f32 %v1844, %v1437
        %v1846 = vadd.f32 %v1842, %v1845
        %s1847 = sld [smem:[#allocation14 + $0x12]]
        %v1848 = vstv %s1847
        %v1849 = vmul.f32 %v1848, %v1751
        %v1850 = vadd.f32 %v1846, %v1849
        %s1851 = sld [smem:[#allocation14 + $0x13]]
        %v1852 = vstv %s1851
        %v1853 = vmul.f32 %v1852, %v807
        %v1854 = vadd.f32 %v1850, %v1853
        %s1855 = sld [smem:[#allocation15 + $0x4]]
        %v1856 = vstv %s1855
        %v1857 = vadd.f32 %v1854, %v1856
        %v1858 = vadd.f32 %v1857, %v779
        %v1859 = vmax.f32 %v1858, 0.0
        %s1860 = scalar_lea.vmem %s473, 32
        %1861 = vst.msk [vmem:[%s1860] sm:$0xff] %vm1772, %v1859
        %s1862 = sld [smem:[#allocation14 + $0x14]]
        %v1863 = vstv %s1862
        %v1864 = vmul.f32 %v1863, %v1123
        %s1865 = sld [smem:[#allocation14 + $0x15]]
        %v1866 = vstv %s1865
        %v1867 = vmul.f32 %v1866, %v1437
        %v1868 = vadd.f32 %v1864, %v1867
        %s1869 = sld [smem:[#allocation14 + $0x16]]
        %v1870 = vstv %s1869
        %v1871 = vmul.f32 %v1870, %v1751
        %v1872 = vadd.f32 %v1868, %v1871
        %s1873 = sld [smem:[#allocation14 + $0x17]]
        %v1874 = vstv %s1873
        %v1875 = vmul.f32 %v1874, %v807
        %v1876 = vadd.f32 %v1872, %v1875
        %s1877 = sld [smem:[#allocation15 + $0x5]]
        %v1878 = vstv %s1877
        %v1879 = vadd.f32 %v1876, %v1878
        %v1880 = vadd.f32 %v1879, %v779
        %v1881 = vmax.f32 %v1880, 0.0
        %s1882 = scalar_lea.vmem %s473, 40
        %1883 = vst.msk [vmem:[%s1882] sm:$0xff] %vm1772, %v1881
        %s1884 = sld [smem:[#allocation14 + $0x18]]
        %v1885 = vstv %s1884
        %v1886 = vmul.f32 %v1885, %v1123
        %s1887 = sld [smem:[#allocation14 + $0x19]]
        %v1888 = vstv %s1887
        %v1889 = vmul.f32 %v1888, %v1437
        %v1890 = vadd.f32 %v1886, %v1889
        %s1891 = sld [smem:[#allocation14 + $0x1a]]
        %v1892 = vstv %s1891
        %v1893 = vmul.f32 %v1892, %v1751
        %v1894 = vadd.f32 %v1890, %v1893
        %s1895 = sld [smem:[#allocation14 + $0x1b]]
        %v1896 = vstv %s1895
        %v1897 = vmul.f32 %v1896, %v807
        %v1898 = vadd.f32 %v1894, %v1897
        %s1899 = sld [smem:[#allocation15 + $0x6]]
        %v1900 = vstv %s1899
        %v1901 = vadd.f32 %v1898, %v1900
        %v1902 = vadd.f32 %v1901, %v779
        %v1903 = vmax.f32 %v1902, 0.0
        %s1904 = scalar_lea.vmem %s473, 48
        %1905 = vst.msk [vmem:[%s1904] sm:$0xff] %vm1772, %v1903
        %s1906 = sld [smem:[#allocation14 + $0x1c]]
        %v1907 = vstv %s1906
        %v1908 = vmul.f32 %v1907, %v1123
        %s1909 = sld [smem:[#allocation14 + $0x1d]]
        %v1910 = vstv %s1909
        %v1911 = vmul.f32 %v1910, %v1437
        %v1912 = vadd.f32 %v1908, %v1911
        %s1913 = sld [smem:[#allocation14 + $0x1e]]
        %v1914 = vstv %s1913
        %v1915 = vmul.f32 %v1914, %v1751
        %v1916 = vadd.f32 %v1912, %v1915
        %s1917 = sld [smem:[#allocation14 + $0x1f]]
        %v1918 = vstv %s1917
        %v1919 = vmul.f32 %v1918, %v807
        %v1920 = vadd.f32 %v1916, %v1919
        %s1921 = sld [smem:[#allocation15 + $0x7]]
        %v1922 = vstv %s1921
        %v1923 = vadd.f32 %v1920, %v1922
        %v1924 = vadd.f32 %v1923, %v779
        %v1925 = vmax.f32 %v1924, 0.0
        %s1926 = scalar_lea.vmem %s473, 56
        %1927 = vst.msk [vmem:[%s1926] sm:$0xff] %vm1772, %v1925
        %s1928 = sld [smem:[#allocation14 + $0x20]]
        %v1929 = vstv %s1928
        %v1930 = vmul.f32 %v1929, %v1123
        %s1931 = sld [smem:[#allocation14 + $0x21]]
        %v1932 = vstv %s1931
        %v1933 = vmul.f32 %v1932, %v1437
        %v1934 = vadd.f32 %v1930, %v1933
        %s1935 = sld [smem:[#allocation14 + $0x22]]
        %v1936 = vstv %s1935
        %v1937 = vmul.f32 %v1936, %v1751
        %v1938 = vadd.f32 %v1934, %v1937
        %s1939 = sld [smem:[#allocation14 + $0x23]]
        %v1940 = vstv %s1939
        %v1941 = vmul.f32 %v1940, %v807
        %v1942 = vadd.f32 %v1938, %v1941
        %s1943 = sld [smem:[#allocation15 + $0x8]]
        %v1944 = vstv %s1943
        %v1945 = vadd.f32 %v1942, %v1944
        %v1946 = vadd.f32 %v1945, %v779
        %v1947 = vmax.f32 %v1946, 0.0
        %s1948 = scalar_lea.vmem %s473, 64
        %1949 = vst.msk [vmem:[%s1948] sm:$0xff] %vm1772, %v1947
        %s1950 = sld [smem:[#allocation14 + $0x24]]
        %v1951 = vstv %s1950
        %v1952 = vmul.f32 %v1951, %v1123
        %s1953 = sld [smem:[#allocation14 + $0x25]]
        %v1954 = vstv %s1953
        %v1955 = vmul.f32 %v1954, %v1437
        %v1956 = vadd.f32 %v1952, %v1955
        %s1957 = sld [smem:[#allocation14 + $0x26]]
        %v1958 = vstv %s1957
        %v1959 = vmul.f32 %v1958, %v1751
        %v1960 = vadd.f32 %v1956, %v1959
        %s1961 = sld [smem:[#allocation14 + $0x27]]
        %v1962 = vstv %s1961
        %v1963 = vmul.f32 %v1962, %v807
        %v1964 = vadd.f32 %v1960, %v1963
        %s1965 = sld [smem:[#allocation15 + $0x9]]
        %v1966 = vstv %s1965
        %v1967 = vadd.f32 %v1964, %v1966
        %v1968 = vadd.f32 %v1967, %v779
        %v1969 = vmax.f32 %v1968, 0.0
        %s1970 = scalar_lea.vmem %s473, 72
        %1971 = vst.msk [vmem:[%s1970] sm:$0xff] %vm1772, %v1969
        %s1972 = sld [smem:[#allocation14 + $0x28]]
        %v1973 = vstv %s1972
        %v1974 = vmul.f32 %v1973, %v1123
        %s1975 = sld [smem:[#allocation14 + $0x29]]
        %v1976 = vstv %s1975
        %v1977 = vmul.f32 %v1976, %v1437
        %v1978 = vadd.f32 %v1974, %v1977
        %s1979 = sld [smem:[#allocation14 + $0x2a]]
        %v1980 = vstv %s1979
        %v1981 = vmul.f32 %v1980, %v1751
        %v1982 = vadd.f32 %v1978, %v1981
        %s1983 = sld [smem:[#allocation14 + $0x2b]]
        %v1984 = vstv %s1983
        %v1985 = vmul.f32 %v1984, %v807
        %v1986 = vadd.f32 %v1982, %v1985
        %s1987 = sld [smem:[#allocation15 + $0xa]]
        %v1988 = vstv %s1987
        %v1989 = vadd.f32 %v1986, %v1988
        %v1990 = vadd.f32 %v1989, %v779
        %v1991 = vmax.f32 %v1990, 0.0
        %s1992 = scalar_lea.vmem %s473, 80
        %1993 = vst.msk [vmem:[%s1992] sm:$0xff] %vm1772, %v1991
        %s1994 = sld [smem:[#allocation14 + $0x2c]]
        %v1995 = vstv %s1994
        %v1996 = vmul.f32 %v1995, %v1123
        %s1997 = sld [smem:[#allocation14 + $0x2d]]
        %v1998 = vstv %s1997
        %v1999 = vmul.f32 %v1998, %v1437
        %v2000 = vadd.f32 %v1996, %v1999
        %s2001 = sld [smem:[#allocation14 + $0x2e]]
        %v2002 = vstv %s2001
        %v2003 = vmul.f32 %v2002, %v1751
        %v2004 = vadd.f32 %v2000, %v2003
        %s2005 = sld [smem:[#allocation14 + $0x2f]]
        %v2006 = vstv %s2005
        %v2007 = vmul.f32 %v2006, %v807
        %v2008 = vadd.f32 %v2004, %v2007
        %s2009 = sld [smem:[#allocation15 + $0xb]]
        %v2010 = vstv %s2009
        %v2011 = vadd.f32 %v2008, %v2010
        %v2012 = vadd.f32 %v2011, %v779
        %v2013 = vmax.f32 %v2012, 0.0
        %s2014 = scalar_lea.vmem %s473, 88
        %2015 = vst.msk [vmem:[%s2014] sm:$0xff] %vm1772, %v2013
        %p2016 = scmp.lt.s32.totalorder %s28, 1
        %s2017 = scalar_select %p2016, %s28, 1
        %s2018 = smul.addr %s2017, 12
        %s2019 = smul.addr %s2018, 8
        %s2020 = scalar_lea.vmem %s11, %s2019
        // Predicated region
        $region97: #{forward.2} parent=63 // pred_check
          %p2021 = pneg %p282
        $region98: #{forward.2} parent=63 // pred_check_branch
          %2023 = sbr.rel (%p2021) target = $region100
        $region99: #{forward.2} parent=63 // pred_region
          _
        $region100: #{forward.2} parent=63 // pred_fallthru
          _
      $region64: #{forward.2} parent=5 // pred_fallthru
        _
      %p2024 = scmp.le.s32.totalorder 2, %s23
      // Predicated region
      $region101: #{forward.2} parent=5 // pred_check
        %p2025 = pneg %p2024
      $region102: #{forward.2} parent=5 // pred_check_branch
        %2027 = sbr.rel (%p2025) target = $region104
      $region103: #{forward.2} parent=5 // pred_region
        %s2028 = ssub.s32 %s23, 2
        // Predicated region
        $region105: #{forward.2} parent=103 // pred_check
          %p2029 = pneg %p288
        $region106: #{forward.2} parent=103 // pred_check_branch
          %2031 = sbr.rel (%p2029) target = $region108
        $region107: #{forward.2} parent=103 // pred_region
          %p2032 = scmp.lt.s32.totalorder %s29, 1
          %s2033 = scalar_select %p2032, %s29, 1
          %s2034 = smul.addr %s2033, 12
          %s2035 = smul.addr %s2034, 8
          %s2036 = scalar_lea.vmem %s11, %s2035
        $region108: #{forward.2} parent=103 // pred_fallthru
          _
      $region104: #{forward.2} parent=5 // pred_fallthru
        _
    $region6: #{forward.2} parent=1 // loop_footer
      %s27 = sadd.s32 1, %s23
    $region7: #{forward.2} parent=1 // loop_footer_branch
      %22 = sbr.rel target = $region3
    $region8: #{forward.2} parent=1 // loop_exit
      _
    %2037 = vsyncpa [#allocation5], 1
    %s2038 = scalar_lea.sflag [#allocation5], 1
    %2039 = vsyncpa %s2038, 1
    %2040 = vsyncpa [#allocation7], 1
    %2041 = vsyncpa [#allocation10], 1
    %2042 = vsyncpa [#allocation13], 1
    %2043 = vsyncpa [#allocation16], 1

// kernel: forward.3
$region0: #{forward.3}
  #allocation0 [shape = 'u32[]', space=smem, size = 0x4, offset = 0x4, fixed_abs, tag = 'smem constant byte address 0x4 - core index']
  #allocation1 [shape = 'u32[144,128]{1,0:T(1,128)}', space=vmem, size = 0x12000, scoped, tag = 'internal scratch']
  #allocation2 [shape = 'f32[1,1]{1,0:T(1,128)S(1)}', space=vmem, size = 0x200, scoped, tag = 'scoped memory for forward.3']
  %s0 = inlined_call_operand.vmem [shape: f32[2,6144], index: 0, kind: input, shape index: {}]
  %s1 = inlined_call_operand.vmem [shape: f32[6144,50], index: 1, kind: input, shape index: {}]
  %s2 = inlined_call_operand.vmem [shape: f32[1,50], index: 2, kind: input, shape index: {}]
  %s3 = inlined_call_operand.vmem [shape: f32[50,1], index: 3, kind: input, shape index: {}]
  %s4 = inlined_call_operand.<no memory space> [shape: f32[1,1], index: 4, kind: input, shape index: {}]
  %s5 = inlined_call_operand.vmem [shape: f32[2,1], index: 5, kind: output, shape index: {}]
  %s6 = sld [smem:[#allocation0]]
  $region30: #{forward.3} parent=0
    _
  %s8 = ssub.s32 1, %s6
  %s9 = scalar_select 0, %s8, %s6
  %v10 = vstv %s4
  %11 = vst [vmem:[#allocation2] sm:$0x1] %v10
  // Predicated region
  $region2: #{forward.3} parent=0 // pred_check
    _
  $region3: #{forward.3} parent=0 // pred_check_branch
    %13 = sbr.rel (0) target = $region5
  $region4: #{forward.3} parent=0 // pred_region
    _
  $region5: #{forward.3} parent=0 // pred_fallthru
    _
  // Predicated region
  $region6: #{forward.3} parent=0 // pred_check
    _
  $region7: #{forward.3} parent=0 // pred_check_branch
    %15 = sbr.rel (0) target = $region9
  $region8: #{forward.3} parent=0 // pred_region
    _
  $region9: #{forward.3} parent=0 // pred_fallthru
    _
  // Predicated region
  $region10: #{forward.3} parent=0 // pred_check
    _
  $region11: #{forward.3} parent=0 // pred_check_branch
    %17 = sbr.rel (0) target = $region13
  $region12: #{forward.3} parent=0 // pred_region
    _
  $region13: #{forward.3} parent=0 // pred_fallthru
    _
  // Predicated region
  $region14: #{forward.3} parent=0 // pred_check
    _
  $region15: #{forward.3} parent=0 // pred_check_branch
    %19 = sbr.rel (0) target = $region17
  $region16: #{forward.3} parent=0 // pred_region
    _
  $region17: #{forward.3} parent=0 // pred_fallthru
    _
  // Predicated region
  $region18: #{forward.3} parent=0 // pred_check
    _
  $region19: #{forward.3} parent=0 // pred_check_branch
    %21 = sbr.rel (0) target = $region21
  $region20: #{forward.3} parent=0 // pred_region
    _
  $region21: #{forward.3} parent=0 // pred_fallthru
    _
  %v22 = vld [vmem:[%s0] sm:$0xff]
  %v23 = vld [vmem:[%s0 + $0x8] sm:$0xff]
  %v24 = vld [vmem:[%s0 + $0x10] sm:$0xff]
  %v25 = vld [vmem:[%s0 + $0x18] sm:$0xff]
  %v26 = vld [vmem:[%s0 + $0x20] sm:$0xff]
  %v27 = vld [vmem:[%s0 + $0x28] sm:$0xff]
  %v28 = vld [vmem:[%s0 + $0x30] sm:$0xff]
  %v29 = vld [vmem:[%s0 + $0x38] sm:$0xff]
  %v30 = vld [vmem:[%s0 + $0x40] sm:$0xff]
  %v31 = vld [vmem:[%s0 + $0x48] sm:$0xff]
  %v32 = vld [vmem:[%s0 + $0x50] sm:$0xff]
  %v33 = vld [vmem:[%s0 + $0x58] sm:$0xff]
  %v34 = vld [vmem:[%s1] sm:$0xff]
  %v35 = vld [vmem:[%s1 + $0x8] sm:$0xff]
  %v36 = vld [vmem:[%s1 + $0x10] sm:$0xff]
  %v37 = vld [vmem:[%s1 + $0x18] sm:$0xff]
  %v38 = vld [vmem:[%s1 + $0x20] sm:$0xff]
  %v39 = vld [vmem:[%s1 + $0x28] sm:$0xff]
  %v40 = vld [vmem:[%s1 + $0x30] sm:$0xff]
  %v41 = vld [vmem:[%s1 + $0x38] sm:$0xff]
  %v42 = vld [vmem:[%s1 + $0x40] sm:$0xff]
  %v43 = vld [vmem:[%s1 + $0x48] sm:$0xff]
  %v44 = vld [vmem:[%s1 + $0x50] sm:$0xff]
  %v45 = vld [vmem:[%s1 + $0x58] sm:$0xff]
  %v46 = vld [vmem:[%s1 + $0x60] sm:$0xff]
  %v47 = vld [vmem:[%s1 + $0x68] sm:$0xff]
  %v48 = vld [vmem:[%s1 + $0x70] sm:$0xff]
  %v49 = vld [vmem:[%s1 + $0x78] sm:$0xff]
  %v50 = vld [vmem:[%s1 + $0x80] sm:$0xff]
  %v51 = vld [vmem:[%s1 + $0x88] sm:$0xff]
  %v52 = vld [vmem:[%s1 + $0x90] sm:$0xff]
  %v53 = vld [vmem:[%s1 + $0x98] sm:$0xff]
  %v54 = vld [vmem:[%s1 + $0xa0] sm:$0xff]
  %v55 = vld [vmem:[%s1 + $0xa8] sm:$0xff]
  %v56 = vld [vmem:[%s1 + $0xb0] sm:$0xff]
  %v57 = vld [vmem:[%s1 + $0xb8] sm:$0xff]
  %v58 = vld [vmem:[%s1 + $0xc0] sm:$0xff]
  %v59 = vld [vmem:[%s1 + $0xc8] sm:$0xff]
  %v60 = vld [vmem:[%s1 + $0xd0] sm:$0xff]
  %v61 = vld [vmem:[%s1 + $0xd8] sm:$0xff]
  %v62 = vld [vmem:[%s1 + $0xe0] sm:$0xff]
  %v63 = vld [vmem:[%s1 + $0xe8] sm:$0xff]
  %v64 = vld [vmem:[%s1 + $0xf0] sm:$0xff]
  %v65 = vld [vmem:[%s1 + $0xf8] sm:$0xff]
  %v66 = vld [vmem:[%s1 + $0x100] sm:$0xff]
  %v67 = vld [vmem:[%s1 + $0x108] sm:$0xff]
  %v68 = vld [vmem:[%s1 + $0x110] sm:$0xff]
  %v69 = vld [vmem:[%s1 + $0x118] sm:$0xff]
  %v70 = vld [vmem:[%s1 + $0x120] sm:$0xff]
  %v71 = vld [vmem:[%s1 + $0x128] sm:$0xff]
  %v72 = vld [vmem:[%s1 + $0x130] sm:$0xff]
  %v73 = vld [vmem:[%s1 + $0x138] sm:$0xff]
  %v74 = vld [vmem:[%s1 + $0x140] sm:$0xff]
  %v75 = vld [vmem:[%s1 + $0x148] sm:$0xff]
  %v76 = vld [vmem:[%s1 + $0x150] sm:$0xff]
  %v77 = vld [vmem:[%s1 + $0x158] sm:$0xff]
  %v78 = vld [vmem:[%s1 + $0x160] sm:$0xff]
  %v79 = vld [vmem:[%s1 + $0x168] sm:$0xff]
  %v80 = vld [vmem:[%s1 + $0x170] sm:$0xff]
  %v81 = vld [vmem:[%s1 + $0x178] sm:$0xff]
  %v82 = vld [vmem:[%s1 + $0x180] sm:$0xff]
  %v83 = vld [vmem:[%s1 + $0x188] sm:$0xff]
  %v84 = vld [vmem:[%s1 + $0x190] sm:$0xff]
  %v85 = vld [vmem:[%s1 + $0x198] sm:$0xff]
  %v86 = vld [vmem:[%s1 + $0x1a0] sm:$0xff]
  %v87 = vld [vmem:[%s1 + $0x1a8] sm:$0xff]
  %v88 = vld [vmem:[%s1 + $0x1b0] sm:$0xff]
  %v89 = vld [vmem:[%s1 + $0x1b8] sm:$0xff]
  %v90 = vld [vmem:[%s1 + $0x1c0] sm:$0xff]
  %v91 = vld [vmem:[%s1 + $0x1c8] sm:$0xff]
  %v92 = vld [vmem:[%s1 + $0x1d0] sm:$0xff]
  %v93 = vld [vmem:[%s1 + $0x1d8] sm:$0xff]
  %v94 = vld [vmem:[%s1 + $0x1e0] sm:$0xff]
  %v95 = vld [vmem:[%s1 + $0x1e8] sm:$0xff]
  %v96 = vld [vmem:[%s1 + $0x1f0] sm:$0xff]
  %v97 = vld [vmem:[%s1 + $0x1f8] sm:$0xff]
  %v98 = vld [vmem:[%s1 + $0x200] sm:$0xff]
  %v99 = vld [vmem:[%s1 + $0x208] sm:$0xff]
  %v100 = vld [vmem:[%s1 + $0x210] sm:$0xff]
  %v101 = vld [vmem:[%s1 + $0x218] sm:$0xff]
  %v102 = vld [vmem:[%s1 + $0x220] sm:$0xff]
  %v103 = vld [vmem:[%s1 + $0x228] sm:$0xff]
  %v104 = vld [vmem:[%s1 + $0x230] sm:$0xff]
  %v105 = vld [vmem:[%s1 + $0x238] sm:$0xff]
  %v106 = vld [vmem:[%s1 + $0x240] sm:$0xff]
  %v107 = vld [vmem:[%s1 + $0x248] sm:$0xff]
  %v108 = vld [vmem:[%s1 + $0x250] sm:$0xff]
  %v109 = vld [vmem:[%s1 + $0x258] sm:$0xff]
  %v110 = vld [vmem:[%s1 + $0x260] sm:$0xff]
  %v111 = vld [vmem:[%s1 + $0x268] sm:$0xff]
  %v112 = vld [vmem:[%s1 + $0x270] sm:$0xff]
  %v113 = vld [vmem:[%s1 + $0x278] sm:$0xff]
  %v114 = vld [vmem:[%s1 + $0x280] sm:$0xff]
  %v115 = vld [vmem:[%s1 + $0x288] sm:$0xff]
  %v116 = vld [vmem:[%s1 + $0x290] sm:$0xff]
  %v117 = vld [vmem:[%s1 + $0x298] sm:$0xff]
  %v118 = vld [vmem:[%s1 + $0x2a0] sm:$0xff]
  %v119 = vld [vmem:[%s1 + $0x2a8] sm:$0xff]
  %v120 = vld [vmem:[%s1 + $0x2b0] sm:$0xff]
  %v121 = vld [vmem:[%s1 + $0x2b8] sm:$0xff]
  %v122 = vld [vmem:[%s1 + $0x2c0] sm:$0xff]
  %v123 = vld [vmem:[%s1 + $0x2c8] sm:$0xff]
  %v124 = vld [vmem:[%s1 + $0x2d0] sm:$0xff]
  %v125 = vld [vmem:[%s1 + $0x2d8] sm:$0xff]
  %v126 = vld [vmem:[%s1 + $0x2e0] sm:$0xff]
  %v127 = vld [vmem:[%s1 + $0x2e8] sm:$0xff]
  %v128 = vld [vmem:[%s1 + $0x2f0] sm:$0xff]
  %v129 = vld [vmem:[%s1 + $0x2f8] sm:$0xff]
  %v130 = vld [vmem:[%s1 + $0x300] sm:$0xff]
  %v131 = vld [vmem:[%s1 + $0x308] sm:$0xff]
  %v132 = vld [vmem:[%s1 + $0x310] sm:$0xff]
  %v133 = vld [vmem:[%s1 + $0x318] sm:$0xff]
  %v134 = vld [vmem:[%s1 + $0x320] sm:$0xff]
  %v135 = vld [vmem:[%s1 + $0x328] sm:$0xff]
  %v136 = vld [vmem:[%s1 + $0x330] sm:$0xff]
  %v137 = vld [vmem:[%s1 + $0x338] sm:$0xff]
  %v138 = vld [vmem:[%s1 + $0x340] sm:$0xff]
  %v139 = vld [vmem:[%s1 + $0x348] sm:$0xff]
  %v140 = vld [vmem:[%s1 + $0x350] sm:$0xff]
  %v141 = vld [vmem:[%s1 + $0x358] sm:$0xff]
  %v142 = vld [vmem:[%s1 + $0x360] sm:$0xff]
  %v143 = vld [vmem:[%s1 + $0x368] sm:$0xff]
  %v144 = vld [vmem:[%s1 + $0x370] sm:$0xff]
  %v145 = vld [vmem:[%s1 + $0x378] sm:$0xff]
  %v146 = vld [vmem:[%s1 + $0x380] sm:$0xff]
  %v147 = vld [vmem:[%s1 + $0x388] sm:$0xff]
  %v148 = vld [vmem:[%s1 + $0x390] sm:$0xff]
  %v149 = vld [vmem:[%s1 + $0x398] sm:$0xff]
  %v150 = vld [vmem:[%s1 + $0x3a0] sm:$0xff]
  %v151 = vld [vmem:[%s1 + $0x3a8] sm:$0xff]
  %v152 = vld [vmem:[%s1 + $0x3b0] sm:$0xff]
  %v153 = vld [vmem:[%s1 + $0x3b8] sm:$0xff]
  %v154 = vld [vmem:[%s1 + $0x3c0] sm:$0xff]
  %v155 = vld [vmem:[%s1 + $0x3c8] sm:$0xff]
  %v156 = vld [vmem:[%s1 + $0x3d0] sm:$0xff]
  %v157 = vld [vmem:[%s1 + $0x3d8] sm:$0xff]
  %v158 = vld [vmem:[%s1 + $0x3e0] sm:$0xff]
  %v159 = vld [vmem:[%s1 + $0x3e8] sm:$0xff]
  %v160 = vld [vmem:[%s1 + $0x3f0] sm:$0xff]
  %v161 = vld [vmem:[%s1 + $0x3f8] sm:$0xff]
  %v162 = vld [vmem:[%s1 + $0x400] sm:$0xff]
  %v163 = vld [vmem:[%s1 + $0x408] sm:$0xff]
  %v164 = vld [vmem:[%s1 + $0x410] sm:$0xff]
  %v165 = vld [vmem:[%s1 + $0x418] sm:$0xff]
  %v166 = vld [vmem:[%s1 + $0x420] sm:$0xff]
  %v167 = vld [vmem:[%s1 + $0x428] sm:$0xff]
  %v168 = vld [vmem:[%s1 + $0x430] sm:$0xff]
  %v169 = vld [vmem:[%s1 + $0x438] sm:$0xff]
  %v170 = vld [vmem:[%s1 + $0x440] sm:$0xff]
  %v171 = vld [vmem:[%s1 + $0x448] sm:$0xff]
  %v172 = vld [vmem:[%s1 + $0x450] sm:$0xff]
  %v173 = vld [vmem:[%s1 + $0x458] sm:$0xff]
  %v174 = vld [vmem:[%s1 + $0x460] sm:$0xff]
  %v175 = vld [vmem:[%s1 + $0x468] sm:$0xff]
  %v176 = vld [vmem:[%s1 + $0x470] sm:$0xff]
  %v177 = vld [vmem:[%s1 + $0x478] sm:$0xff]
  %v178 = vld [vmem:[%s1 + $0x480] sm:$0xff]
  %v179 = vld [vmem:[%s1 + $0x488] sm:$0xff]
  %v180 = vld [vmem:[%s1 + $0x490] sm:$0xff]
  %v181 = vld [vmem:[%s1 + $0x498] sm:$0xff]
  %v182 = vld [vmem:[%s1 + $0x4a0] sm:$0xff]
  %v183 = vld [vmem:[%s1 + $0x4a8] sm:$0xff]
  %v184 = vld [vmem:[%s1 + $0x4b0] sm:$0xff]
  %v185 = vld [vmem:[%s1 + $0x4b8] sm:$0xff]
  %v186 = vld [vmem:[%s1 + $0x4c0] sm:$0xff]
  %v187 = vld [vmem:[%s1 + $0x4c8] sm:$0xff]
  %v188 = vld [vmem:[%s1 + $0x4d0] sm:$0xff]
  %v189 = vld [vmem:[%s1 + $0x4d8] sm:$0xff]
  %v190 = vld [vmem:[%s1 + $0x4e0] sm:$0xff]
  %v191 = vld [vmem:[%s1 + $0x4e8] sm:$0xff]
  %v192 = vld [vmem:[%s1 + $0x4f0] sm:$0xff]
  %v193 = vld [vmem:[%s1 + $0x4f8] sm:$0xff]
  %v194 = vld [vmem:[%s1 + $0x500] sm:$0xff]
  %v195 = vld [vmem:[%s1 + $0x508] sm:$0xff]
  %v196 = vld [vmem:[%s1 + $0x510] sm:$0xff]
  %v197 = vld [vmem:[%s1 + $0x518] sm:$0xff]
  %v198 = vld [vmem:[%s1 + $0x520] sm:$0xff]
  %v199 = vld [vmem:[%s1 + $0x528] sm:$0xff]
  %v200 = vld [vmem:[%s1 + $0x530] sm:$0xff]
  %v201 = vld [vmem:[%s1 + $0x538] sm:$0xff]
  %v202 = vld [vmem:[%s1 + $0x540] sm:$0xff]
  %v203 = vld [vmem:[%s1 + $0x548] sm:$0xff]
  %v204 = vld [vmem:[%s1 + $0x550] sm:$0xff]
  %v205 = vld [vmem:[%s1 + $0x558] sm:$0xff]
  %v206 = vld [vmem:[%s1 + $0x560] sm:$0xff]
  %v207 = vld [vmem:[%s1 + $0x568] sm:$0xff]
  %v208 = vld [vmem:[%s1 + $0x570] sm:$0xff]
  %v209 = vld [vmem:[%s1 + $0x578] sm:$0xff]
  %v210 = vld [vmem:[%s1 + $0x580] sm:$0xff]
  %v211 = vld [vmem:[%s1 + $0x588] sm:$0xff]
  %v212 = vld [vmem:[%s1 + $0x590] sm:$0xff]
  %v213 = vld [vmem:[%s1 + $0x598] sm:$0xff]
  %v214 = vld [vmem:[%s1 + $0x5a0] sm:$0xff]
  %v215 = vld [vmem:[%s1 + $0x5a8] sm:$0xff]
  %v216 = vld [vmem:[%s1 + $0x5b0] sm:$0xff]
  %v217 = vld [vmem:[%s1 + $0x5b8] sm:$0xff]
  %v218 = vld [vmem:[%s1 + $0x5c0] sm:$0xff]
  %v219 = vld [vmem:[%s1 + $0x5c8] sm:$0xff]
  %v220 = vld [vmem:[%s1 + $0x5d0] sm:$0xff]
  %v221 = vld [vmem:[%s1 + $0x5d8] sm:$0xff]
  %v222 = vld [vmem:[%s1 + $0x5e0] sm:$0xff]
  %v223 = vld [vmem:[%s1 + $0x5e8] sm:$0xff]
  %v224 = vld [vmem:[%s1 + $0x5f0] sm:$0xff]
  %v225 = vld [vmem:[%s1 + $0x5f8] sm:$0xff]
  %v226 = vld [vmem:[%s1 + $0x600] sm:$0xff]
  %v227 = vld [vmem:[%s1 + $0x608] sm:$0xff]
  %v228 = vld [vmem:[%s1 + $0x610] sm:$0xff]
  %v229 = vld [vmem:[%s1 + $0x618] sm:$0xff]
  %v230 = vld [vmem:[%s1 + $0x620] sm:$0xff]
  %v231 = vld [vmem:[%s1 + $0x628] sm:$0xff]
  %v232 = vld [vmem:[%s1 + $0x630] sm:$0xff]
  %v233 = vld [vmem:[%s1 + $0x638] sm:$0xff]
  %v234 = vld [vmem:[%s1 + $0x640] sm:$0xff]
  %v235 = vld [vmem:[%s1 + $0x648] sm:$0xff]
  %v236 = vld [vmem:[%s1 + $0x650] sm:$0xff]
  %v237 = vld [vmem:[%s1 + $0x658] sm:$0xff]
  %v238 = vld [vmem:[%s1 + $0x660] sm:$0xff]
  %v239 = vld [vmem:[%s1 + $0x668] sm:$0xff]
  %v240 = vld [vmem:[%s1 + $0x670] sm:$0xff]
  %v241 = vld [vmem:[%s1 + $0x678] sm:$0xff]
  %v242 = vld [vmem:[%s1 + $0x680] sm:$0xff]
  %v243 = vld [vmem:[%s1 + $0x688] sm:$0xff]
  %v244 = vld [vmem:[%s1 + $0x690] sm:$0xff]
  %v245 = vld [vmem:[%s1 + $0x698] sm:$0xff]
  %v246 = vld [vmem:[%s1 + $0x6a0] sm:$0xff]
  %v247 = vld [vmem:[%s1 + $0x6a8] sm:$0xff]
  %v248 = vld [vmem:[%s1 + $0x6b0] sm:$0xff]
  %v249 = vld [vmem:[%s1 + $0x6b8] sm:$0xff]
  %v250 = vld [vmem:[%s1 + $0x6c0] sm:$0xff]
  %v251 = vld [vmem:[%s1 + $0x6c8] sm:$0xff]
  %v252 = vld [vmem:[%s1 + $0x6d0] sm:$0xff]
  %v253 = vld [vmem:[%s1 + $0x6d8] sm:$0xff]
  %v254 = vld [vmem:[%s1 + $0x6e0] sm:$0xff]
  %v255 = vld [vmem:[%s1 + $0x6e8] sm:$0xff]
  %v256 = vld [vmem:[%s1 + $0x6f0] sm:$0xff]
  %v257 = vld [vmem:[%s1 + $0x6f8] sm:$0xff]
  %v258 = vld [vmem:[%s1 + $0x700] sm:$0xff]
  %v259 = vld [vmem:[%s1 + $0x708] sm:$0xff]
  %v260 = vld [vmem:[%s1 + $0x710] sm:$0xff]
  %v261 = vld [vmem:[%s1 + $0x718] sm:$0xff]
  %v262 = vld [vmem:[%s1 + $0x720] sm:$0xff]
  %v263 = vld [vmem:[%s1 + $0x728] sm:$0xff]
  %v264 = vld [vmem:[%s1 + $0x730] sm:$0xff]
  %v265 = vld [vmem:[%s1 + $0x738] sm:$0xff]
  %v266 = vld [vmem:[%s1 + $0x740] sm:$0xff]
  %v267 = vld [vmem:[%s1 + $0x748] sm:$0xff]
  %v268 = vld [vmem:[%s1 + $0x750] sm:$0xff]
  %v269 = vld [vmem:[%s1 + $0x758] sm:$0xff]
  %v270 = vld [vmem:[%s1 + $0x760] sm:$0xff]
  %v271 = vld [vmem:[%s1 + $0x768] sm:$0xff]
  %v272 = vld [vmem:[%s1 + $0x770] sm:$0xff]
  %v273 = vld [vmem:[%s1 + $0x778] sm:$0xff]
  %v274 = vld [vmem:[%s1 + $0x780] sm:$0xff]
  %v275 = vld [vmem:[%s1 + $0x788] sm:$0xff]
  %v276 = vld [vmem:[%s1 + $0x790] sm:$0xff]
  %v277 = vld [vmem:[%s1 + $0x798] sm:$0xff]
  %v278 = vld [vmem:[%s1 + $0x7a0] sm:$0xff]
  %v279 = vld [vmem:[%s1 + $0x7a8] sm:$0xff]
  %v280 = vld [vmem:[%s1 + $0x7b0] sm:$0xff]
  %v281 = vld [vmem:[%s1 + $0x7b8] sm:$0xff]
  %v282 = vld [vmem:[%s1 + $0x7c0] sm:$0xff]
  %v283 = vld [vmem:[%s1 + $0x7c8] sm:$0xff]
  %v284 = vld [vmem:[%s1 + $0x7d0] sm:$0xff]
  %v285 = vld [vmem:[%s1 + $0x7d8] sm:$0xff]
  %v286 = vld [vmem:[%s1 + $0x7e0] sm:$0xff]
  %v287 = vld [vmem:[%s1 + $0x7e8] sm:$0xff]
  %v288 = vld [vmem:[%s1 + $0x7f0] sm:$0xff]
  %v289 = vld [vmem:[%s1 + $0x7f8] sm:$0xff]
  %v290 = vld [vmem:[%s1 + $0x800] sm:$0xff]
  %v291 = vld [vmem:[%s1 + $0x808] sm:$0xff]
  %v292 = vld [vmem:[%s1 + $0x810] sm:$0xff]
  %v293 = vld [vmem:[%s1 + $0x818] sm:$0xff]
  %v294 = vld [vmem:[%s1 + $0x820] sm:$0xff]
  %v295 = vld [vmem:[%s1 + $0x828] sm:$0xff]
  %v296 = vld [vmem:[%s1 + $0x830] sm:$0xff]
  %v297 = vld [vmem:[%s1 + $0x838] sm:$0xff]
  %v298 = vld [vmem:[%s1 + $0x840] sm:$0xff]
  %v299 = vld [vmem:[%s1 + $0x848] sm:$0xff]
  %v300 = vld [vmem:[%s1 + $0x850] sm:$0xff]
  %v301 = vld [vmem:[%s1 + $0x858] sm:$0xff]
  %v302 = vld [vmem:[%s1 + $0x860] sm:$0xff]
  %v303 = vld [vmem:[%s1 + $0x868] sm:$0xff]
  %v304 = vld [vmem:[%s1 + $0x870] sm:$0xff]
  %v305 = vld [vmem:[%s1 + $0x878] sm:$0xff]
  %v306 = vld [vmem:[%s1 + $0x880] sm:$0xff]
  %v307 = vld [vmem:[%s1 + $0x888] sm:$0xff]
  %v308 = vld [vmem:[%s1 + $0x890] sm:$0xff]
  %v309 = vld [vmem:[%s1 + $0x898] sm:$0xff]
  %v310 = vld [vmem:[%s1 + $0x8a0] sm:$0xff]
  %v311 = vld [vmem:[%s1 + $0x8a8] sm:$0xff]
  %v312 = vld [vmem:[%s1 + $0x8b0] sm:$0xff]
  %v313 = vld [vmem:[%s1 + $0x8b8] sm:$0xff]
  %v314 = vld [vmem:[%s1 + $0x8c0] sm:$0xff]
  %v315 = vld [vmem:[%s1 + $0x8c8] sm:$0xff]
  %v316 = vld [vmem:[%s1 + $0x8d0] sm:$0xff]
  %v317 = vld [vmem:[%s1 + $0x8d8] sm:$0xff]
  %v318 = vld [vmem:[%s1 + $0x8e0] sm:$0xff]
  %v319 = vld [vmem:[%s1 + $0x8e8] sm:$0xff]
  %v320 = vld [vmem:[%s1 + $0x8f0] sm:$0xff]
  %v321 = vld [vmem:[%s1 + $0x8f8] sm:$0xff]
  %v322 = vld [vmem:[%s1 + $0x900] sm:$0xff]
  %v323 = vld [vmem:[%s1 + $0x908] sm:$0xff]
  %v324 = vld [vmem:[%s1 + $0x910] sm:$0xff]
  %v325 = vld [vmem:[%s1 + $0x918] sm:$0xff]
  %v326 = vld [vmem:[%s1 + $0x920] sm:$0xff]
  %v327 = vld [vmem:[%s1 + $0x928] sm:$0xff]
  %v328 = vld [vmem:[%s1 + $0x930] sm:$0xff]
  %v329 = vld [vmem:[%s1 + $0x938] sm:$0xff]
  %v330 = vld [vmem:[%s1 + $0x940] sm:$0xff]
  %v331 = vld [vmem:[%s1 + $0x948] sm:$0xff]
  %v332 = vld [vmem:[%s1 + $0x950] sm:$0xff]
  %v333 = vld [vmem:[%s1 + $0x958] sm:$0xff]
  %v334 = vld [vmem:[%s1 + $0x960] sm:$0xff]
  %v335 = vld [vmem:[%s1 + $0x968] sm:$0xff]
  %v336 = vld [vmem:[%s1 + $0x970] sm:$0xff]
  %v337 = vld [vmem:[%s1 + $0x978] sm:$0xff]
  %v338 = vld [vmem:[%s1 + $0x980] sm:$0xff]
  %v339 = vld [vmem:[%s1 + $0x988] sm:$0xff]
  %v340 = vld [vmem:[%s1 + $0x990] sm:$0xff]
  %v341 = vld [vmem:[%s1 + $0x998] sm:$0xff]
  %v342 = vld [vmem:[%s1 + $0x9a0] sm:$0xff]
  %v343 = vld [vmem:[%s1 + $0x9a8] sm:$0xff]
  %v344 = vld [vmem:[%s1 + $0x9b0] sm:$0xff]
  %v345 = vld [vmem:[%s1 + $0x9b8] sm:$0xff]
  %v346 = vld [vmem:[%s1 + $0x9c0] sm:$0xff]
  %v347 = vld [vmem:[%s1 + $0x9c8] sm:$0xff]
  %v348 = vld [vmem:[%s1 + $0x9d0] sm:$0xff]
  %v349 = vld [vmem:[%s1 + $0x9d8] sm:$0xff]
  %v350 = vld [vmem:[%s1 + $0x9e0] sm:$0xff]
  %v351 = vld [vmem:[%s1 + $0x9e8] sm:$0xff]
  %v352 = vld [vmem:[%s1 + $0x9f0] sm:$0xff]
  %v353 = vld [vmem:[%s1 + $0x9f8] sm:$0xff]
  %v354 = vld [vmem:[%s1 + $0xa00] sm:$0xff]
  %v355 = vld [vmem:[%s1 + $0xa08] sm:$0xff]
  %v356 = vld [vmem:[%s1 + $0xa10] sm:$0xff]
  %v357 = vld [vmem:[%s1 + $0xa18] sm:$0xff]
  %v358 = vld [vmem:[%s1 + $0xa20] sm:$0xff]
  %v359 = vld [vmem:[%s1 + $0xa28] sm:$0xff]
  %v360 = vld [vmem:[%s1 + $0xa30] sm:$0xff]
  %v361 = vld [vmem:[%s1 + $0xa38] sm:$0xff]
  %v362 = vld [vmem:[%s1 + $0xa40] sm:$0xff]
  %v363 = vld [vmem:[%s1 + $0xa48] sm:$0xff]
  %v364 = vld [vmem:[%s1 + $0xa50] sm:$0xff]
  %v365 = vld [vmem:[%s1 + $0xa58] sm:$0xff]
  %v366 = vld [vmem:[%s1 + $0xa60] sm:$0xff]
  %v367 = vld [vmem:[%s1 + $0xa68] sm:$0xff]
  %v368 = vld [vmem:[%s1 + $0xa70] sm:$0xff]
  %v369 = vld [vmem:[%s1 + $0xa78] sm:$0xff]
  %v370 = vld [vmem:[%s1 + $0xa80] sm:$0xff]
  %v371 = vld [vmem:[%s1 + $0xa88] sm:$0xff]
  %v372 = vld [vmem:[%s1 + $0xa90] sm:$0xff]
  %v373 = vld [vmem:[%s1 + $0xa98] sm:$0xff]
  %v374 = vld [vmem:[%s1 + $0xaa0] sm:$0xff]
  %v375 = vld [vmem:[%s1 + $0xaa8] sm:$0xff]
  %v376 = vld [vmem:[%s1 + $0xab0] sm:$0xff]
  %v377 = vld [vmem:[%s1 + $0xab8] sm:$0xff]
  %v378 = vld [vmem:[%s1 + $0xac0] sm:$0xff]
  %v379 = vld [vmem:[%s1 + $0xac8] sm:$0xff]
  %v380 = vld [vmem:[%s1 + $0xad0] sm:$0xff]
  %v381 = vld [vmem:[%s1 + $0xad8] sm:$0xff]
  %v382 = vld [vmem:[%s1 + $0xae0] sm:$0xff]
  %v383 = vld [vmem:[%s1 + $0xae8] sm:$0xff]
  %v384 = vld [vmem:[%s1 + $0xaf0] sm:$0xff]
  %v385 = vld [vmem:[%s1 + $0xaf8] sm:$0xff]
  %v386 = vld [vmem:[%s1 + $0xb00] sm:$0xff]
  %v387 = vld [vmem:[%s1 + $0xb08] sm:$0xff]
  %v388 = vld [vmem:[%s1 + $0xb10] sm:$0xff]
  %v389 = vld [vmem:[%s1 + $0xb18] sm:$0xff]
  %v390 = vld [vmem:[%s1 + $0xb20] sm:$0xff]
  %v391 = vld [vmem:[%s1 + $0xb28] sm:$0xff]
  %v392 = vld [vmem:[%s1 + $0xb30] sm:$0xff]
  %v393 = vld [vmem:[%s1 + $0xb38] sm:$0xff]
  %v394 = vld [vmem:[%s1 + $0xb40] sm:$0xff]
  %v395 = vld [vmem:[%s1 + $0xb48] sm:$0xff]
  %v396 = vld [vmem:[%s1 + $0xb50] sm:$0xff]
  %v397 = vld [vmem:[%s1 + $0xb58] sm:$0xff]
  %v398 = vld [vmem:[%s1 + $0xb60] sm:$0xff]
  %v399 = vld [vmem:[%s1 + $0xb68] sm:$0xff]
  %v400 = vld [vmem:[%s1 + $0xb70] sm:$0xff]
  %v401 = vld [vmem:[%s1 + $0xb78] sm:$0xff]
  %v402 = vld [vmem:[%s1 + $0xb80] sm:$0xff]
  %v403 = vld [vmem:[%s1 + $0xb88] sm:$0xff]
  %v404 = vld [vmem:[%s1 + $0xb90] sm:$0xff]
  %v405 = vld [vmem:[%s1 + $0xb98] sm:$0xff]
  %v406 = vld [vmem:[%s1 + $0xba0] sm:$0xff]
  %v407 = vld [vmem:[%s1 + $0xba8] sm:$0xff]
  %v408 = vld [vmem:[%s1 + $0xbb0] sm:$0xff]
  %v409 = vld [vmem:[%s1 + $0xbb8] sm:$0xff]
  %v410 = vld [vmem:[%s1 + $0xbc0] sm:$0xff]
  %v411 = vld [vmem:[%s1 + $0xbc8] sm:$0xff]
  %v412 = vld [vmem:[%s1 + $0xbd0] sm:$0xff]
  %v413 = vld [vmem:[%s1 + $0xbd8] sm:$0xff]
  %v414 = vld [vmem:[%s1 + $0xbe0] sm:$0xff]
  %v415 = vld [vmem:[%s1 + $0xbe8] sm:$0xff]
  %v416 = vld [vmem:[%s1 + $0xbf0] sm:$0xff]
  %v417 = vld [vmem:[%s1 + $0xbf8] sm:$0xff]
  %v418 = vld [vmem:[%s1 + $0xc00] sm:$0xff]
  %v419 = vld [vmem:[%s1 + $0xc08] sm:$0xff]
  %v420 = vld [vmem:[%s1 + $0xc10] sm:$0xff]
  %v421 = vld [vmem:[%s1 + $0xc18] sm:$0xff]
  %v422 = vld [vmem:[%s1 + $0xc20] sm:$0xff]
  %v423 = vld [vmem:[%s1 + $0xc28] sm:$0xff]
  %v424 = vld [vmem:[%s1 + $0xc30] sm:$0xff]
  %v425 = vld [vmem:[%s1 + $0xc38] sm:$0xff]
  %v426 = vld [vmem:[%s1 + $0xc40] sm:$0xff]
  %v427 = vld [vmem:[%s1 + $0xc48] sm:$0xff]
  %v428 = vld [vmem:[%s1 + $0xc50] sm:$0xff]
  %v429 = vld [vmem:[%s1 + $0xc58] sm:$0xff]
  %v430 = vld [vmem:[%s1 + $0xc60] sm:$0xff]
  %v431 = vld [vmem:[%s1 + $0xc68] sm:$0xff]
  %v432 = vld [vmem:[%s1 + $0xc70] sm:$0xff]
  %v433 = vld [vmem:[%s1 + $0xc78] sm:$0xff]
  %v434 = vld [vmem:[%s1 + $0xc80] sm:$0xff]
  %v435 = vld [vmem:[%s1 + $0xc88] sm:$0xff]
  %v436 = vld [vmem:[%s1 + $0xc90] sm:$0xff]
  %v437 = vld [vmem:[%s1 + $0xc98] sm:$0xff]
  %v438 = vld [vmem:[%s1 + $0xca0] sm:$0xff]
  %v439 = vld [vmem:[%s1 + $0xca8] sm:$0xff]
  %v440 = vld [vmem:[%s1 + $0xcb0] sm:$0xff]
  %v441 = vld [vmem:[%s1 + $0xcb8] sm:$0xff]
  %v442 = vld [vmem:[%s1 + $0xcc0] sm:$0xff]
  %v443 = vld [vmem:[%s1 + $0xcc8] sm:$0xff]
  %v444 = vld [vmem:[%s1 + $0xcd0] sm:$0xff]
  %v445 = vld [vmem:[%s1 + $0xcd8] sm:$0xff]
  %v446 = vld [vmem:[%s1 + $0xce0] sm:$0xff]
  %v447 = vld [vmem:[%s1 + $0xce8] sm:$0xff]
  %v448 = vld [vmem:[%s1 + $0xcf0] sm:$0xff]
  %v449 = vld [vmem:[%s1 + $0xcf8] sm:$0xff]
  %v450 = vld [vmem:[%s1 + $0xd00] sm:$0xff]
  %v451 = vld [vmem:[%s1 + $0xd08] sm:$0xff]
  %v452 = vld [vmem:[%s1 + $0xd10] sm:$0xff]
  %v453 = vld [vmem:[%s1 + $0xd18] sm:$0xff]
  %v454 = vld [vmem:[%s1 + $0xd20] sm:$0xff]
  %v455 = vld [vmem:[%s1 + $0xd28] sm:$0xff]
  %v456 = vld [vmem:[%s1 + $0xd30] sm:$0xff]
  %v457 = vld [vmem:[%s1 + $0xd38] sm:$0xff]
  %v458 = vld [vmem:[%s1 + $0xd40] sm:$0xff]
  %v459 = vld [vmem:[%s1 + $0xd48] sm:$0xff]
  %v460 = vld [vmem:[%s1 + $0xd50] sm:$0xff]
  %v461 = vld [vmem:[%s1 + $0xd58] sm:$0xff]
  %v462 = vld [vmem:[%s1 + $0xd60] sm:$0xff]
  %v463 = vld [vmem:[%s1 + $0xd68] sm:$0xff]
  %v464 = vld [vmem:[%s1 + $0xd70] sm:$0xff]
  %v465 = vld [vmem:[%s1 + $0xd78] sm:$0xff]
  %v466 = vld [vmem:[%s1 + $0xd80] sm:$0xff]
  %v467 = vld [vmem:[%s1 + $0xd88] sm:$0xff]
  %v468 = vld [vmem:[%s1 + $0xd90] sm:$0xff]
  %v469 = vld [vmem:[%s1 + $0xd98] sm:$0xff]
  %v470 = vld [vmem:[%s1 + $0xda0] sm:$0xff]
  %v471 = vld [vmem:[%s1 + $0xda8] sm:$0xff]
  %v472 = vld [vmem:[%s1 + $0xdb0] sm:$0xff]
  %v473 = vld [vmem:[%s1 + $0xdb8] sm:$0xff]
  %v474 = vld [vmem:[%s1 + $0xdc0] sm:$0xff]
  %v475 = vld [vmem:[%s1 + $0xdc8] sm:$0xff]
  %v476 = vld [vmem:[%s1 + $0xdd0] sm:$0xff]
  %v477 = vld [vmem:[%s1 + $0xdd8] sm:$0xff]
  %v478 = vld [vmem:[%s1 + $0xde0] sm:$0xff]
  %v479 = vld [vmem:[%s1 + $0xde8] sm:$0xff]
  %v480 = vld [vmem:[%s1 + $0xdf0] sm:$0xff]
  %v481 = vld [vmem:[%s1 + $0xdf8] sm:$0xff]
  %v482 = vld [vmem:[%s1 + $0xe00] sm:$0xff]
  %v483 = vld [vmem:[%s1 + $0xe08] sm:$0xff]
  %v484 = vld [vmem:[%s1 + $0xe10] sm:$0xff]
  %v485 = vld [vmem:[%s1 + $0xe18] sm:$0xff]
  %v486 = vld [vmem:[%s1 + $0xe20] sm:$0xff]
  %v487 = vld [vmem:[%s1 + $0xe28] sm:$0xff]
  %v488 = vld [vmem:[%s1 + $0xe30] sm:$0xff]
  %v489 = vld [vmem:[%s1 + $0xe38] sm:$0xff]
  %v490 = vld [vmem:[%s1 + $0xe40] sm:$0xff]
  %v491 = vld [vmem:[%s1 + $0xe48] sm:$0xff]
  %v492 = vld [vmem:[%s1 + $0xe50] sm:$0xff]
  %v493 = vld [vmem:[%s1 + $0xe58] sm:$0xff]
  %v494 = vld [vmem:[%s1 + $0xe60] sm:$0xff]
  %v495 = vld [vmem:[%s1 + $0xe68] sm:$0xff]
  %v496 = vld [vmem:[%s1 + $0xe70] sm:$0xff]
  %v497 = vld [vmem:[%s1 + $0xe78] sm:$0xff]
  %v498 = vld [vmem:[%s1 + $0xe80] sm:$0xff]
  %v499 = vld [vmem:[%s1 + $0xe88] sm:$0xff]
  %v500 = vld [vmem:[%s1 + $0xe90] sm:$0xff]
  %v501 = vld [vmem:[%s1 + $0xe98] sm:$0xff]
  %v502 = vld [vmem:[%s1 + $0xea0] sm:$0xff]
  %v503 = vld [vmem:[%s1 + $0xea8] sm:$0xff]
  %v504 = vld [vmem:[%s1 + $0xeb0] sm:$0xff]
  %v505 = vld [vmem:[%s1 + $0xeb8] sm:$0xff]
  %v506 = vld [vmem:[%s1 + $0xec0] sm:$0xff]
  %v507 = vld [vmem:[%s1 + $0xec8] sm:$0xff]
  %v508 = vld [vmem:[%s1 + $0xed0] sm:$0xff]
  %v509 = vld [vmem:[%s1 + $0xed8] sm:$0xff]
  %v510 = vld [vmem:[%s1 + $0xee0] sm:$0xff]
  %v511 = vld [vmem:[%s1 + $0xee8] sm:$0xff]
  %v512 = vld [vmem:[%s1 + $0xef0] sm:$0xff]
  %v513 = vld [vmem:[%s1 + $0xef8] sm:$0xff]
  %v514 = vld [vmem:[%s1 + $0xf00] sm:$0xff]
  %v515 = vld [vmem:[%s1 + $0xf08] sm:$0xff]
  %v516 = vld [vmem:[%s1 + $0xf10] sm:$0xff]
  %v517 = vld [vmem:[%s1 + $0xf18] sm:$0xff]
  %v518 = vld [vmem:[%s1 + $0xf20] sm:$0xff]
  %v519 = vld [vmem:[%s1 + $0xf28] sm:$0xff]
  %v520 = vld [vmem:[%s1 + $0xf30] sm:$0xff]
  %v521 = vld [vmem:[%s1 + $0xf38] sm:$0xff]
  %v522 = vld [vmem:[%s1 + $0xf40] sm:$0xff]
  %v523 = vld [vmem:[%s1 + $0xf48] sm:$0xff]
  %v524 = vld [vmem:[%s1 + $0xf50] sm:$0xff]
  %v525 = vld [vmem:[%s1 + $0xf58] sm:$0xff]
  %v526 = vld [vmem:[%s1 + $0xf60] sm:$0xff]
  %v527 = vld [vmem:[%s1 + $0xf68] sm:$0xff]
  %v528 = vld [vmem:[%s1 + $0xf70] sm:$0xff]
  %v529 = vld [vmem:[%s1 + $0xf78] sm:$0xff]
  %v530 = vld [vmem:[%s1 + $0xf80] sm:$0xff]
  %v531 = vld [vmem:[%s1 + $0xf88] sm:$0xff]
  %v532 = vld [vmem:[%s1 + $0xf90] sm:$0xff]
  %v533 = vld [vmem:[%s1 + $0xf98] sm:$0xff]
  %v534 = vld [vmem:[%s1 + $0xfa0] sm:$0xff]
  %v535 = vld [vmem:[%s1 + $0xfa8] sm:$0xff]
  %v536 = vld [vmem:[%s1 + $0xfb0] sm:$0xff]
  %v537 = vld [vmem:[%s1 + $0xfb8] sm:$0xff]
  %v538 = vld [vmem:[%s1 + $0xfc0] sm:$0xff]
  %v539 = vld [vmem:[%s1 + $0xfc8] sm:$0xff]
  %v540 = vld [vmem:[%s1 + $0xfd0] sm:$0xff]
  %v541 = vld [vmem:[%s1 + $0xfd8] sm:$0xff]
  %v542 = vld [vmem:[%s1 + $0xfe0] sm:$0xff]
  %v543 = vld [vmem:[%s1 + $0xfe8] sm:$0xff]
  %v544 = vld [vmem:[%s1 + $0xff0] sm:$0xff]
  %v545 = vld [vmem:[%s1 + $0xff8] sm:$0xff]
  %v546 = vld [vmem:[%s1 + $0x1000] sm:$0xff]
  %v547 = vld [vmem:[%s1 + $0x1008] sm:$0xff]
  %v548 = vld [vmem:[%s1 + $0x1010] sm:$0xff]
  %v549 = vld [vmem:[%s1 + $0x1018] sm:$0xff]
  %v550 = vld [vmem:[%s1 + $0x1020] sm:$0xff]
  %v551 = vld [vmem:[%s1 + $0x1028] sm:$0xff]
  %v552 = vld [vmem:[%s1 + $0x1030] sm:$0xff]
  %v553 = vld [vmem:[%s1 + $0x1038] sm:$0xff]
  %v554 = vld [vmem:[%s1 + $0x1040] sm:$0xff]
  %v555 = vld [vmem:[%s1 + $0x1048] sm:$0xff]
  %v556 = vld [vmem:[%s1 + $0x1050] sm:$0xff]
  %v557 = vld [vmem:[%s1 + $0x1058] sm:$0xff]
  %v558 = vld [vmem:[%s1 + $0x1060] sm:$0xff]
  %v559 = vld [vmem:[%s1 + $0x1068] sm:$0xff]
  %v560 = vld [vmem:[%s1 + $0x1070] sm:$0xff]
  %v561 = vld [vmem:[%s1 + $0x1078] sm:$0xff]
  %v562 = vld [vmem:[%s1 + $0x1080] sm:$0xff]
  %v563 = vld [vmem:[%s1 + $0x1088] sm:$0xff]
  %v564 = vld [vmem:[%s1 + $0x1090] sm:$0xff]
  %v565 = vld [vmem:[%s1 + $0x1098] sm:$0xff]
  %v566 = vld [vmem:[%s1 + $0x10a0] sm:$0xff]
  %v567 = vld [vmem:[%s1 + $0x10a8] sm:$0xff]
  %v568 = vld [vmem:[%s1 + $0x10b0] sm:$0xff]
  %v569 = vld [vmem:[%s1 + $0x10b8] sm:$0xff]
  %v570 = vld [vmem:[%s1 + $0x10c0] sm:$0xff]
  %v571 = vld [vmem:[%s1 + $0x10c8] sm:$0xff]
  %v572 = vld [vmem:[%s1 + $0x10d0] sm:$0xff]
  %v573 = vld [vmem:[%s1 + $0x10d8] sm:$0xff]
  %v574 = vld [vmem:[%s1 + $0x10e0] sm:$0xff]
  %v575 = vld [vmem:[%s1 + $0x10e8] sm:$0xff]
  %v576 = vld [vmem:[%s1 + $0x10f0] sm:$0xff]
  %v577 = vld [vmem:[%s1 + $0x10f8] sm:$0xff]
  %v578 = vld [vmem:[%s1 + $0x1100] sm:$0xff]
  %v579 = vld [vmem:[%s1 + $0x1108] sm:$0xff]
  %v580 = vld [vmem:[%s1 + $0x1110] sm:$0xff]
  %v581 = vld [vmem:[%s1 + $0x1118] sm:$0xff]
  %v582 = vld [vmem:[%s1 + $0x1120] sm:$0xff]
  %v583 = vld [vmem:[%s1 + $0x1128] sm:$0xff]
  %v584 = vld [vmem:[%s1 + $0x1130] sm:$0xff]
  %v585 = vld [vmem:[%s1 + $0x1138] sm:$0xff]
  %v586 = vld [vmem:[%s1 + $0x1140] sm:$0xff]
  %v587 = vld [vmem:[%s1 + $0x1148] sm:$0xff]
  %v588 = vld [vmem:[%s1 + $0x1150] sm:$0xff]
  %v589 = vld [vmem:[%s1 + $0x1158] sm:$0xff]
  %v590 = vld [vmem:[%s1 + $0x1160] sm:$0xff]
  %v591 = vld [vmem:[%s1 + $0x1168] sm:$0xff]
  %v592 = vld [vmem:[%s1 + $0x1170] sm:$0xff]
  %v593 = vld [vmem:[%s1 + $0x1178] sm:$0xff]
  %v594 = vld [vmem:[%s1 + $0x1180] sm:$0xff]
  %v595 = vld [vmem:[%s1 + $0x1188] sm:$0xff]
  %v596 = vld [vmem:[%s1 + $0x1190] sm:$0xff]
  %v597 = vld [vmem:[%s1 + $0x1198] sm:$0xff]
  %v598 = vld [vmem:[%s1 + $0x11a0] sm:$0xff]
  %v599 = vld [vmem:[%s1 + $0x11a8] sm:$0xff]
  %v600 = vld [vmem:[%s1 + $0x11b0] sm:$0xff]
  %v601 = vld [vmem:[%s1 + $0x11b8] sm:$0xff]
  %v602 = vld [vmem:[%s1 + $0x11c0] sm:$0xff]
  %v603 = vld [vmem:[%s1 + $0x11c8] sm:$0xff]
  %v604 = vld [vmem:[%s1 + $0x11d0] sm:$0xff]
  %v605 = vld [vmem:[%s1 + $0x11d8] sm:$0xff]
  %v606 = vld [vmem:[%s1 + $0x11e0] sm:$0xff]
  %v607 = vld [vmem:[%s1 + $0x11e8] sm:$0xff]
  %v608 = vld [vmem:[%s1 + $0x11f0] sm:$0xff]
  %v609 = vld [vmem:[%s1 + $0x11f8] sm:$0xff]
  %v610 = vld [vmem:[%s1 + $0x1200] sm:$0xff]
  %v611 = vld [vmem:[%s1 + $0x1208] sm:$0xff]
  %v612 = vld [vmem:[%s1 + $0x1210] sm:$0xff]
  %v613 = vld [vmem:[%s1 + $0x1218] sm:$0xff]
  %v614 = vld [vmem:[%s1 + $0x1220] sm:$0xff]
  %v615 = vld [vmem:[%s1 + $0x1228] sm:$0xff]
  %v616 = vld [vmem:[%s1 + $0x1230] sm:$0xff]
  %v617 = vld [vmem:[%s1 + $0x1238] sm:$0xff]
  %v618 = vld [vmem:[%s1 + $0x1240] sm:$0xff]
  %v619 = vld [vmem:[%s1 + $0x1248] sm:$0xff]
  %v620 = vld [vmem:[%s1 + $0x1250] sm:$0xff]
  %v621 = vld [vmem:[%s1 + $0x1258] sm:$0xff]
  %v622 = vld [vmem:[%s1 + $0x1260] sm:$0xff]
  %v623 = vld [vmem:[%s1 + $0x1268] sm:$0xff]
  %v624 = vld [vmem:[%s1 + $0x1270] sm:$0xff]
  %v625 = vld [vmem:[%s1 + $0x1278] sm:$0xff]
  %v626 = vld [vmem:[%s1 + $0x1280] sm:$0xff]
  %v627 = vld [vmem:[%s1 + $0x1288] sm:$0xff]
  %v628 = vld [vmem:[%s1 + $0x1290] sm:$0xff]
  %v629 = vld [vmem:[%s1 + $0x1298] sm:$0xff]
  %v630 = vld [vmem:[%s1 + $0x12a0] sm:$0xff]
  %v631 = vld [vmem:[%s1 + $0x12a8] sm:$0xff]
  %v632 = vld [vmem:[%s1 + $0x12b0] sm:$0xff]
  %v633 = vld [vmem:[%s1 + $0x12b8] sm:$0xff]
  %v634 = vld [vmem:[%s1 + $0x12c0] sm:$0xff]
  %v635 = vld [vmem:[%s1 + $0x12c8] sm:$0xff]
  %v636 = vld [vmem:[%s1 + $0x12d0] sm:$0xff]
  %v637 = vld [vmem:[%s1 + $0x12d8] sm:$0xff]
  %v638 = vld [vmem:[%s1 + $0x12e0] sm:$0xff]
  %v639 = vld [vmem:[%s1 + $0x12e8] sm:$0xff]
  %v640 = vld [vmem:[%s1 + $0x12f0] sm:$0xff]
  %v641 = vld [vmem:[%s1 + $0x12f8] sm:$0xff]
  %v642 = vld [vmem:[%s1 + $0x1300] sm:$0xff]
  %v643 = vld [vmem:[%s1 + $0x1308] sm:$0xff]
  %v644 = vld [vmem:[%s1 + $0x1310] sm:$0xff]
  %v645 = vld [vmem:[%s1 + $0x1318] sm:$0xff]
  %v646 = vld [vmem:[%s1 + $0x1320] sm:$0xff]
  %v647 = vld [vmem:[%s1 + $0x1328] sm:$0xff]
  %v648 = vld [vmem:[%s1 + $0x1330] sm:$0xff]
  %v649 = vld [vmem:[%s1 + $0x1338] sm:$0xff]
  %v650 = vld [vmem:[%s1 + $0x1340] sm:$0xff]
  %v651 = vld [vmem:[%s1 + $0x1348] sm:$0xff]
  %v652 = vld [vmem:[%s1 + $0x1350] sm:$0xff]
  %v653 = vld [vmem:[%s1 + $0x1358] sm:$0xff]
  %v654 = vld [vmem:[%s1 + $0x1360] sm:$0xff]
  %v655 = vld [vmem:[%s1 + $0x1368] sm:$0xff]
  %v656 = vld [vmem:[%s1 + $0x1370] sm:$0xff]
  %v657 = vld [vmem:[%s1 + $0x1378] sm:$0xff]
  %v658 = vld [vmem:[%s1 + $0x1380] sm:$0xff]
  %v659 = vld [vmem:[%s1 + $0x1388] sm:$0xff]
  %v660 = vld [vmem:[%s1 + $0x1390] sm:$0xff]
  %v661 = vld [vmem:[%s1 + $0x1398] sm:$0xff]
  %v662 = vld [vmem:[%s1 + $0x13a0] sm:$0xff]
  %v663 = vld [vmem:[%s1 + $0x13a8] sm:$0xff]
  %v664 = vld [vmem:[%s1 + $0x13b0] sm:$0xff]
  %v665 = vld [vmem:[%s1 + $0x13b8] sm:$0xff]
  %v666 = vld [vmem:[%s1 + $0x13c0] sm:$0xff]
  %v667 = vld [vmem:[%s1 + $0x13c8] sm:$0xff]
  %v668 = vld [vmem:[%s1 + $0x13d0] sm:$0xff]
  %v669 = vld [vmem:[%s1 + $0x13d8] sm:$0xff]
  %v670 = vld [vmem:[%s1 + $0x13e0] sm:$0xff]
  %v671 = vld [vmem:[%s1 + $0x13e8] sm:$0xff]
  %v672 = vld [vmem:[%s1 + $0x13f0] sm:$0xff]
  %v673 = vld [vmem:[%s1 + $0x13f8] sm:$0xff]
  %v674 = vld [vmem:[%s1 + $0x1400] sm:$0xff]
  %v675 = vld [vmem:[%s1 + $0x1408] sm:$0xff]
  %v676 = vld [vmem:[%s1 + $0x1410] sm:$0xff]
  %v677 = vld [vmem:[%s1 + $0x1418] sm:$0xff]
  %v678 = vld [vmem:[%s1 + $0x1420] sm:$0xff]
  %v679 = vld [vmem:[%s1 + $0x1428] sm:$0xff]
  %v680 = vld [vmem:[%s1 + $0x1430] sm:$0xff]
  %v681 = vld [vmem:[%s1 + $0x1438] sm:$0xff]
  %v682 = vld [vmem:[%s1 + $0x1440] sm:$0xff]
  %v683 = vld [vmem:[%s1 + $0x1448] sm:$0xff]
  %v684 = vld [vmem:[%s1 + $0x1450] sm:$0xff]
  %v685 = vld [vmem:[%s1 + $0x1458] sm:$0xff]
  %v686 = vld [vmem:[%s1 + $0x1460] sm:$0xff]
  %v687 = vld [vmem:[%s1 + $0x1468] sm:$0xff]
  %v688 = vld [vmem:[%s1 + $0x1470] sm:$0xff]
  %v689 = vld [vmem:[%s1 + $0x1478] sm:$0xff]
  %v690 = vld [vmem:[%s1 + $0x1480] sm:$0xff]
  %v691 = vld [vmem:[%s1 + $0x1488] sm:$0xff]
  %v692 = vld [vmem:[%s1 + $0x1490] sm:$0xff]
  %v693 = vld [vmem:[%s1 + $0x1498] sm:$0xff]
  %v694 = vld [vmem:[%s1 + $0x14a0] sm:$0xff]
  %v695 = vld [vmem:[%s1 + $0x14a8] sm:$0xff]
  %v696 = vld [vmem:[%s1 + $0x14b0] sm:$0xff]
  %v697 = vld [vmem:[%s1 + $0x14b8] sm:$0xff]
  %v698 = vld [vmem:[%s1 + $0x14c0] sm:$0xff]
  %v699 = vld [vmem:[%s1 + $0x14c8] sm:$0xff]
  %v700 = vld [vmem:[%s1 + $0x14d0] sm:$0xff]
  %v701 = vld [vmem:[%s1 + $0x14d8] sm:$0xff]
  %v702 = vld [vmem:[%s1 + $0x14e0] sm:$0xff]
  %v703 = vld [vmem:[%s1 + $0x14e8] sm:$0xff]
  %v704 = vld [vmem:[%s1 + $0x14f0] sm:$0xff]
  %v705 = vld [vmem:[%s1 + $0x14f8] sm:$0xff]
  %v706 = vld [vmem:[%s1 + $0x1500] sm:$0xff]
  %v707 = vld [vmem:[%s1 + $0x1508] sm:$0xff]
  %v708 = vld [vmem:[%s1 + $0x1510] sm:$0xff]
  %v709 = vld [vmem:[%s1 + $0x1518] sm:$0xff]
  %v710 = vld [vmem:[%s1 + $0x1520] sm:$0xff]
  %v711 = vld [vmem:[%s1 + $0x1528] sm:$0xff]
  %v712 = vld [vmem:[%s1 + $0x1530] sm:$0xff]
  %v713 = vld [vmem:[%s1 + $0x1538] sm:$0xff]
  %v714 = vld [vmem:[%s1 + $0x1540] sm:$0xff]
  %v715 = vld [vmem:[%s1 + $0x1548] sm:$0xff]
  %v716 = vld [vmem:[%s1 + $0x1550] sm:$0xff]
  %v717 = vld [vmem:[%s1 + $0x1558] sm:$0xff]
  %v718 = vld [vmem:[%s1 + $0x1560] sm:$0xff]
  %v719 = vld [vmem:[%s1 + $0x1568] sm:$0xff]
  %v720 = vld [vmem:[%s1 + $0x1570] sm:$0xff]
  %v721 = vld [vmem:[%s1 + $0x1578] sm:$0xff]
  %v722 = vld [vmem:[%s1 + $0x1580] sm:$0xff]
  %v723 = vld [vmem:[%s1 + $0x1588] sm:$0xff]
  %v724 = vld [vmem:[%s1 + $0x1590] sm:$0xff]
  %v725 = vld [vmem:[%s1 + $0x1598] sm:$0xff]
  %v726 = vld [vmem:[%s1 + $0x15a0] sm:$0xff]
  %v727 = vld [vmem:[%s1 + $0x15a8] sm:$0xff]
  %v728 = vld [vmem:[%s1 + $0x15b0] sm:$0xff]
  %v729 = vld [vmem:[%s1 + $0x15b8] sm:$0xff]
  %v730 = vld [vmem:[%s1 + $0x15c0] sm:$0xff]
  %v731 = vld [vmem:[%s1 + $0x15c8] sm:$0xff]
  %v732 = vld [vmem:[%s1 + $0x15d0] sm:$0xff]
  %v733 = vld [vmem:[%s1 + $0x15d8] sm:$0xff]
  %v734 = vld [vmem:[%s1 + $0x15e0] sm:$0xff]
  %v735 = vld [vmem:[%s1 + $0x15e8] sm:$0xff]
  %v736 = vld [vmem:[%s1 + $0x15f0] sm:$0xff]
  %v737 = vld [vmem:[%s1 + $0x15f8] sm:$0xff]
  %v738 = vld [vmem:[%s1 + $0x1600] sm:$0xff]
  %v739 = vld [vmem:[%s1 + $0x1608] sm:$0xff]
  %v740 = vld [vmem:[%s1 + $0x1610] sm:$0xff]
  %v741 = vld [vmem:[%s1 + $0x1618] sm:$0xff]
  %v742 = vld [vmem:[%s1 + $0x1620] sm:$0xff]
  %v743 = vld [vmem:[%s1 + $0x1628] sm:$0xff]
  %v744 = vld [vmem:[%s1 + $0x1630] sm:$0xff]
  %v745 = vld [vmem:[%s1 + $0x1638] sm:$0xff]
  %v746 = vld [vmem:[%s1 + $0x1640] sm:$0xff]
  %v747 = vld [vmem:[%s1 + $0x1648] sm:$0xff]
  %v748 = vld [vmem:[%s1 + $0x1650] sm:$0xff]
  %v749 = vld [vmem:[%s1 + $0x1658] sm:$0xff]
  %v750 = vld [vmem:[%s1 + $0x1660] sm:$0xff]
  %v751 = vld [vmem:[%s1 + $0x1668] sm:$0xff]
  %v752 = vld [vmem:[%s1 + $0x1670] sm:$0xff]
  %v753 = vld [vmem:[%s1 + $0x1678] sm:$0xff]
  %v754 = vld [vmem:[%s1 + $0x1680] sm:$0xff]
  %v755 = vld [vmem:[%s1 + $0x1688] sm:$0xff]
  %v756 = vld [vmem:[%s1 + $0x1690] sm:$0xff]
  %v757 = vld [vmem:[%s1 + $0x1698] sm:$0xff]
  %v758 = vld [vmem:[%s1 + $0x16a0] sm:$0xff]
  %v759 = vld [vmem:[%s1 + $0x16a8] sm:$0xff]
  %v760 = vld [vmem:[%s1 + $0x16b0] sm:$0xff]
  %v761 = vld [vmem:[%s1 + $0x16b8] sm:$0xff]
  %v762 = vld [vmem:[%s1 + $0x16c0] sm:$0xff]
  %v763 = vld [vmem:[%s1 + $0x16c8] sm:$0xff]
  %v764 = vld [vmem:[%s1 + $0x16d0] sm:$0xff]
  %v765 = vld [vmem:[%s1 + $0x16d8] sm:$0xff]
  %v766 = vld [vmem:[%s1 + $0x16e0] sm:$0xff]
  %v767 = vld [vmem:[%s1 + $0x16e8] sm:$0xff]
  %v768 = vld [vmem:[%s1 + $0x16f0] sm:$0xff]
  %v769 = vld [vmem:[%s1 + $0x16f8] sm:$0xff]
  %v770 = vld [vmem:[%s1 + $0x1700] sm:$0xff]
  %v771 = vld [vmem:[%s1 + $0x1708] sm:$0xff]
  %v772 = vld [vmem:[%s1 + $0x1710] sm:$0xff]
  %v773 = vld [vmem:[%s1 + $0x1718] sm:$0xff]
  %v774 = vld [vmem:[%s1 + $0x1720] sm:$0xff]
  %v775 = vld [vmem:[%s1 + $0x1728] sm:$0xff]
  %v776 = vld [vmem:[%s1 + $0x1730] sm:$0xff]
  %v777 = vld [vmem:[%s1 + $0x1738] sm:$0xff]
  %v778 = vld [vmem:[%s1 + $0x1740] sm:$0xff]
  %v779 = vld [vmem:[%s1 + $0x1748] sm:$0xff]
  %v780 = vld [vmem:[%s1 + $0x1750] sm:$0xff]
  %v781 = vld [vmem:[%s1 + $0x1758] sm:$0xff]
  %v782 = vld [vmem:[%s1 + $0x1760] sm:$0xff]
  %v783 = vld [vmem:[%s1 + $0x1768] sm:$0xff]
  %v784 = vld [vmem:[%s1 + $0x1770] sm:$0xff]
  %v785 = vld [vmem:[%s1 + $0x1778] sm:$0xff]
  %v786 = vld [vmem:[%s1 + $0x1780] sm:$0xff]
  %v787 = vld [vmem:[%s1 + $0x1788] sm:$0xff]
  %v788 = vld [vmem:[%s1 + $0x1790] sm:$0xff]
  %v789 = vld [vmem:[%s1 + $0x1798] sm:$0xff]
  %v790 = vld [vmem:[%s1 + $0x17a0] sm:$0xff]
  %v791 = vld [vmem:[%s1 + $0x17a8] sm:$0xff]
  %v792 = vld [vmem:[%s1 + $0x17b0] sm:$0xff]
  %v793 = vld [vmem:[%s1 + $0x17b8] sm:$0xff]
  %v794 = vld [vmem:[%s1 + $0x17c0] sm:$0xff]
  %v795 = vld [vmem:[%s1 + $0x17c8] sm:$0xff]
  %v796 = vld [vmem:[%s1 + $0x17d0] sm:$0xff]
  %v797 = vld [vmem:[%s1 + $0x17d8] sm:$0xff]
  %v798 = vld [vmem:[%s1 + $0x17e0] sm:$0xff]
  %v799 = vld [vmem:[%s1 + $0x17e8] sm:$0xff]
  %v800 = vld [vmem:[%s1 + $0x17f0] sm:$0xff]
  %v801 = vld [vmem:[%s1 + $0x17f8] sm:$0xff]
  %v802 = vld [vmem:[%s2] sm:$0x1]
  %v804 = vlaneseq
  %v805 = vshrl.u32 %v804, 7
  %v806 = vsub.s32 0, %v805
  %v807 = vrot.slane %v802, %v806
  %v821 = vcombine.high %v22, %v22
  %v823 = vunpack.c.l.s4 1983009808
  %v824 = vunpack.c.0.s8 %v823
  %v825 = vlaneseq
  %v826 = vshrl.u32 %v825, 7
  %v827 = vsub.s32 %v824, %v826
  %v828 = vrot.slane %v22, %v827
  %v830 = vunpack.c.l.s4 1983009808
  %v831 = vunpack.c.0.s8 %v830
  %v832 = vlaneseq
  %v833 = vshrl.u32 %v832, 7
  %v834 = vsub.s32 %v831, %v833
  %v835 = vrot.slane %v821, %v834
  %v836 = vcombine.high %v828, %v828
  %v837 = vcombine.high %v835, %v835
  %v838 = vcombine.high %v23, %v23
  %v840 = vunpack.c.l.s4 1983009808
  %v841 = vunpack.c.0.s8 %v840
  %v842 = vlaneseq
  %v843 = vshrl.u32 %v842, 7
  %v844 = vsub.s32 %v841, %v843
  %v845 = vrot.slane %v23, %v844
  %v847 = vunpack.c.l.s4 1983009808
  %v848 = vunpack.c.0.s8 %v847
  %v849 = vlaneseq
  %v850 = vshrl.u32 %v849, 7
  %v851 = vsub.s32 %v848, %v850
  %v852 = vrot.slane %v838, %v851
  %v853 = vcombine.high %v845, %v845
  %v854 = vcombine.high %v852, %v852
  %v855 = vcombine.high %v24, %v24
  %v857 = vunpack.c.l.s4 1983009808
  %v858 = vunpack.c.0.s8 %v857
  %v859 = vlaneseq
  %v860 = vshrl.u32 %v859, 7
  %v861 = vsub.s32 %v858, %v860
  %v862 = vrot.slane %v24, %v861
  %v864 = vunpack.c.l.s4 1983009808
  %v865 = vunpack.c.0.s8 %v864
  %v866 = vlaneseq
  %v867 = vshrl.u32 %v866, 7
  %v868 = vsub.s32 %v865, %v867
  %v869 = vrot.slane %v855, %v868
  %v870 = vcombine.high %v862, %v862
  %v871 = vcombine.high %v869, %v869
  %v872 = vcombine.high %v25, %v25
  %v874 = vunpack.c.l.s4 1983009808
  %v875 = vunpack.c.0.s8 %v874
  %v876 = vlaneseq
  %v877 = vshrl.u32 %v876, 7
  %v878 = vsub.s32 %v875, %v877
  %v879 = vrot.slane %v25, %v878
  %v881 = vunpack.c.l.s4 1983009808
  %v882 = vunpack.c.0.s8 %v881
  %v883 = vlaneseq
  %v884 = vshrl.u32 %v883, 7
  %v885 = vsub.s32 %v882, %v884
  %v886 = vrot.slane %v872, %v885
  %v887 = vcombine.high %v879, %v879
  %v888 = vcombine.high %v886, %v886
  %v889 = vcombine.high %v26, %v26
  %v891 = vunpack.c.l.s4 1983009808
  %v892 = vunpack.c.0.s8 %v891
  %v893 = vlaneseq
  %v894 = vshrl.u32 %v893, 7
  %v895 = vsub.s32 %v892, %v894
  %v896 = vrot.slane %v26, %v895
  %v898 = vunpack.c.l.s4 1983009808
  %v899 = vunpack.c.0.s8 %v898
  %v900 = vlaneseq
  %v901 = vshrl.u32 %v900, 7
  %v902 = vsub.s32 %v899, %v901
  %v903 = vrot.slane %v889, %v902
  %v904 = vcombine.high %v896, %v896
  %v905 = vcombine.high %v903, %v903
  %v906 = vcombine.high %v27, %v27
  %v908 = vunpack.c.l.s4 1983009808
  %v909 = vunpack.c.0.s8 %v908
  %v910 = vlaneseq
  %v911 = vshrl.u32 %v910, 7
  %v912 = vsub.s32 %v909, %v911
  %v913 = vrot.slane %v27, %v912
  %v915 = vunpack.c.l.s4 1983009808
  %v916 = vunpack.c.0.s8 %v915
  %v917 = vlaneseq
  %v918 = vshrl.u32 %v917, 7
  %v919 = vsub.s32 %v916, %v918
  %v920 = vrot.slane %v906, %v919
  %v921 = vcombine.high %v913, %v913
  %v922 = vcombine.high %v920, %v920
  %v923 = vcombine.high %v28, %v28
  %v925 = vunpack.c.l.s4 1983009808
  %v926 = vunpack.c.0.s8 %v925
  %v927 = vlaneseq
  %v928 = vshrl.u32 %v927, 7
  %v929 = vsub.s32 %v926, %v928
  %v930 = vrot.slane %v28, %v929
  %v932 = vunpack.c.l.s4 1983009808
  %v933 = vunpack.c.0.s8 %v932
  %v934 = vlaneseq
  %v935 = vshrl.u32 %v934, 7
  %v936 = vsub.s32 %v933, %v935
  %v937 = vrot.slane %v923, %v936
  %v938 = vcombine.high %v930, %v930
  %v939 = vcombine.high %v937, %v937
  %v940 = vcombine.high %v29, %v29
  %v942 = vunpack.c.l.s4 1983009808
  %v943 = vunpack.c.0.s8 %v942
  %v944 = vlaneseq
  %v945 = vshrl.u32 %v944, 7
  %v946 = vsub.s32 %v943, %v945
  %v947 = vrot.slane %v29, %v946
  %v949 = vunpack.c.l.s4 1983009808
  %v950 = vunpack.c.0.s8 %v949
  %v951 = vlaneseq
  %v952 = vshrl.u32 %v951, 7
  %v953 = vsub.s32 %v950, %v952
  %v954 = vrot.slane %v940, %v953
  %v955 = vcombine.high %v947, %v947
  %v956 = vcombine.high %v954, %v954
  %v957 = vcombine.high %v30, %v30
  %v959 = vunpack.c.l.s4 1983009808
  %v960 = vunpack.c.0.s8 %v959
  %v961 = vlaneseq
  %v962 = vshrl.u32 %v961, 7
  %v963 = vsub.s32 %v960, %v962
  %v964 = vrot.slane %v30, %v963
  %v966 = vunpack.c.l.s4 1983009808
  %v967 = vunpack.c.0.s8 %v966
  %v968 = vlaneseq
  %v969 = vshrl.u32 %v968, 7
  %v970 = vsub.s32 %v967, %v969
  %v971 = vrot.slane %v957, %v970
  %v972 = vcombine.high %v964, %v964
  %v973 = vcombine.high %v971, %v971
  %v974 = vcombine.high %v31, %v31
  %v976 = vunpack.c.l.s4 1983009808
  %v977 = vunpack.c.0.s8 %v976
  %v978 = vlaneseq
  %v979 = vshrl.u32 %v978, 7
  %v980 = vsub.s32 %v977, %v979
  %v981 = vrot.slane %v31, %v980
  %v983 = vunpack.c.l.s4 1983009808
  %v984 = vunpack.c.0.s8 %v983
  %v985 = vlaneseq
  %v986 = vshrl.u32 %v985, 7
  %v987 = vsub.s32 %v984, %v986
  %v988 = vrot.slane %v974, %v987
  %v989 = vcombine.high %v981, %v981
  %v990 = vcombine.high %v988, %v988
  %v991 = vcombine.high %v32, %v32
  %v993 = vunpack.c.l.s4 1983009808
  %v994 = vunpack.c.0.s8 %v993
  %v995 = vlaneseq
  %v996 = vshrl.u32 %v995, 7
  %v997 = vsub.s32 %v994, %v996
  %v998 = vrot.slane %v32, %v997
  %v1000 = vunpack.c.l.s4 1983009808
  %v1001 = vunpack.c.0.s8 %v1000
  %v1002 = vlaneseq
  %v1003 = vshrl.u32 %v1002, 7
  %v1004 = vsub.s32 %v1001, %v1003
  %v1005 = vrot.slane %v991, %v1004
  %v1006 = vcombine.high %v998, %v998
  %v1007 = vcombine.high %v1005, %v1005
  %v1008 = vcombine.high %v33, %v33
  %v1010 = vunpack.c.l.s4 1983009808
  %v1011 = vunpack.c.0.s8 %v1010
  %v1012 = vlaneseq
  %v1013 = vshrl.u32 %v1012, 7
  %v1014 = vsub.s32 %v1011, %v1013
  %v1015 = vrot.slane %v33, %v1014
  %v1017 = vunpack.c.l.s4 1983009808
  %v1018 = vunpack.c.0.s8 %v1017
  %v1019 = vlaneseq
  %v1020 = vshrl.u32 %v1019, 7
  %v1021 = vsub.s32 %v1018, %v1020
  %v1022 = vrot.slane %v1008, %v1021
  %v1023 = vcombine.high %v1015, %v1015
  %v1024 = vcombine.high %v1022, %v1022
  %1073 = vmatprep.subr.mxu0 0.0
  %1074 = vmatpush1.msra.mxu0 %v34
  %1075 = vmatprep.subr.mxu0 0.0
  %1076 = vmatpush1.msra.mxu0 %v35
  %1077 = vmatprep.subr.mxu0 0.0
  %1078 = vmatpush1.msra.mxu0 %v36
  %1079 = vmatprep.subr.mxu0 0.0
  %1080 = vmatpush1.msra.mxu0 %v37
  %1081 = vmatprep.subr.mxu0 0.0
  %1082 = vmatpush1.msra.mxu0 %v38
  %1083 = vmatprep.subr.mxu0 0.0
  %1084 = vmatpush1.msra.mxu0 %v39
  %1085 = vmatprep.subr.mxu0 0.0
  %1086 = vmatpush1.msra.mxu0 %v40
  %1087 = vmatprep.subr.mxu0 0.0
  %1088 = vmatpush1.msra.mxu0 %v41
  %1089 = vmatprep.subr.mxu0 0.0
  %1090 = vmatpush1.msra.mxu0 %v42
  %1091 = vmatprep.subr.mxu0 0.0
  %1092 = vmatpush1.msra.mxu0 %v43
  %1093 = vmatprep.subr.mxu0 0.0
  %1094 = vmatpush1.msra.mxu0 %v44
  %1095 = vmatprep.subr.mxu0 0.0
  %1096 = vmatpush1.msra.mxu0 %v45
  %1097 = vmatprep.subr.mxu0 0.0
  %1098 = vmatpush1.msra.mxu0 %v46
  %1099 = vmatprep.subr.mxu0 0.0
  %1100 = vmatpush1.msra.mxu0 %v47
  %1101 = vmatprep.subr.mxu0 0.0
  %1102 = vmatpush1.msra.mxu0 %v48
  %1103 = vmatprep.subr.mxu0 0.0
  %1104 = vmatpush1.msra.mxu0 %v49
  %1105 = vmatprep.subr.mxu0 0.0
  %1106 = vmatpush1.msra.mxu0 %v50
  %1107 = vmatprep.subr.mxu0 0.0
  %1108 = vmatpush1.msra.mxu0 %v51
  %1109 = vmatprep.subr.mxu0 0.0
  %1110 = vmatpush1.msra.mxu0 %v52
  %1111 = vmatprep.subr.mxu0 0.0
  %1112 = vmatpush1.msra.mxu0 %v53
  %1113 = vmatprep.subr.mxu0 0.0
  %1114 = vmatpush1.msra.mxu0 %v54
  %1115 = vmatprep.subr.mxu0 0.0
  %1116 = vmatpush1.msra.mxu0 %v55
  %1117 = vmatprep.subr.mxu0 0.0
  %1118 = vmatpush1.msra.mxu0 %v56
  %1119 = vmatprep.subr.mxu0 0.0
  %1120 = vmatpush1.msra.mxu0 %v57
  %1121 = vmatprep.subr.mxu0 0.0
  %1122 = vmatpush1.msra.mxu0 %v58
  %1123 = vmatprep.subr.mxu0 0.0
  %1124 = vmatpush1.msra.mxu0 %v59
  %1125 = vmatprep.subr.mxu0 0.0
  %1126 = vmatpush1.msra.mxu0 %v60
  %1127 = vmatprep.subr.mxu0 0.0
  %1128 = vmatpush1.msra.mxu0 %v61
  %1129 = vmatprep.subr.mxu0 0.0
  %1130 = vmatpush1.msra.mxu0 %v62
  %1131 = vmatprep.subr.mxu0 0.0
  %1132 = vmatpush1.msra.mxu0 %v63
  %1133 = vmatprep.subr.mxu0 0.0
  %1134 = vmatpush1.msra.mxu0 %v64
  %1135 = vmatprep.subr.mxu0 0.0
  %1136 = vmatpush1.msra.mxu0 %v65
  %1137 = vmatprep.mubr.f32.mxu0 %v836
  %1138 = vmatmul.mubr.f32.gmra.mrb[0].mxu0 %v828
  %v1139 = vpop.f32.mrb[0].mxu0
  %v1140 = vadd.f32 %v807, %v1139
  %v1141 = vpop.f32.mrb[0].mxu0
  %1142 = vdwg.mxu0
  %1143 = vmatprep.subr.mxu0 0.0
  %1144 = vmatpush1.msra.mxu0 %v66
  %1145 = vmatprep.subr.mxu0 0.0
  %1146 = vmatpush1.msra.mxu0 %v67
  %1147 = vmatprep.subr.mxu0 0.0
  %1148 = vmatpush1.msra.mxu0 %v68
  %1149 = vmatprep.subr.mxu0 0.0
  %1150 = vmatpush1.msra.mxu0 %v69
  %1151 = vmatprep.subr.mxu0 0.0
  %1152 = vmatpush1.msra.mxu0 %v70
  %1153 = vmatprep.subr.mxu0 0.0
  %1154 = vmatpush1.msra.mxu0 %v71
  %1155 = vmatprep.subr.mxu0 0.0
  %1156 = vmatpush1.msra.mxu0 %v72
  %1157 = vmatprep.subr.mxu0 0.0
  %1158 = vmatpush1.msra.mxu0 %v73
  %1159 = vmatprep.subr.mxu0 0.0
  %1160 = vmatpush1.msra.mxu0 %v74
  %1161 = vmatprep.subr.mxu0 0.0
  %1162 = vmatpush1.msra.mxu0 %v75
  %1163 = vmatprep.subr.mxu0 0.0
  %1164 = vmatpush1.msra.mxu0 %v76
  %1165 = vmatprep.subr.mxu0 0.0
  %1166 = vmatpush1.msra.mxu0 %v77
  %1167 = vmatprep.subr.mxu0 0.0
  %1168 = vmatpush1.msra.mxu0 %v78
  %1169 = vmatprep.subr.mxu0 0.0
  %1170 = vmatpush1.msra.mxu0 %v79
  %1171 = vmatprep.subr.mxu0 0.0
  %1172 = vmatpush1.msra.mxu0 %v80
  %1173 = vmatprep.subr.mxu0 0.0
  %1174 = vmatpush1.msra.mxu0 %v81
  %1175 = vmatprep.subr.mxu0 0.0
  %1176 = vmatpush1.msra.mxu0 %v82
  %1177 = vmatprep.subr.mxu0 0.0
  %1178 = vmatpush1.msra.mxu0 %v83
  %1179 = vmatprep.subr.mxu0 0.0
  %1180 = vmatpush1.msra.mxu0 %v84
  %1181 = vmatprep.subr.mxu0 0.0
  %1182 = vmatpush1.msra.mxu0 %v85
  %1183 = vmatprep.subr.mxu0 0.0
  %1184 = vmatpush1.msra.mxu0 %v86
  %1185 = vmatprep.subr.mxu0 0.0
  %1186 = vmatpush1.msra.mxu0 %v87
  %1187 = vmatprep.subr.mxu0 0.0
  %1188 = vmatpush1.msra.mxu0 %v88
  %1189 = vmatprep.subr.mxu0 0.0
  %1190 = vmatpush1.msra.mxu0 %v89
  %1191 = vmatprep.subr.mxu0 0.0
  %1192 = vmatpush1.msra.mxu0 %v90
  %1193 = vmatprep.subr.mxu0 0.0
  %1194 = vmatpush1.msra.mxu0 %v91
  %1195 = vmatprep.subr.mxu0 0.0
  %1196 = vmatpush1.msra.mxu0 %v92
  %1197 = vmatprep.subr.mxu0 0.0
  %1198 = vmatpush1.msra.mxu0 %v93
  %1199 = vmatprep.subr.mxu0 0.0
  %1200 = vmatpush1.msra.mxu0 %v94
  %1201 = vmatprep.subr.mxu0 0.0
  %1202 = vmatpush1.msra.mxu0 %v95
  %1203 = vmatprep.subr.mxu0 0.0
  %1204 = vmatpush1.msra.mxu0 %v96
  %1205 = vmatprep.subr.mxu0 0.0
  %1206 = vmatpush1.msra.mxu0 %v97
  %1207 = vmatprep.mubr.f32.mxu0 %v837
  %1208 = vmatmul.mubr.f32.gmra.mrb[0].mxu0 %v835
  %v1209 = vpop.f32.mrb[0].mxu0
  %v1210 = vadd.f32 %v1140, %v1209
  %v1211 = vpop.f32.mrb[0].mxu0
  %1212 = vdwg.mxu0
  %1213 = vmatprep.subr.mxu0 0.0
  %1214 = vmatpush1.msra.mxu0 %v98
  %1215 = vmatprep.subr.mxu0 0.0
  %1216 = vmatpush1.msra.mxu0 %v99
  %1217 = vmatprep.subr.mxu0 0.0
  %1218 = vmatpush1.msra.mxu0 %v100
  %1219 = vmatprep.subr.mxu0 0.0
  %1220 = vmatpush1.msra.mxu0 %v101
  %1221 = vmatprep.subr.mxu0 0.0
  %1222 = vmatpush1.msra.mxu0 %v102
  %1223 = vmatprep.subr.mxu0 0.0
  %1224 = vmatpush1.msra.mxu0 %v103
  %1225 = vmatprep.subr.mxu0 0.0
  %1226 = vmatpush1.msra.mxu0 %v104
  %1227 = vmatprep.subr.mxu0 0.0
  %1228 = vmatpush1.msra.mxu0 %v105
  %1229 = vmatprep.subr.mxu0 0.0
  %1230 = vmatpush1.msra.mxu0 %v106
  %1231 = vmatprep.subr.mxu0 0.0
  %1232 = vmatpush1.msra.mxu0 %v107
  %1233 = vmatprep.subr.mxu0 0.0
  %1234 = vmatpush1.msra.mxu0 %v108
  %1235 = vmatprep.subr.mxu0 0.0
  %1236 = vmatpush1.msra.mxu0 %v109
  %1237 = vmatprep.subr.mxu0 0.0
  %1238 = vmatpush1.msra.mxu0 %v110
  %1239 = vmatprep.subr.mxu0 0.0
  %1240 = vmatpush1.msra.mxu0 %v111
  %1241 = vmatprep.subr.mxu0 0.0
  %1242 = vmatpush1.msra.mxu0 %v112
  %1243 = vmatprep.subr.mxu0 0.0
  %1244 = vmatpush1.msra.mxu0 %v113
  %1245 = vmatprep.subr.mxu0 0.0
  %1246 = vmatpush1.msra.mxu0 %v114
  %1247 = vmatprep.subr.mxu0 0.0
  %1248 = vmatpush1.msra.mxu0 %v115
  %1249 = vmatprep.subr.mxu0 0.0
  %1250 = vmatpush1.msra.mxu0 %v116
  %1251 = vmatprep.subr.mxu0 0.0
  %1252 = vmatpush1.msra.mxu0 %v117
  %1253 = vmatprep.subr.mxu0 0.0
  %1254 = vmatpush1.msra.mxu0 %v118
  %1255 = vmatprep.subr.mxu0 0.0
  %1256 = vmatpush1.msra.mxu0 %v119
  %1257 = vmatprep.subr.mxu0 0.0
  %1258 = vmatpush1.msra.mxu0 %v120
  %1259 = vmatprep.subr.mxu0 0.0
  %1260 = vmatpush1.msra.mxu0 %v121
  %1261 = vmatprep.subr.mxu0 0.0
  %1262 = vmatpush1.msra.mxu0 %v122
  %1263 = vmatprep.subr.mxu0 0.0
  %1264 = vmatpush1.msra.mxu0 %v123
  %1265 = vmatprep.subr.mxu0 0.0
  %1266 = vmatpush1.msra.mxu0 %v124
  %1267 = vmatprep.subr.mxu0 0.0
  %1268 = vmatpush1.msra.mxu0 %v125
  %1269 = vmatprep.subr.mxu0 0.0
  %1270 = vmatpush1.msra.mxu0 %v126
  %1271 = vmatprep.subr.mxu0 0.0
  %1272 = vmatpush1.msra.mxu0 %v127
  %1273 = vmatprep.subr.mxu0 0.0
  %1274 = vmatpush1.msra.mxu0 %v128
  %1275 = vmatprep.subr.mxu0 0.0
  %1276 = vmatpush1.msra.mxu0 %v129
  %1277 = vmatprep.mubr.f32.mxu0 %v853
  %1278 = vmatmul.mubr.f32.gmra.mrb[0].mxu0 %v845
  %v1279 = vpop.f32.mrb[0].mxu0
  %v1280 = vadd.f32 %v1210, %v1279
  %v1281 = vpop.f32.mrb[0].mxu0
  %1282 = vdwg.mxu0
  %1283 = vmatprep.subr.mxu0 0.0
  %1284 = vmatpush1.msra.mxu0 %v130
  %1285 = vmatprep.subr.mxu0 0.0
  %1286 = vmatpush1.msra.mxu0 %v131
  %1287 = vmatprep.subr.mxu0 0.0
  %1288 = vmatpush1.msra.mxu0 %v132
  %1289 = vmatprep.subr.mxu0 0.0
  %1290 = vmatpush1.msra.mxu0 %v133
  %1291 = vmatprep.subr.mxu0 0.0
  %1292 = vmatpush1.msra.mxu0 %v134
  %1293 = vmatprep.subr.mxu0 0.0
  %1294 = vmatpush1.msra.mxu0 %v135
  %1295 = vmatprep.subr.mxu0 0.0
  %1296 = vmatpush1.msra.mxu0 %v136
  %1297 = vmatprep.subr.mxu0 0.0
  %1298 = vmatpush1.msra.mxu0 %v137
  %1299 = vmatprep.subr.mxu0 0.0
  %1300 = vmatpush1.msra.mxu0 %v138
  %1301 = vmatprep.subr.mxu0 0.0
  %1302 = vmatpush1.msra.mxu0 %v139
  %1303 = vmatprep.subr.mxu0 0.0
  %1304 = vmatpush1.msra.mxu0 %v140
  %1305 = vmatprep.subr.mxu0 0.0
  %1306 = vmatpush1.msra.mxu0 %v141
  %1307 = vmatprep.subr.mxu0 0.0
  %1308 = vmatpush1.msra.mxu0 %v142
  %1309 = vmatprep.subr.mxu0 0.0
  %1310 = vmatpush1.msra.mxu0 %v143
  %1311 = vmatprep.subr.mxu0 0.0
  %1312 = vmatpush1.msra.mxu0 %v144
  %1313 = vmatprep.subr.mxu0 0.0
  %1314 = vmatpush1.msra.mxu0 %v145
  %1315 = vmatprep.subr.mxu0 0.0
  %1316 = vmatpush1.msra.mxu0 %v146
  %1317 = vmatprep.subr.mxu0 0.0
  %1318 = vmatpush1.msra.mxu0 %v147
  %1319 = vmatprep.subr.mxu0 0.0
  %1320 = vmatpush1.msra.mxu0 %v148
  %1321 = vmatprep.subr.mxu0 0.0
  %1322 = vmatpush1.msra.mxu0 %v149
  %1323 = vmatprep.subr.mxu0 0.0
  %1324 = vmatpush1.msra.mxu0 %v150
  %1325 = vmatprep.subr.mxu0 0.0
  %1326 = vmatpush1.msra.mxu0 %v151
  %1327 = vmatprep.subr.mxu0 0.0
  %1328 = vmatpush1.msra.mxu0 %v152
  %1329 = vmatprep.subr.mxu0 0.0
  %1330 = vmatpush1.msra.mxu0 %v153
  %1331 = vmatprep.subr.mxu0 0.0
  %1332 = vmatpush1.msra.mxu0 %v154
  %1333 = vmatprep.subr.mxu0 0.0
  %1334 = vmatpush1.msra.mxu0 %v155
  %1335 = vmatprep.subr.mxu0 0.0
  %1336 = vmatpush1.msra.mxu0 %v156
  %1337 = vmatprep.subr.mxu0 0.0
  %1338 = vmatpush1.msra.mxu0 %v157
  %1339 = vmatprep.subr.mxu0 0.0
  %1340 = vmatpush1.msra.mxu0 %v158
  %1341 = vmatprep.subr.mxu0 0.0
  %1342 = vmatpush1.msra.mxu0 %v159
  %1343 = vmatprep.subr.mxu0 0.0
  %1344 = vmatpush1.msra.mxu0 %v160
  %1345 = vmatprep.subr.mxu0 0.0
  %1346 = vmatpush1.msra.mxu0 %v161
  %1347 = vmatprep.mubr.f32.mxu0 %v854
  %1348 = vmatmul.mubr.f32.gmra.mrb[0].mxu0 %v852
  %v1349 = vpop.f32.mrb[0].mxu0
  %v1350 = vadd.f32 %v1280, %v1349
  %v1351 = vpop.f32.mrb[0].mxu0
  %1352 = vdwg.mxu0
  %1353 = vmatprep.subr.mxu0 0.0
  %1354 = vmatpush1.msra.mxu0 %v162
  %1355 = vmatprep.subr.mxu0 0.0
  %1356 = vmatpush1.msra.mxu0 %v163
  %1357 = vmatprep.subr.mxu0 0.0
  %1358 = vmatpush1.msra.mxu0 %v164
  %1359 = vmatprep.subr.mxu0 0.0
  %1360 = vmatpush1.msra.mxu0 %v165
  %1361 = vmatprep.subr.mxu0 0.0
  %1362 = vmatpush1.msra.mxu0 %v166
  %1363 = vmatprep.subr.mxu0 0.0
  %1364 = vmatpush1.msra.mxu0 %v167
  %1365 = vmatprep.subr.mxu0 0.0
  %1366 = vmatpush1.msra.mxu0 %v168
  %1367 = vmatprep.subr.mxu0 0.0
  %1368 = vmatpush1.msra.mxu0 %v169
  %1369 = vmatprep.subr.mxu0 0.0
  %1370 = vmatpush1.msra.mxu0 %v170
  %1371 = vmatprep.subr.mxu0 0.0
  %1372 = vmatpush1.msra.mxu0 %v171
  %1373 = vmatprep.subr.mxu0 0.0
  %1374 = vmatpush1.msra.mxu0 %v172
  %1375 = vmatprep.subr.mxu0 0.0
  %1376 = vmatpush1.msra.mxu0 %v173
  %1377 = vmatprep.subr.mxu0 0.0
  %1378 = vmatpush1.msra.mxu0 %v174
  %1379 = vmatprep.subr.mxu0 0.0
  %1380 = vmatpush1.msra.mxu0 %v175
  %1381 = vmatprep.subr.mxu0 0.0
  %1382 = vmatpush1.msra.mxu0 %v176
  %1383 = vmatprep.subr.mxu0 0.0
  %1384 = vmatpush1.msra.mxu0 %v177
  %1385 = vmatprep.subr.mxu0 0.0
  %1386 = vmatpush1.msra.mxu0 %v178
  %1387 = vmatprep.subr.mxu0 0.0
  %1388 = vmatpush1.msra.mxu0 %v179
  %1389 = vmatprep.subr.mxu0 0.0
  %1390 = vmatpush1.msra.mxu0 %v180
  %1391 = vmatprep.subr.mxu0 0.0
  %1392 = vmatpush1.msra.mxu0 %v181
  %1393 = vmatprep.subr.mxu0 0.0
  %1394 = vmatpush1.msra.mxu0 %v182
  %1395 = vmatprep.subr.mxu0 0.0
  %1396 = vmatpush1.msra.mxu0 %v183
  %1397 = vmatprep.subr.mxu0 0.0
  %1398 = vmatpush1.msra.mxu0 %v184
  %1399 = vmatprep.subr.mxu0 0.0
  %1400 = vmatpush1.msra.mxu0 %v185
  %1401 = vmatprep.subr.mxu0 0.0
  %1402 = vmatpush1.msra.mxu0 %v186
  %1403 = vmatprep.subr.mxu0 0.0
  %1404 = vmatpush1.msra.mxu0 %v187
  %1405 = vmatprep.subr.mxu0 0.0
  %1406 = vmatpush1.msra.mxu0 %v188
  %1407 = vmatprep.subr.mxu0 0.0
  %1408 = vmatpush1.msra.mxu0 %v189
  %1409 = vmatprep.subr.mxu0 0.0
  %1410 = vmatpush1.msra.mxu0 %v190
  %1411 = vmatprep.subr.mxu0 0.0
  %1412 = vmatpush1.msra.mxu0 %v191
  %1413 = vmatprep.subr.mxu0 0.0
  %1414 = vmatpush1.msra.mxu0 %v192
  %1415 = vmatprep.subr.mxu0 0.0
  %1416 = vmatpush1.msra.mxu0 %v193
  %1417 = vmatprep.mubr.f32.mxu0 %v870
  %1418 = vmatmul.mubr.f32.gmra.mrb[0].mxu0 %v862
  %v1419 = vpop.f32.mrb[0].mxu0
  %v1420 = vadd.f32 %v1350, %v1419
  %v1421 = vpop.f32.mrb[0].mxu0
  %1422 = vdwg.mxu0
  %1423 = vmatprep.subr.mxu0 0.0
  %1424 = vmatpush1.msra.mxu0 %v194
  %1425 = vmatprep.subr.mxu0 0.0
  %1426 = vmatpush1.msra.mxu0 %v195
  %1427 = vmatprep.subr.mxu0 0.0
  %1428 = vmatpush1.msra.mxu0 %v196
  %1429 = vmatprep.subr.mxu0 0.0
  %1430 = vmatpush1.msra.mxu0 %v197
  %1431 = vmatprep.subr.mxu0 0.0
  %1432 = vmatpush1.msra.mxu0 %v198
  %1433 = vmatprep.subr.mxu0 0.0
  %1434 = vmatpush1.msra.mxu0 %v199
  %1435 = vmatprep.subr.mxu0 0.0
  %1436 = vmatpush1.msra.mxu0 %v200
  %1437 = vmatprep.subr.mxu0 0.0
  %1438 = vmatpush1.msra.mxu0 %v201
  %1439 = vmatprep.subr.mxu0 0.0
  %1440 = vmatpush1.msra.mxu0 %v202
  %1441 = vmatprep.subr.mxu0 0.0
  %1442 = vmatpush1.msra.mxu0 %v203
  %1443 = vmatprep.subr.mxu0 0.0
  %1444 = vmatpush1.msra.mxu0 %v204
  %1445 = vmatprep.subr.mxu0 0.0
  %1446 = vmatpush1.msra.mxu0 %v205
  %1447 = vmatprep.subr.mxu0 0.0
  %1448 = vmatpush1.msra.mxu0 %v206
  %1449 = vmatprep.subr.mxu0 0.0
  %1450 = vmatpush1.msra.mxu0 %v207
  %1451 = vmatprep.subr.mxu0 0.0
  %1452 = vmatpush1.msra.mxu0 %v208
  %1453 = vmatprep.subr.mxu0 0.0
  %1454 = vmatpush1.msra.mxu0 %v209
  %1455 = vmatprep.subr.mxu0 0.0
  %1456 = vmatpush1.msra.mxu0 %v210
  %1457 = vmatprep.subr.mxu0 0.0
  %1458 = vmatpush1.msra.mxu0 %v211
  %1459 = vmatprep.subr.mxu0 0.0
  %1460 = vmatpush1.msra.mxu0 %v212
  %1461 = vmatprep.subr.mxu0 0.0
  %1462 = vmatpush1.msra.mxu0 %v213
  %1463 = vmatprep.subr.mxu0 0.0
  %1464 = vmatpush1.msra.mxu0 %v214
  %1465 = vmatprep.subr.mxu0 0.0
  %1466 = vmatpush1.msra.mxu0 %v215
  %1467 = vmatprep.subr.mxu0 0.0
  %1468 = vmatpush1.msra.mxu0 %v216
  %1469 = vmatprep.subr.mxu0 0.0
  %1470 = vmatpush1.msra.mxu0 %v217
  %1471 = vmatprep.subr.mxu0 0.0
  %1472 = vmatpush1.msra.mxu0 %v218
  %1473 = vmatprep.subr.mxu0 0.0
  %1474 = vmatpush1.msra.mxu0 %v219
  %1475 = vmatprep.subr.mxu0 0.0
  %1476 = vmatpush1.msra.mxu0 %v220
  %1477 = vmatprep.subr.mxu0 0.0
  %1478 = vmatpush1.msra.mxu0 %v221
  %1479 = vmatprep.subr.mxu0 0.0
  %1480 = vmatpush1.msra.mxu0 %v222
  %1481 = vmatprep.subr.mxu0 0.0
  %1482 = vmatpush1.msra.mxu0 %v223
  %1483 = vmatprep.subr.mxu0 0.0
  %1484 = vmatpush1.msra.mxu0 %v224
  %1485 = vmatprep.subr.mxu0 0.0
  %1486 = vmatpush1.msra.mxu0 %v225
  %1487 = vmatprep.mubr.f32.mxu0 %v871
  %1488 = vmatmul.mubr.f32.gmra.mrb[0].mxu0 %v869
  %v1489 = vpop.f32.mrb[0].mxu0
  %v1490 = vadd.f32 %v1420, %v1489
  %v1491 = vpop.f32.mrb[0].mxu0
  %1492 = vdwg.mxu0
  %1493 = vmatprep.subr.mxu0 0.0
  %1494 = vmatpush1.msra.mxu0 %v226
  %1495 = vmatprep.subr.mxu0 0.0
  %1496 = vmatpush1.msra.mxu0 %v227
  %1497 = vmatprep.subr.mxu0 0.0
  %1498 = vmatpush1.msra.mxu0 %v228
  %1499 = vmatprep.subr.mxu0 0.0
  %1500 = vmatpush1.msra.mxu0 %v229
  %1501 = vmatprep.subr.mxu0 0.0
  %1502 = vmatpush1.msra.mxu0 %v230
  %1503 = vmatprep.subr.mxu0 0.0
  %1504 = vmatpush1.msra.mxu0 %v231
  %1505 = vmatprep.subr.mxu0 0.0
  %1506 = vmatpush1.msra.mxu0 %v232
  %1507 = vmatprep.subr.mxu0 0.0
  %1508 = vmatpush1.msra.mxu0 %v233
  %1509 = vmatprep.subr.mxu0 0.0
  %1510 = vmatpush1.msra.mxu0 %v234
  %1511 = vmatprep.subr.mxu0 0.0
  %1512 = vmatpush1.msra.mxu0 %v235
  %1513 = vmatprep.subr.mxu0 0.0
  %1514 = vmatpush1.msra.mxu0 %v236
  %1515 = vmatprep.subr.mxu0 0.0
  %1516 = vmatpush1.msra.mxu0 %v237
  %1517 = vmatprep.subr.mxu0 0.0
  %1518 = vmatpush1.msra.mxu0 %v238
  %1519 = vmatprep.subr.mxu0 0.0
  %1520 = vmatpush1.msra.mxu0 %v239
  %1521 = vmatprep.subr.mxu0 0.0
  %1522 = vmatpush1.msra.mxu0 %v240
  %1523 = vmatprep.subr.mxu0 0.0
  %1524 = vmatpush1.msra.mxu0 %v241
  %1525 = vmatprep.subr.mxu0 0.0
  %1526 = vmatpush1.msra.mxu0 %v242
  %1527 = vmatprep.subr.mxu0 0.0
  %1528 = vmatpush1.msra.mxu0 %v243
  %1529 = vmatprep.subr.mxu0 0.0
  %1530 = vmatpush1.msra.mxu0 %v244
  %1531 = vmatprep.subr.mxu0 0.0
  %1532 = vmatpush1.msra.mxu0 %v245
  %1533 = vmatprep.subr.mxu0 0.0
  %1534 = vmatpush1.msra.mxu0 %v246
  %1535 = vmatprep.subr.mxu0 0.0
  %1536 = vmatpush1.msra.mxu0 %v247
  %1537 = vmatprep.subr.mxu0 0.0
  %1538 = vmatpush1.msra.mxu0 %v248
  %1539 = vmatprep.subr.mxu0 0.0
  %1540 = vmatpush1.msra.mxu0 %v249
  %1541 = vmatprep.subr.mxu0 0.0
  %1542 = vmatpush1.msra.mxu0 %v250
  %1543 = vmatprep.subr.mxu0 0.0
  %1544 = vmatpush1.msra.mxu0 %v251
  %1545 = vmatprep.subr.mxu0 0.0
  %1546 = vmatpush1.msra.mxu0 %v252
  %1547 = vmatprep.subr.mxu0 0.0
  %1548 = vmatpush1.msra.mxu0 %v253
  %1549 = vmatprep.subr.mxu0 0.0
  %1550 = vmatpush1.msra.mxu0 %v254
  %1551 = vmatprep.subr.mxu0 0.0
  %1552 = vmatpush1.msra.mxu0 %v255
  %1553 = vmatprep.subr.mxu0 0.0
  %1554 = vmatpush1.msra.mxu0 %v256
  %1555 = vmatprep.subr.mxu0 0.0
  %1556 = vmatpush1.msra.mxu0 %v257
  %1557 = vmatprep.mubr.f32.mxu0 %v887
  %1558 = vmatmul.mubr.f32.gmra.mrb[0].mxu0 %v879
  %v1559 = vpop.f32.mrb[0].mxu0
  %v1560 = vadd.f32 %v1490, %v1559
  %v1561 = vpop.f32.mrb[0].mxu0
  %1562 = vdwg.mxu0
  %1563 = vmatprep.subr.mxu0 0.0
  %1564 = vmatpush1.msra.mxu0 %v258
  %1565 = vmatprep.subr.mxu0 0.0
  %1566 = vmatpush1.msra.mxu0 %v259
  %1567 = vmatprep.subr.mxu0 0.0
  %1568 = vmatpush1.msra.mxu0 %v260
  %1569 = vmatprep.subr.mxu0 0.0
  %1570 = vmatpush1.msra.mxu0 %v261
  %1571 = vmatprep.subr.mxu0 0.0
  %1572 = vmatpush1.msra.mxu0 %v262
  %1573 = vmatprep.subr.mxu0 0.0
  %1574 = vmatpush1.msra.mxu0 %v263
  %1575 = vmatprep.subr.mxu0 0.0
  %1576 = vmatpush1.msra.mxu0 %v264
  %1577 = vmatprep.subr.mxu0 0.0
  %1578 = vmatpush1.msra.mxu0 %v265
  %1579 = vmatprep.subr.mxu0 0.0
  %1580 = vmatpush1.msra.mxu0 %v266
  %1581 = vmatprep.subr.mxu0 0.0
  %1582 = vmatpush1.msra.mxu0 %v267
  %1583 = vmatprep.subr.mxu0 0.0
  %1584 = vmatpush1.msra.mxu0 %v268
  %1585 = vmatprep.subr.mxu0 0.0
  %1586 = vmatpush1.msra.mxu0 %v269
  %1587 = vmatprep.subr.mxu0 0.0
  %1588 = vmatpush1.msra.mxu0 %v270
  %1589 = vmatprep.subr.mxu0 0.0
  %1590 = vmatpush1.msra.mxu0 %v271
  %1591 = vmatprep.subr.mxu0 0.0
  %1592 = vmatpush1.msra.mxu0 %v272
  %1593 = vmatprep.subr.mxu0 0.0
  %1594 = vmatpush1.msra.mxu0 %v273
  %1595 = vmatprep.subr.mxu0 0.0
  %1596 = vmatpush1.msra.mxu0 %v274
  %1597 = vmatprep.subr.mxu0 0.0
  %1598 = vmatpush1.msra.mxu0 %v275
  %1599 = vmatprep.subr.mxu0 0.0
  %1600 = vmatpush1.msra.mxu0 %v276
  %1601 = vmatprep.subr.mxu0 0.0
  %1602 = vmatpush1.msra.mxu0 %v277
  %1603 = vmatprep.subr.mxu0 0.0
  %1604 = vmatpush1.msra.mxu0 %v278
  %1605 = vmatprep.subr.mxu0 0.0
  %1606 = vmatpush1.msra.mxu0 %v279
  %1607 = vmatprep.subr.mxu0 0.0
  %1608 = vmatpush1.msra.mxu0 %v280
  %1609 = vmatprep.subr.mxu0 0.0
  %1610 = vmatpush1.msra.mxu0 %v281
  %1611 = vmatprep.subr.mxu0 0.0
  %1612 = vmatpush1.msra.mxu0 %v282
  %1613 = vmatprep.subr.mxu0 0.0
  %1614 = vmatpush1.msra.mxu0 %v283
  %1615 = vmatprep.subr.mxu0 0.0
  %1616 = vmatpush1.msra.mxu0 %v284
  %1617 = vmatprep.subr.mxu0 0.0
  %1618 = vmatpush1.msra.mxu0 %v285
  %1619 = vmatprep.subr.mxu0 0.0
  %1620 = vmatpush1.msra.mxu0 %v286
  %1621 = vmatprep.subr.mxu0 0.0
  %1622 = vmatpush1.msra.mxu0 %v287
  %1623 = vmatprep.subr.mxu0 0.0
  %1624 = vmatpush1.msra.mxu0 %v288
  %1625 = vmatprep.subr.mxu0 0.0
  %1626 = vmatpush1.msra.mxu0 %v289
  %1627 = vmatprep.mubr.f32.mxu0 %v888
  %1628 = vmatmul.mubr.f32.gmra.mrb[0].mxu0 %v886
  %v1629 = vpop.f32.mrb[0].mxu0
  %v1630 = vadd.f32 %v1560, %v1629
  %v1631 = vpop.f32.mrb[0].mxu0
  %1632 = vdwg.mxu0
  %1633 = vmatprep.subr.mxu0 0.0
  %1634 = vmatpush1.msra.mxu0 %v290
  %1635 = vmatprep.subr.mxu0 0.0
  %1636 = vmatpush1.msra.mxu0 %v291
  %1637 = vmatprep.subr.mxu0 0.0
  %1638 = vmatpush1.msra.mxu0 %v292
  %1639 = vmatprep.subr.mxu0 0.0
  %1640 = vmatpush1.msra.mxu0 %v293
  %1641 = vmatprep.subr.mxu0 0.0
  %1642 = vmatpush1.msra.mxu0 %v294
  %1643 = vmatprep.subr.mxu0 0.0
  %1644 = vmatpush1.msra.mxu0 %v295
  %1645 = vmatprep.subr.mxu0 0.0
  %1646 = vmatpush1.msra.mxu0 %v296
  %1647 = vmatprep.subr.mxu0 0.0
  %1648 = vmatpush1.msra.mxu0 %v297
  %1649 = vmatprep.subr.mxu0 0.0
  %1650 = vmatpush1.msra.mxu0 %v298
  %1651 = vmatprep.subr.mxu0 0.0
  %1652 = vmatpush1.msra.mxu0 %v299
  %1653 = vmatprep.subr.mxu0 0.0
  %1654 = vmatpush1.msra.mxu0 %v300
  %1655 = vmatprep.subr.mxu0 0.0
  %1656 = vmatpush1.msra.mxu0 %v301
  %1657 = vmatprep.subr.mxu0 0.0
  %1658 = vmatpush1.msra.mxu0 %v302
  %1659 = vmatprep.subr.mxu0 0.0
  %1660 = vmatpush1.msra.mxu0 %v303
  %1661 = vmatprep.subr.mxu0 0.0
  %1662 = vmatpush1.msra.mxu0 %v304
  %1663 = vmatprep.subr.mxu0 0.0
  %1664 = vmatpush1.msra.mxu0 %v305
  %1665 = vmatprep.subr.mxu0 0.0
  %1666 = vmatpush1.msra.mxu0 %v306
  %1667 = vmatprep.subr.mxu0 0.0
  %1668 = vmatpush1.msra.mxu0 %v307
  %1669 = vmatprep.subr.mxu0 0.0
  %1670 = vmatpush1.msra.mxu0 %v308
  %1671 = vmatprep.subr.mxu0 0.0
  %1672 = vmatpush1.msra.mxu0 %v309
  %1673 = vmatprep.subr.mxu0 0.0
  %1674 = vmatpush1.msra.mxu0 %v310
  %1675 = vmatprep.subr.mxu0 0.0
  %1676 = vmatpush1.msra.mxu0 %v311
  %1677 = vmatprep.subr.mxu0 0.0
  %1678 = vmatpush1.msra.mxu0 %v312
  %1679 = vmatprep.subr.mxu0 0.0
  %1680 = vmatpush1.msra.mxu0 %v313
  %1681 = vmatprep.subr.mxu0 0.0
  %1682 = vmatpush1.msra.mxu0 %v314
  %1683 = vmatprep.subr.mxu0 0.0
  %1684 = vmatpush1.msra.mxu0 %v315
  %1685 = vmatprep.subr.mxu0 0.0
  %1686 = vmatpush1.msra.mxu0 %v316
  %1687 = vmatprep.subr.mxu0 0.0
  %1688 = vmatpush1.msra.mxu0 %v317
  %1689 = vmatprep.subr.mxu0 0.0
  %1690 = vmatpush1.msra.mxu0 %v318
  %1691 = vmatprep.subr.mxu0 0.0
  %1692 = vmatpush1.msra.mxu0 %v319
  %1693 = vmatprep.subr.mxu0 0.0
  %1694 = vmatpush1.msra.mxu0 %v320
  %1695 = vmatprep.subr.mxu0 0.0
  %1696 = vmatpush1.msra.mxu0 %v321
  %1697 = vmatprep.mubr.f32.mxu0 %v904
  %1698 = vmatmul.mubr.f32.gmra.mrb[0].mxu0 %v896
  %v1699 = vpop.f32.mrb[0].mxu0
  %v1700 = vadd.f32 %v1630, %v1699
  %v1701 = vpop.f32.mrb[0].mxu0
  %1702 = vdwg.mxu0
  %1703 = vmatprep.subr.mxu0 0.0
  %1704 = vmatpush1.msra.mxu0 %v322
  %1705 = vmatprep.subr.mxu0 0.0
  %1706 = vmatpush1.msra.mxu0 %v323
  %1707 = vmatprep.subr.mxu0 0.0
  %1708 = vmatpush1.msra.mxu0 %v324
  %1709 = vmatprep.subr.mxu0 0.0
  %1710 = vmatpush1.msra.mxu0 %v325
  %1711 = vmatprep.subr.mxu0 0.0
  %1712 = vmatpush1.msra.mxu0 %v326
  %1713 = vmatprep.subr.mxu0 0.0
  %1714 = vmatpush1.msra.mxu0 %v327
  %1715 = vmatprep.subr.mxu0 0.0
  %1716 = vmatpush1.msra.mxu0 %v328
  %1717 = vmatprep.subr.mxu0 0.0
  %1718 = vmatpush1.msra.mxu0 %v329
  %1719 = vmatprep.subr.mxu0 0.0
  %1720 = vmatpush1.msra.mxu0 %v330
  %1721 = vmatprep.subr.mxu0 0.0
  %1722 = vmatpush1.msra.mxu0 %v331
  %1723 = vmatprep.subr.mxu0 0.0
  %1724 = vmatpush1.msra.mxu0 %v332
  %1725 = vmatprep.subr.mxu0 0.0
  %1726 = vmatpush1.msra.mxu0 %v333
  %1727 = vmatprep.subr.mxu0 0.0
  %1728 = vmatpush1.msra.mxu0 %v334
  %1729 = vmatprep.subr.mxu0 0.0
  %1730 = vmatpush1.msra.mxu0 %v335
  %1731 = vmatprep.subr.mxu0 0.0
  %1732 = vmatpush1.msra.mxu0 %v336
  %1733 = vmatprep.subr.mxu0 0.0
  %1734 = vmatpush1.msra.mxu0 %v337
  %1735 = vmatprep.subr.mxu0 0.0
  %1736 = vmatpush1.msra.mxu0 %v338
  %1737 = vmatprep.subr.mxu0 0.0
  %1738 = vmatpush1.msra.mxu0 %v339
  %1739 = vmatprep.subr.mxu0 0.0
  %1740 = vmatpush1.msra.mxu0 %v340
  %1741 = vmatprep.subr.mxu0 0.0
  %1742 = vmatpush1.msra.mxu0 %v341
  %1743 = vmatprep.subr.mxu0 0.0
  %1744 = vmatpush1.msra.mxu0 %v342
  %1745 = vmatprep.subr.mxu0 0.0
  %1746 = vmatpush1.msra.mxu0 %v343
  %1747 = vmatprep.subr.mxu0 0.0
  %1748 = vmatpush1.msra.mxu0 %v344
  %1749 = vmatprep.subr.mxu0 0.0
  %1750 = vmatpush1.msra.mxu0 %v345
  %1751 = vmatprep.subr.mxu0 0.0
  %1752 = vmatpush1.msra.mxu0 %v346
  %1753 = vmatprep.subr.mxu0 0.0
  %1754 = vmatpush1.msra.mxu0 %v347
  %1755 = vmatprep.subr.mxu0 0.0
  %1756 = vmatpush1.msra.mxu0 %v348
  %1757 = vmatprep.subr.mxu0 0.0
  %1758 = vmatpush1.msra.mxu0 %v349
  %1759 = vmatprep.subr.mxu0 0.0
  %1760 = vmatpush1.msra.mxu0 %v350
  %1761 = vmatprep.subr.mxu0 0.0
  %1762 = vmatpush1.msra.mxu0 %v351
  %1763 = vmatprep.subr.mxu0 0.0
  %1764 = vmatpush1.msra.mxu0 %v352
  %1765 = vmatprep.subr.mxu0 0.0
  %1766 = vmatpush1.msra.mxu0 %v353
  %1767 = vmatprep.mubr.f32.mxu0 %v905
  %1768 = vmatmul.mubr.f32.gmra.mrb[0].mxu0 %v903
  %v1769 = vpop.f32.mrb[0].mxu0
  %v1770 = vadd.f32 %v1700, %v1769
  %v1771 = vpop.f32.mrb[0].mxu0
  %1772 = vdwg.mxu0
  %1773 = vmatprep.subr.mxu0 0.0
  %1774 = vmatpush1.msra.mxu0 %v354
  %1775 = vmatprep.subr.mxu0 0.0
  %1776 = vmatpush1.msra.mxu0 %v355
  %1777 = vmatprep.subr.mxu0 0.0
  %1778 = vmatpush1.msra.mxu0 %v356
  %1779 = vmatprep.subr.mxu0 0.0
  %1780 = vmatpush1.msra.mxu0 %v357
  %1781 = vmatprep.subr.mxu0 0.0
  %1782 = vmatpush1.msra.mxu0 %v358
  %1783 = vmatprep.subr.mxu0 0.0
  %1784 = vmatpush1.msra.mxu0 %v359
  %1785 = vmatprep.subr.mxu0 0.0
  %1786 = vmatpush1.msra.mxu0 %v360
  %1787 = vmatprep.subr.mxu0 0.0
  %1788 = vmatpush1.msra.mxu0 %v361
  %1789 = vmatprep.subr.mxu0 0.0
  %1790 = vmatpush1.msra.mxu0 %v362
  %1791 = vmatprep.subr.mxu0 0.0
  %1792 = vmatpush1.msra.mxu0 %v363
  %1793 = vmatprep.subr.mxu0 0.0
  %1794 = vmatpush1.msra.mxu0 %v364
  %1795 = vmatprep.subr.mxu0 0.0
  %1796 = vmatpush1.msra.mxu0 %v365
  %1797 = vmatprep.subr.mxu0 0.0
  %1798 = vmatpush1.msra.mxu0 %v366
  %1799 = vmatprep.subr.mxu0 0.0
  %1800 = vmatpush1.msra.mxu0 %v367
  %1801 = vmatprep.subr.mxu0 0.0
  %1802 = vmatpush1.msra.mxu0 %v368
  %1803 = vmatprep.subr.mxu0 0.0
  %1804 = vmatpush1.msra.mxu0 %v369
  %1805 = vmatprep.subr.mxu0 0.0
  %1806 = vmatpush1.msra.mxu0 %v370
  %1807 = vmatprep.subr.mxu0 0.0
  %1808 = vmatpush1.msra.mxu0 %v371
  %1809 = vmatprep.subr.mxu0 0.0
  %1810 = vmatpush1.msra.mxu0 %v372
  %1811 = vmatprep.subr.mxu0 0.0
  %1812 = vmatpush1.msra.mxu0 %v373
  %1813 = vmatprep.subr.mxu0 0.0
  %1814 = vmatpush1.msra.mxu0 %v374
  %1815 = vmatprep.subr.mxu0 0.0
  %1816 = vmatpush1.msra.mxu0 %v375
  %1817 = vmatprep.subr.mxu0 0.0
  %1818 = vmatpush1.msra.mxu0 %v376
  %1819 = vmatprep.subr.mxu0 0.0
  %1820 = vmatpush1.msra.mxu0 %v377
  %1821 = vmatprep.subr.mxu0 0.0
  %1822 = vmatpush1.msra.mxu0 %v378
  %1823 = vmatprep.subr.mxu0 0.0
  %1824 = vmatpush1.msra.mxu0 %v379
  %1825 = vmatprep.subr.mxu0 0.0
  %1826 = vmatpush1.msra.mxu0 %v380
  %1827 = vmatprep.subr.mxu0 0.0
  %1828 = vmatpush1.msra.mxu0 %v381
  %1829 = vmatprep.subr.mxu0 0.0
  %1830 = vmatpush1.msra.mxu0 %v382
  %1831 = vmatprep.subr.mxu0 0.0
  %1832 = vmatpush1.msra.mxu0 %v383
  %1833 = vmatprep.subr.mxu0 0.0
  %1834 = vmatpush1.msra.mxu0 %v384
  %1835 = vmatprep.subr.mxu0 0.0
  %1836 = vmatpush1.msra.mxu0 %v385
  %1837 = vmatprep.mubr.f32.mxu0 %v921
  %1838 = vmatmul.mubr.f32.gmra.mrb[0].mxu0 %v913
  %v1839 = vpop.f32.mrb[0].mxu0
  %v1840 = vadd.f32 %v1770, %v1839
  %v1841 = vpop.f32.mrb[0].mxu0
  %1842 = vdwg.mxu0
  %1843 = vmatprep.subr.mxu0 0.0
  %1844 = vmatpush1.msra.mxu0 %v386
  %1845 = vmatprep.subr.mxu0 0.0
  %1846 = vmatpush1.msra.mxu0 %v387
  %1847 = vmatprep.subr.mxu0 0.0
  %1848 = vmatpush1.msra.mxu0 %v388
  %1849 = vmatprep.subr.mxu0 0.0
  %1850 = vmatpush1.msra.mxu0 %v389
  %1851 = vmatprep.subr.mxu0 0.0
  %1852 = vmatpush1.msra.mxu0 %v390
  %1853 = vmatprep.subr.mxu0 0.0
  %1854 = vmatpush1.msra.mxu0 %v391
  %1855 = vmatprep.subr.mxu0 0.0
  %1856 = vmatpush1.msra.mxu0 %v392
  %1857 = vmatprep.subr.mxu0 0.0
  %1858 = vmatpush1.msra.mxu0 %v393
  %1859 = vmatprep.subr.mxu0 0.0
  %1860 = vmatpush1.msra.mxu0 %v394
  %1861 = vmatprep.subr.mxu0 0.0
  %1862 = vmatpush1.msra.mxu0 %v395
  %1863 = vmatprep.subr.mxu0 0.0
  %1864 = vmatpush1.msra.mxu0 %v396
  %1865 = vmatprep.subr.mxu0 0.0
  %1866 = vmatpush1.msra.mxu0 %v397
  %1867 = vmatprep.subr.mxu0 0.0
  %1868 = vmatpush1.msra.mxu0 %v398
  %1869 = vmatprep.subr.mxu0 0.0
  %1870 = vmatpush1.msra.mxu0 %v399
  %1871 = vmatprep.subr.mxu0 0.0
  %1872 = vmatpush1.msra.mxu0 %v400
  %1873 = vmatprep.subr.mxu0 0.0
  %1874 = vmatpush1.msra.mxu0 %v401
  %1875 = vmatprep.subr.mxu0 0.0
  %1876 = vmatpush1.msra.mxu0 %v402
  %1877 = vmatprep.subr.mxu0 0.0
  %1878 = vmatpush1.msra.mxu0 %v403
  %1879 = vmatprep.subr.mxu0 0.0
  %1880 = vmatpush1.msra.mxu0 %v404
  %1881 = vmatprep.subr.mxu0 0.0
  %1882 = vmatpush1.msra.mxu0 %v405
  %1883 = vmatprep.subr.mxu0 0.0
  %1884 = vmatpush1.msra.mxu0 %v406
  %1885 = vmatprep.subr.mxu0 0.0
  %1886 = vmatpush1.msra.mxu0 %v407
  %1887 = vmatprep.subr.mxu0 0.0
  %1888 = vmatpush1.msra.mxu0 %v408
  %1889 = vmatprep.subr.mxu0 0.0
  %1890 = vmatpush1.msra.mxu0 %v409
  %1891 = vmatprep.subr.mxu0 0.0
  %1892 = vmatpush1.msra.mxu0 %v410
  %1893 = vmatprep.subr.mxu0 0.0
  %1894 = vmatpush1.msra.mxu0 %v411
  %1895 = vmatprep.subr.mxu0 0.0
  %1896 = vmatpush1.msra.mxu0 %v412
  %1897 = vmatprep.subr.mxu0 0.0
  %1898 = vmatpush1.msra.mxu0 %v413
  %1899 = vmatprep.subr.mxu0 0.0
  %1900 = vmatpush1.msra.mxu0 %v414
  %1901 = vmatprep.subr.mxu0 0.0
  %1902 = vmatpush1.msra.mxu0 %v415
  %1903 = vmatprep.subr.mxu0 0.0
  %1904 = vmatpush1.msra.mxu0 %v416
  %1905 = vmatprep.subr.mxu0 0.0
  %1906 = vmatpush1.msra.mxu0 %v417
  %1907 = vmatprep.mubr.f32.mxu0 %v922
  %1908 = vmatmul.mubr.f32.gmra.mrb[0].mxu0 %v920
  %v1909 = vpop.f32.mrb[0].mxu0
  %v1910 = vadd.f32 %v1840, %v1909
  %v1911 = vpop.f32.mrb[0].mxu0
  %1912 = vdwg.mxu0
  %1913 = vmatprep.subr.mxu0 0.0
  %1914 = vmatpush1.msra.mxu0 %v418
  %1915 = vmatprep.subr.mxu0 0.0
  %1916 = vmatpush1.msra.mxu0 %v419
  %1917 = vmatprep.subr.mxu0 0.0
  %1918 = vmatpush1.msra.mxu0 %v420
  %1919 = vmatprep.subr.mxu0 0.0
  %1920 = vmatpush1.msra.mxu0 %v421
  %1921 = vmatprep.subr.mxu0 0.0
  %1922 = vmatpush1.msra.mxu0 %v422
  %1923 = vmatprep.subr.mxu0 0.0
  %1924 = vmatpush1.msra.mxu0 %v423
  %1925 = vmatprep.subr.mxu0 0.0
  %1926 = vmatpush1.msra.mxu0 %v424
  %1927 = vmatprep.subr.mxu0 0.0
  %1928 = vmatpush1.msra.mxu0 %v425
  %1929 = vmatprep.subr.mxu0 0.0
  %1930 = vmatpush1.msra.mxu0 %v426
  %1931 = vmatprep.subr.mxu0 0.0
  %1932 = vmatpush1.msra.mxu0 %v427
  %1933 = vmatprep.subr.mxu0 0.0
  %1934 = vmatpush1.msra.mxu0 %v428
  %1935 = vmatprep.subr.mxu0 0.0
  %1936 = vmatpush1.msra.mxu0 %v429
  %1937 = vmatprep.subr.mxu0 0.0
  %1938 = vmatpush1.msra.mxu0 %v430
  %1939 = vmatprep.subr.mxu0 0.0
  %1940 = vmatpush1.msra.mxu0 %v431
  %1941 = vmatprep.subr.mxu0 0.0
  %1942 = vmatpush1.msra.mxu0 %v432
  %1943 = vmatprep.subr.mxu0 0.0
  %1944 = vmatpush1.msra.mxu0 %v433
  %1945 = vmatprep.subr.mxu0 0.0
  %1946 = vmatpush1.msra.mxu0 %v434
  %1947 = vmatprep.subr.mxu0 0.0
  %1948 = vmatpush1.msra.mxu0 %v435
  %1949 = vmatprep.subr.mxu0 0.0
  %1950 = vmatpush1.msra.mxu0 %v436
  %1951 = vmatprep.subr.mxu0 0.0
  %1952 = vmatpush1.msra.mxu0 %v437
  %1953 = vmatprep.subr.mxu0 0.0
  %1954 = vmatpush1.msra.mxu0 %v438
  %1955 = vmatprep.subr.mxu0 0.0
  %1956 = vmatpush1.msra.mxu0 %v439
  %1957 = vmatprep.subr.mxu0 0.0
  %1958 = vmatpush1.msra.mxu0 %v440
  %1959 = vmatprep.subr.mxu0 0.0
  %1960 = vmatpush1.msra.mxu0 %v441
  %1961 = vmatprep.subr.mxu0 0.0
  %1962 = vmatpush1.msra.mxu0 %v442
  %1963 = vmatprep.subr.mxu0 0.0
  %1964 = vmatpush1.msra.mxu0 %v443
  %1965 = vmatprep.subr.mxu0 0.0
  %1966 = vmatpush1.msra.mxu0 %v444
  %1967 = vmatprep.subr.mxu0 0.0
  %1968 = vmatpush1.msra.mxu0 %v445
  %1969 = vmatprep.subr.mxu0 0.0
  %1970 = vmatpush1.msra.mxu0 %v446
  %1971 = vmatprep.subr.mxu0 0.0
  %1972 = vmatpush1.msra.mxu0 %v447
  %1973 = vmatprep.subr.mxu0 0.0
  %1974 = vmatpush1.msra.mxu0 %v448
  %1975 = vmatprep.subr.mxu0 0.0
  %1976 = vmatpush1.msra.mxu0 %v449
  %1977 = vmatprep.mubr.f32.mxu0 %v938
  %1978 = vmatmul.mubr.f32.gmra.mrb[0].mxu0 %v930
  %v1979 = vpop.f32.mrb[0].mxu0
  %v1980 = vadd.f32 %v1910, %v1979
  %v1981 = vpop.f32.mrb[0].mxu0
  %1982 = vdwg.mxu0
  %1983 = vmatprep.subr.mxu0 0.0
  %1984 = vmatpush1.msra.mxu0 %v450
  %1985 = vmatprep.subr.mxu0 0.0
  %1986 = vmatpush1.msra.mxu0 %v451
  %1987 = vmatprep.subr.mxu0 0.0
  %1988 = vmatpush1.msra.mxu0 %v452
  %1989 = vmatprep.subr.mxu0 0.0
  %1990 = vmatpush1.msra.mxu0 %v453
  %1991 = vmatprep.subr.mxu0 0.0
  %1992 = vmatpush1.msra.mxu0 %v454
  %1993 = vmatprep.subr.mxu0 0.0
  %1994 = vmatpush1.msra.mxu0 %v455
  %1995 = vmatprep.subr.mxu0 0.0
  %1996 = vmatpush1.msra.mxu0 %v456
  %1997 = vmatprep.subr.mxu0 0.0
  %1998 = vmatpush1.msra.mxu0 %v457
  %1999 = vmatprep.subr.mxu0 0.0
  %2000 = vmatpush1.msra.mxu0 %v458
  %2001 = vmatprep.subr.mxu0 0.0
  %2002 = vmatpush1.msra.mxu0 %v459
  %2003 = vmatprep.subr.mxu0 0.0
  %2004 = vmatpush1.msra.mxu0 %v460
  %2005 = vmatprep.subr.mxu0 0.0
  %2006 = vmatpush1.msra.mxu0 %v461
  %2007 = vmatprep.subr.mxu0 0.0
  %2008 = vmatpush1.msra.mxu0 %v462
  %2009 = vmatprep.subr.mxu0 0.0
  %2010 = vmatpush1.msra.mxu0 %v463
  %2011 = vmatprep.subr.mxu0 0.0
  %2012 = vmatpush1.msra.mxu0 %v464
  %2013 = vmatprep.subr.mxu0 0.0
  %2014 = vmatpush1.msra.mxu0 %v465
  %2015 = vmatprep.subr.mxu0 0.0
  %2016 = vmatpush1.msra.mxu0 %v466
  %2017 = vmatprep.subr.mxu0 0.0
  %2018 = vmatpush1.msra.mxu0 %v467
  %2019 = vmatprep.subr.mxu0 0.0
  %2020 = vmatpush1.msra.mxu0 %v468
  %2021 = vmatprep.subr.mxu0 0.0
  %2022 = vmatpush1.msra.mxu0 %v469
  %2023 = vmatprep.subr.mxu0 0.0
  %2024 = vmatpush1.msra.mxu0 %v470
  %2025 = vmatprep.subr.mxu0 0.0
  %2026 = vmatpush1.msra.mxu0 %v471
  %2027 = vmatprep.subr.mxu0 0.0
  %2028 = vmatpush1.msra.mxu0 %v472
  %2029 = vmatprep.subr.mxu0 0.0
  %2030 = vmatpush1.msra.mxu0 %v473
  %2031 = vmatprep.subr.mxu0 0.0
  %2032 = vmatpush1.msra.mxu0 %v474
  %2033 = vmatprep.subr.mxu0 0.0
  %2034 = vmatpush1.msra.mxu0 %v475
  %2035 = vmatprep.subr.mxu0 0.0
  %2036 = vmatpush1.msra.mxu0 %v476
  %2037 = vmatprep.subr.mxu0 0.0
  %2038 = vmatpush1.msra.mxu0 %v477
  %2039 = vmatprep.subr.mxu0 0.0
  %2040 = vmatpush1.msra.mxu0 %v478
  %2041 = vmatprep.subr.mxu0 0.0
  %2042 = vmatpush1.msra.mxu0 %v479
  %2043 = vmatprep.subr.mxu0 0.0
  %2044 = vmatpush1.msra.mxu0 %v480
  %2045 = vmatprep.subr.mxu0 0.0
  %2046 = vmatpush1.msra.mxu0 %v481
  %2047 = vmatprep.mubr.f32.mxu0 %v939
  %2048 = vmatmul.mubr.f32.gmra.mrb[0].mxu0 %v937
  %v2049 = vpop.f32.mrb[0].mxu0
  %v2050 = vadd.f32 %v1980, %v2049
  %v2051 = vpop.f32.mrb[0].mxu0
  %2052 = vdwg.mxu0
  %2053 = vmatprep.subr.mxu0 0.0
  %2054 = vmatpush1.msra.mxu0 %v482
  %2055 = vmatprep.subr.mxu0 0.0
  %2056 = vmatpush1.msra.mxu0 %v483
  %2057 = vmatprep.subr.mxu0 0.0
  %2058 = vmatpush1.msra.mxu0 %v484
  %2059 = vmatprep.subr.mxu0 0.0
  %2060 = vmatpush1.msra.mxu0 %v485
  %2061 = vmatprep.subr.mxu0 0.0
  %2062 = vmatpush1.msra.mxu0 %v486
  %2063 = vmatprep.subr.mxu0 0.0
  %2064 = vmatpush1.msra.mxu0 %v487
  %2065 = vmatprep.subr.mxu0 0.0
  %2066 = vmatpush1.msra.mxu0 %v488
  %2067 = vmatprep.subr.mxu0 0.0
  %2068 = vmatpush1.msra.mxu0 %v489
  %2069 = vmatprep.subr.mxu0 0.0
  %2070 = vmatpush1.msra.mxu0 %v490
  %2071 = vmatprep.subr.mxu0 0.0
  %2072 = vmatpush1.msra.mxu0 %v491
  %2073 = vmatprep.subr.mxu0 0.0
  %2074 = vmatpush1.msra.mxu0 %v492
  %2075 = vmatprep.subr.mxu0 0.0
  %2076 = vmatpush1.msra.mxu0 %v493
  %2077 = vmatprep.subr.mxu0 0.0
  %2078 = vmatpush1.msra.mxu0 %v494
  %2079 = vmatprep.subr.mxu0 0.0
  %2080 = vmatpush1.msra.mxu0 %v495
  %2081 = vmatprep.subr.mxu0 0.0
  %2082 = vmatpush1.msra.mxu0 %v496
  %2083 = vmatprep.subr.mxu0 0.0
  %2084 = vmatpush1.msra.mxu0 %v497
  %2085 = vmatprep.subr.mxu0 0.0
  %2086 = vmatpush1.msra.mxu0 %v498
  %2087 = vmatprep.subr.mxu0 0.0
  %2088 = vmatpush1.msra.mxu0 %v499
  %2089 = vmatprep.subr.mxu0 0.0
  %2090 = vmatpush1.msra.mxu0 %v500
  %2091 = vmatprep.subr.mxu0 0.0
  %2092 = vmatpush1.msra.mxu0 %v501
  %2093 = vmatprep.subr.mxu0 0.0
  %2094 = vmatpush1.msra.mxu0 %v502
  %2095 = vmatprep.subr.mxu0 0.0
  %2096 = vmatpush1.msra.mxu0 %v503
  %2097 = vmatprep.subr.mxu0 0.0
  %2098 = vmatpush1.msra.mxu0 %v504
  %2099 = vmatprep.subr.mxu0 0.0
  %2100 = vmatpush1.msra.mxu0 %v505
  %2101 = vmatprep.subr.mxu0 0.0
  %2102 = vmatpush1.msra.mxu0 %v506
  %2103 = vmatprep.subr.mxu0 0.0
  %2104 = vmatpush1.msra.mxu0 %v507
  %2105 = vmatprep.subr.mxu0 0.0
  %2106 = vmatpush1.msra.mxu0 %v508
  %2107 = vmatprep.subr.mxu0 0.0
  %2108 = vmatpush1.msra.mxu0 %v509
  %2109 = vmatprep.subr.mxu0 0.0
  %2110 = vmatpush1.msra.mxu0 %v510
  %2111 = vmatprep.subr.mxu0 0.0
  %2112 = vmatpush1.msra.mxu0 %v511
  %2113 = vmatprep.subr.mxu0 0.0
  %2114 = vmatpush1.msra.mxu0 %v512
  %2115 = vmatprep.subr.mxu0 0.0
  %2116 = vmatpush1.msra.mxu0 %v513
  %2117 = vmatprep.mubr.f32.mxu0 %v955
  %2118 = vmatmul.mubr.f32.gmra.mrb[0].mxu0 %v947
  %v2119 = vpop.f32.mrb[0].mxu0
  %v2120 = vadd.f32 %v2050, %v2119
  %v2121 = vpop.f32.mrb[0].mxu0
  %2122 = vdwg.mxu0
  %2123 = vmatprep.subr.mxu0 0.0
  %2124 = vmatpush1.msra.mxu0 %v514
  %2125 = vmatprep.subr.mxu0 0.0
  %2126 = vmatpush1.msra.mxu0 %v515
  %2127 = vmatprep.subr.mxu0 0.0
  %2128 = vmatpush1.msra.mxu0 %v516
  %2129 = vmatprep.subr.mxu0 0.0
  %2130 = vmatpush1.msra.mxu0 %v517
  %2131 = vmatprep.subr.mxu0 0.0
  %2132 = vmatpush1.msra.mxu0 %v518
  %2133 = vmatprep.subr.mxu0 0.0
  %2134 = vmatpush1.msra.mxu0 %v519
  %2135 = vmatprep.subr.mxu0 0.0
  %2136 = vmatpush1.msra.mxu0 %v520
  %2137 = vmatprep.subr.mxu0 0.0
  %2138 = vmatpush1.msra.mxu0 %v521
  %2139 = vmatprep.subr.mxu0 0.0
  %2140 = vmatpush1.msra.mxu0 %v522
  %2141 = vmatprep.subr.mxu0 0.0
  %2142 = vmatpush1.msra.mxu0 %v523
  %2143 = vmatprep.subr.mxu0 0.0
  %2144 = vmatpush1.msra.mxu0 %v524
  %2145 = vmatprep.subr.mxu0 0.0
  %2146 = vmatpush1.msra.mxu0 %v525
  %2147 = vmatprep.subr.mxu0 0.0
  %2148 = vmatpush1.msra.mxu0 %v526
  %2149 = vmatprep.subr.mxu0 0.0
  %2150 = vmatpush1.msra.mxu0 %v527
  %2151 = vmatprep.subr.mxu0 0.0
  %2152 = vmatpush1.msra.mxu0 %v528
  %2153 = vmatprep.subr.mxu0 0.0
  %2154 = vmatpush1.msra.mxu0 %v529
  %2155 = vmatprep.subr.mxu0 0.0
  %2156 = vmatpush1.msra.mxu0 %v530
  %2157 = vmatprep.subr.mxu0 0.0
  %2158 = vmatpush1.msra.mxu0 %v531
  %2159 = vmatprep.subr.mxu0 0.0
  %2160 = vmatpush1.msra.mxu0 %v532
  %2161 = vmatprep.subr.mxu0 0.0
  %2162 = vmatpush1.msra.mxu0 %v533
  %2163 = vmatprep.subr.mxu0 0.0
  %2164 = vmatpush1.msra.mxu0 %v534
  %2165 = vmatprep.subr.mxu0 0.0
  %2166 = vmatpush1.msra.mxu0 %v535
  %2167 = vmatprep.subr.mxu0 0.0
  %2168 = vmatpush1.msra.mxu0 %v536
  %2169 = vmatprep.subr.mxu0 0.0
  %2170 = vmatpush1.msra.mxu0 %v537
  %2171 = vmatprep.subr.mxu0 0.0
  %2172 = vmatpush1.msra.mxu0 %v538
  %2173 = vmatprep.subr.mxu0 0.0
  %2174 = vmatpush1.msra.mxu0 %v539
  %2175 = vmatprep.subr.mxu0 0.0
  %2176 = vmatpush1.msra.mxu0 %v540
  %2177 = vmatprep.subr.mxu0 0.0
  %2178 = vmatpush1.msra.mxu0 %v541
  %2179 = vmatprep.subr.mxu0 0.0
  %2180 = vmatpush1.msra.mxu0 %v542
  %2181 = vmatprep.subr.mxu0 0.0
  %2182 = vmatpush1.msra.mxu0 %v543
  %2183 = vmatprep.subr.mxu0 0.0
  %2184 = vmatpush1.msra.mxu0 %v544
  %2185 = vmatprep.subr.mxu0 0.0
  %2186 = vmatpush1.msra.mxu0 %v545
  %2187 = vmatprep.mubr.f32.mxu0 %v956
  %2188 = vmatmul.mubr.f32.gmra.mrb[0].mxu0 %v954
  %v2189 = vpop.f32.mrb[0].mxu0
  %v2190 = vadd.f32 %v2120, %v2189
  %v2191 = vpop.f32.mrb[0].mxu0
  %2192 = vdwg.mxu0
  %2193 = vmatprep.subr.mxu0 0.0
  %2194 = vmatpush1.msra.mxu0 %v546
  %2195 = vmatprep.subr.mxu0 0.0
  %2196 = vmatpush1.msra.mxu0 %v547
  %2197 = vmatprep.subr.mxu0 0.0
  %2198 = vmatpush1.msra.mxu0 %v548
  %2199 = vmatprep.subr.mxu0 0.0
  %2200 = vmatpush1.msra.mxu0 %v549
  %2201 = vmatprep.subr.mxu0 0.0
  %2202 = vmatpush1.msra.mxu0 %v550
  %2203 = vmatprep.subr.mxu0 0.0
  %2204 = vmatpush1.msra.mxu0 %v551
  %2205 = vmatprep.subr.mxu0 0.0
  %2206 = vmatpush1.msra.mxu0 %v552
  %2207 = vmatprep.subr.mxu0 0.0
  %2208 = vmatpush1.msra.mxu0 %v553
  %2209 = vmatprep.subr.mxu0 0.0
  %2210 = vmatpush1.msra.mxu0 %v554
  %2211 = vmatprep.subr.mxu0 0.0
  %2212 = vmatpush1.msra.mxu0 %v555
  %2213 = vmatprep.subr.mxu0 0.0
  %2214 = vmatpush1.msra.mxu0 %v556
  %2215 = vmatprep.subr.mxu0 0.0
  %2216 = vmatpush1.msra.mxu0 %v557
  %2217 = vmatprep.subr.mxu0 0.0
  %2218 = vmatpush1.msra.mxu0 %v558
  %2219 = vmatprep.subr.mxu0 0.0
  %2220 = vmatpush1.msra.mxu0 %v559
  %2221 = vmatprep.subr.mxu0 0.0
  %2222 = vmatpush1.msra.mxu0 %v560
  %2223 = vmatprep.subr.mxu0 0.0
  %2224 = vmatpush1.msra.mxu0 %v561
  %2225 = vmatprep.subr.mxu0 0.0
  %2226 = vmatpush1.msra.mxu0 %v562
  %2227 = vmatprep.subr.mxu0 0.0
  %2228 = vmatpush1.msra.mxu0 %v563
  %2229 = vmatprep.subr.mxu0 0.0
  %2230 = vmatpush1.msra.mxu0 %v564
  %2231 = vmatprep.subr.mxu0 0.0
  %2232 = vmatpush1.msra.mxu0 %v565
  %2233 = vmatprep.subr.mxu0 0.0
  %2234 = vmatpush1.msra.mxu0 %v566
  %2235 = vmatprep.subr.mxu0 0.0
  %2236 = vmatpush1.msra.mxu0 %v567
  %2237 = vmatprep.subr.mxu0 0.0
  %2238 = vmatpush1.msra.mxu0 %v568
  %2239 = vmatprep.subr.mxu0 0.0
  %2240 = vmatpush1.msra.mxu0 %v569
  %2241 = vmatprep.subr.mxu0 0.0
  %2242 = vmatpush1.msra.mxu0 %v570
  %2243 = vmatprep.subr.mxu0 0.0
  %2244 = vmatpush1.msra.mxu0 %v571
  %2245 = vmatprep.subr.mxu0 0.0
  %2246 = vmatpush1.msra.mxu0 %v572
  %2247 = vmatprep.subr.mxu0 0.0
  %2248 = vmatpush1.msra.mxu0 %v573
  %2249 = vmatprep.subr.mxu0 0.0
  %2250 = vmatpush1.msra.mxu0 %v574
  %2251 = vmatprep.subr.mxu0 0.0
  %2252 = vmatpush1.msra.mxu0 %v575
  %2253 = vmatprep.subr.mxu0 0.0
  %2254 = vmatpush1.msra.mxu0 %v576
  %2255 = vmatprep.subr.mxu0 0.0
  %2256 = vmatpush1.msra.mxu0 %v577
  %2257 = vmatprep.mubr.f32.mxu0 %v972
  %2258 = vmatmul.mubr.f32.gmra.mrb[0].mxu0 %v964
  %v2259 = vpop.f32.mrb[0].mxu0
  %v2260 = vadd.f32 %v2190, %v2259
  %v2261 = vpop.f32.mrb[0].mxu0
  %2262 = vdwg.mxu0
  %2263 = vmatprep.subr.mxu0 0.0
  %2264 = vmatpush1.msra.mxu0 %v578
  %2265 = vmatprep.subr.mxu0 0.0
  %2266 = vmatpush1.msra.mxu0 %v579
  %2267 = vmatprep.subr.mxu0 0.0
  %2268 = vmatpush1.msra.mxu0 %v580
  %2269 = vmatprep.subr.mxu0 0.0
  %2270 = vmatpush1.msra.mxu0 %v581
  %2271 = vmatprep.subr.mxu0 0.0
  %2272 = vmatpush1.msra.mxu0 %v582
  %2273 = vmatprep.subr.mxu0 0.0
  %2274 = vmatpush1.msra.mxu0 %v583
  %2275 = vmatprep.subr.mxu0 0.0
  %2276 = vmatpush1.msra.mxu0 %v584
  %2277 = vmatprep.subr.mxu0 0.0
  %2278 = vmatpush1.msra.mxu0 %v585
  %2279 = vmatprep.subr.mxu0 0.0
  %2280 = vmatpush1.msra.mxu0 %v586
  %2281 = vmatprep.subr.mxu0 0.0
  %2282 = vmatpush1.msra.mxu0 %v587
  %2283 = vmatprep.subr.mxu0 0.0
  %2284 = vmatpush1.msra.mxu0 %v588
  %2285 = vmatprep.subr.mxu0 0.0
  %2286 = vmatpush1.msra.mxu0 %v589
  %2287 = vmatprep.subr.mxu0 0.0
  %2288 = vmatpush1.msra.mxu0 %v590
  %2289 = vmatprep.subr.mxu0 0.0
  %2290 = vmatpush1.msra.mxu0 %v591
  %2291 = vmatprep.subr.mxu0 0.0
  %2292 = vmatpush1.msra.mxu0 %v592
  %2293 = vmatprep.subr.mxu0 0.0
  %2294 = vmatpush1.msra.mxu0 %v593
  %2295 = vmatprep.subr.mxu0 0.0
  %2296 = vmatpush1.msra.mxu0 %v594
  %2297 = vmatprep.subr.mxu0 0.0
  %2298 = vmatpush1.msra.mxu0 %v595
  %2299 = vmatprep.subr.mxu0 0.0
  %2300 = vmatpush1.msra.mxu0 %v596
  %2301 = vmatprep.subr.mxu0 0.0
  %2302 = vmatpush1.msra.mxu0 %v597
  %2303 = vmatprep.subr.mxu0 0.0
  %2304 = vmatpush1.msra.mxu0 %v598
  %2305 = vmatprep.subr.mxu0 0.0
  %2306 = vmatpush1.msra.mxu0 %v599
  %2307 = vmatprep.subr.mxu0 0.0
  %2308 = vmatpush1.msra.mxu0 %v600
  %2309 = vmatprep.subr.mxu0 0.0
  %2310 = vmatpush1.msra.mxu0 %v601
  %2311 = vmatprep.subr.mxu0 0.0
  %2312 = vmatpush1.msra.mxu0 %v602
  %2313 = vmatprep.subr.mxu0 0.0
  %2314 = vmatpush1.msra.mxu0 %v603
  %2315 = vmatprep.subr.mxu0 0.0
  %2316 = vmatpush1.msra.mxu0 %v604
  %2317 = vmatprep.subr.mxu0 0.0
  %2318 = vmatpush1.msra.mxu0 %v605
  %2319 = vmatprep.subr.mxu0 0.0
  %2320 = vmatpush1.msra.mxu0 %v606
  %2321 = vmatprep.subr.mxu0 0.0
  %2322 = vmatpush1.msra.mxu0 %v607
  %2323 = vmatprep.subr.mxu0 0.0
  %2324 = vmatpush1.msra.mxu0 %v608
  %2325 = vmatprep.subr.mxu0 0.0
  %2326 = vmatpush1.msra.mxu0 %v609
  %2327 = vmatprep.mubr.f32.mxu0 %v973
  %2328 = vmatmul.mubr.f32.gmra.mrb[0].mxu0 %v971
  %v2329 = vpop.f32.mrb[0].mxu0
  %v2330 = vadd.f32 %v2260, %v2329
  %v2331 = vpop.f32.mrb[0].mxu0
  %2332 = vdwg.mxu0
  %2333 = vmatprep.subr.mxu0 0.0
  %2334 = vmatpush1.msra.mxu0 %v610
  %2335 = vmatprep.subr.mxu0 0.0
  %2336 = vmatpush1.msra.mxu0 %v611
  %2337 = vmatprep.subr.mxu0 0.0
  %2338 = vmatpush1.msra.mxu0 %v612
  %2339 = vmatprep.subr.mxu0 0.0
  %2340 = vmatpush1.msra.mxu0 %v613
  %2341 = vmatprep.subr.mxu0 0.0
  %2342 = vmatpush1.msra.mxu0 %v614
  %2343 = vmatprep.subr.mxu0 0.0
  %2344 = vmatpush1.msra.mxu0 %v615
  %2345 = vmatprep.subr.mxu0 0.0
  %2346 = vmatpush1.msra.mxu0 %v616
  %2347 = vmatprep.subr.mxu0 0.0
  %2348 = vmatpush1.msra.mxu0 %v617
  %2349 = vmatprep.subr.mxu0 0.0
  %2350 = vmatpush1.msra.mxu0 %v618
  %2351 = vmatprep.subr.mxu0 0.0
  %2352 = vmatpush1.msra.mxu0 %v619
  %2353 = vmatprep.subr.mxu0 0.0
  %2354 = vmatpush1.msra.mxu0 %v620
  %2355 = vmatprep.subr.mxu0 0.0
  %2356 = vmatpush1.msra.mxu0 %v621
  %2357 = vmatprep.subr.mxu0 0.0
  %2358 = vmatpush1.msra.mxu0 %v622
  %2359 = vmatprep.subr.mxu0 0.0
  %2360 = vmatpush1.msra.mxu0 %v623
  %2361 = vmatprep.subr.mxu0 0.0
  %2362 = vmatpush1.msra.mxu0 %v624
  %2363 = vmatprep.subr.mxu0 0.0
  %2364 = vmatpush1.msra.mxu0 %v625
  %2365 = vmatprep.subr.mxu0 0.0
  %2366 = vmatpush1.msra.mxu0 %v626
  %2367 = vmatprep.subr.mxu0 0.0
  %2368 = vmatpush1.msra.mxu0 %v627
  %2369 = vmatprep.subr.mxu0 0.0
  %2370 = vmatpush1.msra.mxu0 %v628
  %2371 = vmatprep.subr.mxu0 0.0
  %2372 = vmatpush1.msra.mxu0 %v629
  %2373 = vmatprep.subr.mxu0 0.0
  %2374 = vmatpush1.msra.mxu0 %v630
  %2375 = vmatprep.subr.mxu0 0.0
  %2376 = vmatpush1.msra.mxu0 %v631
  %2377 = vmatprep.subr.mxu0 0.0
  %2378 = vmatpush1.msra.mxu0 %v632
  %2379 = vmatprep.subr.mxu0 0.0
  %2380 = vmatpush1.msra.mxu0 %v633
  %2381 = vmatprep.subr.mxu0 0.0
  %2382 = vmatpush1.msra.mxu0 %v634
  %2383 = vmatprep.subr.mxu0 0.0
  %2384 = vmatpush1.msra.mxu0 %v635
  %2385 = vmatprep.subr.mxu0 0.0
  %2386 = vmatpush1.msra.mxu0 %v636
  %2387 = vmatprep.subr.mxu0 0.0
  %2388 = vmatpush1.msra.mxu0 %v637
  %2389 = vmatprep.subr.mxu0 0.0
  %2390 = vmatpush1.msra.mxu0 %v638
  %2391 = vmatprep.subr.mxu0 0.0
  %2392 = vmatpush1.msra.mxu0 %v639
  %2393 = vmatprep.subr.mxu0 0.0
  %2394 = vmatpush1.msra.mxu0 %v640
  %2395 = vmatprep.subr.mxu0 0.0
  %2396 = vmatpush1.msra.mxu0 %v641
  %2397 = vmatprep.mubr.f32.mxu0 %v989
  %2398 = vmatmul.mubr.f32.gmra.mrb[0].mxu0 %v981
  %v2399 = vpop.f32.mrb[0].mxu0
  %v2400 = vadd.f32 %v2330, %v2399
  %v2401 = vpop.f32.mrb[0].mxu0
  %2402 = vdwg.mxu0
  %2403 = vmatprep.subr.mxu0 0.0
  %2404 = vmatpush1.msra.mxu0 %v642
  %2405 = vmatprep.subr.mxu0 0.0
  %2406 = vmatpush1.msra.mxu0 %v643
  %2407 = vmatprep.subr.mxu0 0.0
  %2408 = vmatpush1.msra.mxu0 %v644
  %2409 = vmatprep.subr.mxu0 0.0
  %2410 = vmatpush1.msra.mxu0 %v645
  %2411 = vmatprep.subr.mxu0 0.0
  %2412 = vmatpush1.msra.mxu0 %v646
  %2413 = vmatprep.subr.mxu0 0.0
  %2414 = vmatpush1.msra.mxu0 %v647
  %2415 = vmatprep.subr.mxu0 0.0
  %2416 = vmatpush1.msra.mxu0 %v648
  %2417 = vmatprep.subr.mxu0 0.0
  %2418 = vmatpush1.msra.mxu0 %v649
  %2419 = vmatprep.subr.mxu0 0.0
  %2420 = vmatpush1.msra.mxu0 %v650
  %2421 = vmatprep.subr.mxu0 0.0
  %2422 = vmatpush1.msra.mxu0 %v651
  %2423 = vmatprep.subr.mxu0 0.0
  %2424 = vmatpush1.msra.mxu0 %v652
  %2425 = vmatprep.subr.mxu0 0.0
  %2426 = vmatpush1.msra.mxu0 %v653
  %2427 = vmatprep.subr.mxu0 0.0
  %2428 = vmatpush1.msra.mxu0 %v654
  %2429 = vmatprep.subr.mxu0 0.0
  %2430 = vmatpush1.msra.mxu0 %v655
  %2431 = vmatprep.subr.mxu0 0.0
  %2432 = vmatpush1.msra.mxu0 %v656
  %2433 = vmatprep.subr.mxu0 0.0
  %2434 = vmatpush1.msra.mxu0 %v657
  %2435 = vmatprep.subr.mxu0 0.0
  %2436 = vmatpush1.msra.mxu0 %v658
  %2437 = vmatprep.subr.mxu0 0.0
  %2438 = vmatpush1.msra.mxu0 %v659
  %2439 = vmatprep.subr.mxu0 0.0
  %2440 = vmatpush1.msra.mxu0 %v660
  %2441 = vmatprep.subr.mxu0 0.0
  %2442 = vmatpush1.msra.mxu0 %v661
  %2443 = vmatprep.subr.mxu0 0.0
  %2444 = vmatpush1.msra.mxu0 %v662
  %2445 = vmatprep.subr.mxu0 0.0
  %2446 = vmatpush1.msra.mxu0 %v663
  %2447 = vmatprep.subr.mxu0 0.0
  %2448 = vmatpush1.msra.mxu0 %v664
  %2449 = vmatprep.subr.mxu0 0.0
  %2450 = vmatpush1.msra.mxu0 %v665
  %2451 = vmatprep.subr.mxu0 0.0
  %2452 = vmatpush1.msra.mxu0 %v666
  %2453 = vmatprep.subr.mxu0 0.0
  %2454 = vmatpush1.msra.mxu0 %v667
  %2455 = vmatprep.subr.mxu0 0.0
  %2456 = vmatpush1.msra.mxu0 %v668
  %2457 = vmatprep.subr.mxu0 0.0
  %2458 = vmatpush1.msra.mxu0 %v669
  %2459 = vmatprep.subr.mxu0 0.0
  %2460 = vmatpush1.msra.mxu0 %v670
  %2461 = vmatprep.subr.mxu0 0.0
  %2462 = vmatpush1.msra.mxu0 %v671
  %2463 = vmatprep.subr.mxu0 0.0
  %2464 = vmatpush1.msra.mxu0 %v672
  %2465 = vmatprep.subr.mxu0 0.0
  %2466 = vmatpush1.msra.mxu0 %v673
  %2467 = vmatprep.mubr.f32.mxu0 %v990
  %2468 = vmatmul.mubr.f32.gmra.mrb[0].mxu0 %v988
  %v2469 = vpop.f32.mrb[0].mxu0
  %v2470 = vadd.f32 %v2400, %v2469
  %v2471 = vpop.f32.mrb[0].mxu0
  %2472 = vdwg.mxu0
  %2473 = vmatprep.subr.mxu0 0.0
  %2474 = vmatpush1.msra.mxu0 %v674
  %2475 = vmatprep.subr.mxu0 0.0
  %2476 = vmatpush1.msra.mxu0 %v675
  %2477 = vmatprep.subr.mxu0 0.0
  %2478 = vmatpush1.msra.mxu0 %v676
  %2479 = vmatprep.subr.mxu0 0.0
  %2480 = vmatpush1.msra.mxu0 %v677
  %2481 = vmatprep.subr.mxu0 0.0
  %2482 = vmatpush1.msra.mxu0 %v678
  %2483 = vmatprep.subr.mxu0 0.0
  %2484 = vmatpush1.msra.mxu0 %v679
  %2485 = vmatprep.subr.mxu0 0.0
  %2486 = vmatpush1.msra.mxu0 %v680
  %2487 = vmatprep.subr.mxu0 0.0
  %2488 = vmatpush1.msra.mxu0 %v681
  %2489 = vmatprep.subr.mxu0 0.0
  %2490 = vmatpush1.msra.mxu0 %v682
  %2491 = vmatprep.subr.mxu0 0.0
  %2492 = vmatpush1.msra.mxu0 %v683
  %2493 = vmatprep.subr.mxu0 0.0
  %2494 = vmatpush1.msra.mxu0 %v684
  %2495 = vmatprep.subr.mxu0 0.0
  %2496 = vmatpush1.msra.mxu0 %v685
  %2497 = vmatprep.subr.mxu0 0.0
  %2498 = vmatpush1.msra.mxu0 %v686
  %2499 = vmatprep.subr.mxu0 0.0
  %2500 = vmatpush1.msra.mxu0 %v687
  %2501 = vmatprep.subr.mxu0 0.0
  %2502 = vmatpush1.msra.mxu0 %v688
  %2503 = vmatprep.subr.mxu0 0.0
  %2504 = vmatpush1.msra.mxu0 %v689
  %2505 = vmatprep.subr.mxu0 0.0
  %2506 = vmatpush1.msra.mxu0 %v690
  %2507 = vmatprep.subr.mxu0 0.0
  %2508 = vmatpush1.msra.mxu0 %v691
  %2509 = vmatprep.subr.mxu0 0.0
  %2510 = vmatpush1.msra.mxu0 %v692
  %2511 = vmatprep.subr.mxu0 0.0
  %2512 = vmatpush1.msra.mxu0 %v693
  %2513 = vmatprep.subr.mxu0 0.0
  %2514 = vmatpush1.msra.mxu0 %v694
  %2515 = vmatprep.subr.mxu0 0.0
  %2516 = vmatpush1.msra.mxu0 %v695
  %2517 = vmatprep.subr.mxu0 0.0
  %2518 = vmatpush1.msra.mxu0 %v696
  %2519 = vmatprep.subr.mxu0 0.0
  %2520 = vmatpush1.msra.mxu0 %v697
  %2521 = vmatprep.subr.mxu0 0.0
  %2522 = vmatpush1.msra.mxu0 %v698
  %2523 = vmatprep.subr.mxu0 0.0
  %2524 = vmatpush1.msra.mxu0 %v699
  %2525 = vmatprep.subr.mxu0 0.0
  %2526 = vmatpush1.msra.mxu0 %v700
  %2527 = vmatprep.subr.mxu0 0.0
  %2528 = vmatpush1.msra.mxu0 %v701
  %2529 = vmatprep.subr.mxu0 0.0
  %2530 = vmatpush1.msra.mxu0 %v702
  %2531 = vmatprep.subr.mxu0 0.0
  %2532 = vmatpush1.msra.mxu0 %v703
  %2533 = vmatprep.subr.mxu0 0.0
  %2534 = vmatpush1.msra.mxu0 %v704
  %2535 = vmatprep.subr.mxu0 0.0
  %2536 = vmatpush1.msra.mxu0 %v705
  %2537 = vmatprep.mubr.f32.mxu0 %v1006
  %2538 = vmatmul.mubr.f32.gmra.mrb[0].mxu0 %v998
  %v2539 = vpop.f32.mrb[0].mxu0
  %v2540 = vadd.f32 %v2470, %v2539
  %v2541 = vpop.f32.mrb[0].mxu0
  %2542 = vdwg.mxu0
  %2543 = vmatprep.subr.mxu0 0.0
  %2544 = vmatpush1.msra.mxu0 %v706
  %2545 = vmatprep.subr.mxu0 0.0
  %2546 = vmatpush1.msra.mxu0 %v707
  %2547 = vmatprep.subr.mxu0 0.0
  %2548 = vmatpush1.msra.mxu0 %v708
  %2549 = vmatprep.subr.mxu0 0.0
  %2550 = vmatpush1.msra.mxu0 %v709
  %2551 = vmatprep.subr.mxu0 0.0
  %2552 = vmatpush1.msra.mxu0 %v710
  %2553 = vmatprep.subr.mxu0 0.0
  %2554 = vmatpush1.msra.mxu0 %v711
  %2555 = vmatprep.subr.mxu0 0.0
  %2556 = vmatpush1.msra.mxu0 %v712
  %2557 = vmatprep.subr.mxu0 0.0
  %2558 = vmatpush1.msra.mxu0 %v713
  %2559 = vmatprep.subr.mxu0 0.0
  %2560 = vmatpush1.msra.mxu0 %v714
  %2561 = vmatprep.subr.mxu0 0.0
  %2562 = vmatpush1.msra.mxu0 %v715
  %2563 = vmatprep.subr.mxu0 0.0
  %2564 = vmatpush1.msra.mxu0 %v716
  %2565 = vmatprep.subr.mxu0 0.0
  %2566 = vmatpush1.msra.mxu0 %v717
  %2567 = vmatprep.subr.mxu0 0.0
  %2568 = vmatpush1.msra.mxu0 %v718
  %2569 = vmatprep.subr.mxu0 0.0
  %2570 = vmatpush1.msra.mxu0 %v719
  %2571 = vmatprep.subr.mxu0 0.0
  %2572 = vmatpush1.msra.mxu0 %v720
  %2573 = vmatprep.subr.mxu0 0.0
  %2574 = vmatpush1.msra.mxu0 %v721
  %2575 = vmatprep.subr.mxu0 0.0
  %2576 = vmatpush1.msra.mxu0 %v722
  %2577 = vmatprep.subr.mxu0 0.0
  %2578 = vmatpush1.msra.mxu0 %v723
  %2579 = vmatprep.subr.mxu0 0.0
  %2580 = vmatpush1.msra.mxu0 %v724
  %2581 = vmatprep.subr.mxu0 0.0
  %2582 = vmatpush1.msra.mxu0 %v725
  %2583 = vmatprep.subr.mxu0 0.0
  %2584 = vmatpush1.msra.mxu0 %v726
  %2585 = vmatprep.subr.mxu0 0.0
  %2586 = vmatpush1.msra.mxu0 %v727
  %2587 = vmatprep.subr.mxu0 0.0
  %2588 = vmatpush1.msra.mxu0 %v728
  %2589 = vmatprep.subr.mxu0 0.0
  %2590 = vmatpush1.msra.mxu0 %v729
  %2591 = vmatprep.subr.mxu0 0.0
  %2592 = vmatpush1.msra.mxu0 %v730
  %2593 = vmatprep.subr.mxu0 0.0
  %2594 = vmatpush1.msra.mxu0 %v731
  %2595 = vmatprep.subr.mxu0 0.0
  %2596 = vmatpush1.msra.mxu0 %v732
  %2597 = vmatprep.subr.mxu0 0.0
  %2598 = vmatpush1.msra.mxu0 %v733
  %2599 = vmatprep.subr.mxu0 0.0
  %2600 = vmatpush1.msra.mxu0 %v734
  %2601 = vmatprep.subr.mxu0 0.0
  %2602 = vmatpush1.msra.mxu0 %v735
  %2603 = vmatprep.subr.mxu0 0.0
  %2604 = vmatpush1.msra.mxu0 %v736
  %2605 = vmatprep.subr.mxu0 0.0
  %2606 = vmatpush1.msra.mxu0 %v737
  %2607 = vmatprep.mubr.f32.mxu0 %v1007
  %2608 = vmatmul.mubr.f32.gmra.mrb[0].mxu0 %v1005
  %v2609 = vpop.f32.mrb[0].mxu0
  %v2610 = vadd.f32 %v2540, %v2609
  %v2611 = vpop.f32.mrb[0].mxu0
  %2612 = vdwg.mxu0
  %2613 = vmatprep.subr.mxu0 0.0
  %2614 = vmatpush1.msra.mxu0 %v738
  %2615 = vmatprep.subr.mxu0 0.0
  %2616 = vmatpush1.msra.mxu0 %v739
  %2617 = vmatprep.subr.mxu0 0.0
  %2618 = vmatpush1.msra.mxu0 %v740
  %2619 = vmatprep.subr.mxu0 0.0
  %2620 = vmatpush1.msra.mxu0 %v741
  %2621 = vmatprep.subr.mxu0 0.0
  %2622 = vmatpush1.msra.mxu0 %v742
  %2623 = vmatprep.subr.mxu0 0.0
  %2624 = vmatpush1.msra.mxu0 %v743
  %2625 = vmatprep.subr.mxu0 0.0
  %2626 = vmatpush1.msra.mxu0 %v744
  %2627 = vmatprep.subr.mxu0 0.0
  %2628 = vmatpush1.msra.mxu0 %v745
  %2629 = vmatprep.subr.mxu0 0.0
  %2630 = vmatpush1.msra.mxu0 %v746
  %2631 = vmatprep.subr.mxu0 0.0
  %2632 = vmatpush1.msra.mxu0 %v747
  %2633 = vmatprep.subr.mxu0 0.0
  %2634 = vmatpush1.msra.mxu0 %v748
  %2635 = vmatprep.subr.mxu0 0.0
  %2636 = vmatpush1.msra.mxu0 %v749
  %2637 = vmatprep.subr.mxu0 0.0
  %2638 = vmatpush1.msra.mxu0 %v750
  %2639 = vmatprep.subr.mxu0 0.0
  %2640 = vmatpush1.msra.mxu0 %v751
  %2641 = vmatprep.subr.mxu0 0.0
  %2642 = vmatpush1.msra.mxu0 %v752
  %2643 = vmatprep.subr.mxu0 0.0
  %2644 = vmatpush1.msra.mxu0 %v753
  %2645 = vmatprep.subr.mxu0 0.0
  %2646 = vmatpush1.msra.mxu0 %v754
  %2647 = vmatprep.subr.mxu0 0.0
  %2648 = vmatpush1.msra.mxu0 %v755
  %2649 = vmatprep.subr.mxu0 0.0
  %2650 = vmatpush1.msra.mxu0 %v756
  %2651 = vmatprep.subr.mxu0 0.0
  %2652 = vmatpush1.msra.mxu0 %v757
  %2653 = vmatprep.subr.mxu0 0.0
  %2654 = vmatpush1.msra.mxu0 %v758
  %2655 = vmatprep.subr.mxu0 0.0
  %2656 = vmatpush1.msra.mxu0 %v759
  %2657 = vmatprep.subr.mxu0 0.0
  %2658 = vmatpush1.msra.mxu0 %v760
  %2659 = vmatprep.subr.mxu0 0.0
  %2660 = vmatpush1.msra.mxu0 %v761
  %2661 = vmatprep.subr.mxu0 0.0
  %2662 = vmatpush1.msra.mxu0 %v762
  %2663 = vmatprep.subr.mxu0 0.0
  %2664 = vmatpush1.msra.mxu0 %v763
  %2665 = vmatprep.subr.mxu0 0.0
  %2666 = vmatpush1.msra.mxu0 %v764
  %2667 = vmatprep.subr.mxu0 0.0
  %2668 = vmatpush1.msra.mxu0 %v765
  %2669 = vmatprep.subr.mxu0 0.0
  %2670 = vmatpush1.msra.mxu0 %v766
  %2671 = vmatprep.subr.mxu0 0.0
  %2672 = vmatpush1.msra.mxu0 %v767
  %2673 = vmatprep.subr.mxu0 0.0
  %2674 = vmatpush1.msra.mxu0 %v768
  %2675 = vmatprep.subr.mxu0 0.0
  %2676 = vmatpush1.msra.mxu0 %v769
  %2677 = vmatprep.mubr.f32.mxu0 %v1023
  %2678 = vmatmul.mubr.f32.gmra.mrb[0].mxu0 %v1015
  %v2679 = vpop.f32.mrb[0].mxu0
  %v2680 = vadd.f32 %v2610, %v2679
  %v2681 = vpop.f32.mrb[0].mxu0
  %2682 = vdwg.mxu0
  %2683 = vmatprep.subr.mxu0 0.0
  %2684 = vmatpush1.msra.mxu0 %v770
  %2685 = vmatprep.subr.mxu0 0.0
  %2686 = vmatpush1.msra.mxu0 %v771
  %2687 = vmatprep.subr.mxu0 0.0
  %2688 = vmatpush1.msra.mxu0 %v772
  %2689 = vmatprep.subr.mxu0 0.0
  %2690 = vmatpush1.msra.mxu0 %v773
  %2691 = vmatprep.subr.mxu0 0.0
  %2692 = vmatpush1.msra.mxu0 %v774
  %2693 = vmatprep.subr.mxu0 0.0
  %2694 = vmatpush1.msra.mxu0 %v775
  %2695 = vmatprep.subr.mxu0 0.0
  %2696 = vmatpush1.msra.mxu0 %v776
  %2697 = vmatprep.subr.mxu0 0.0
  %2698 = vmatpush1.msra.mxu0 %v777
  %2699 = vmatprep.subr.mxu0 0.0
  %2700 = vmatpush1.msra.mxu0 %v778
  %2701 = vmatprep.subr.mxu0 0.0
  %2702 = vmatpush1.msra.mxu0 %v779
  %2703 = vmatprep.subr.mxu0 0.0
  %2704 = vmatpush1.msra.mxu0 %v780
  %2705 = vmatprep.subr.mxu0 0.0
  %2706 = vmatpush1.msra.mxu0 %v781
  %2707 = vmatprep.subr.mxu0 0.0
  %2708 = vmatpush1.msra.mxu0 %v782
  %2709 = vmatprep.subr.mxu0 0.0
  %2710 = vmatpush1.msra.mxu0 %v783
  %2711 = vmatprep.subr.mxu0 0.0
  %2712 = vmatpush1.msra.mxu0 %v784
  %2713 = vmatprep.subr.mxu0 0.0
  %2714 = vmatpush1.msra.mxu0 %v785
  %2715 = vmatprep.subr.mxu0 0.0
  %2716 = vmatpush1.msra.mxu0 %v786
  %2717 = vmatprep.subr.mxu0 0.0
  %2718 = vmatpush1.msra.mxu0 %v787
  %2719 = vmatprep.subr.mxu0 0.0
  %2720 = vmatpush1.msra.mxu0 %v788
  %2721 = vmatprep.subr.mxu0 0.0
  %2722 = vmatpush1.msra.mxu0 %v789
  %2723 = vmatprep.subr.mxu0 0.0
  %2724 = vmatpush1.msra.mxu0 %v790
  %2725 = vmatprep.subr.mxu0 0.0
  %2726 = vmatpush1.msra.mxu0 %v791
  %2727 = vmatprep.subr.mxu0 0.0
  %2728 = vmatpush1.msra.mxu0 %v792
  %2729 = vmatprep.subr.mxu0 0.0
  %2730 = vmatpush1.msra.mxu0 %v793
  %2731 = vmatprep.subr.mxu0 0.0
  %2732 = vmatpush1.msra.mxu0 %v794
  %2733 = vmatprep.subr.mxu0 0.0
  %2734 = vmatpush1.msra.mxu0 %v795
  %2735 = vmatprep.subr.mxu0 0.0
  %2736 = vmatpush1.msra.mxu0 %v796
  %2737 = vmatprep.subr.mxu0 0.0
  %2738 = vmatpush1.msra.mxu0 %v797
  %2739 = vmatprep.subr.mxu0 0.0
  %2740 = vmatpush1.msra.mxu0 %v798
  %2741 = vmatprep.subr.mxu0 0.0
  %2742 = vmatpush1.msra.mxu0 %v799
  %2743 = vmatprep.subr.mxu0 0.0
  %2744 = vmatpush1.msra.mxu0 %v800
  %2745 = vmatprep.subr.mxu0 0.0
  %2746 = vmatpush1.msra.mxu0 %v801
  %2747 = vmatprep.mubr.f32.mxu0 %v1024
  %2748 = vmatmul.mubr.f32.gmra.mrb[0].mxu0 %v1022
  %v2749 = vpop.f32.mrb[0].mxu0
  %v2750 = vadd.f32 %v2680, %v2749
  %v2751 = vpop.f32.mrb[0].mxu0
  %2752 = vdwg.mxu0
  %v2753 = vmax.f32 %v2750, 0.0
  %v2754 = vld [vmem:[%s3] sm:$0xff]
  %v2755 = vld [vmem:[%s3 + $0x8] sm:$0xff]
  %v2756 = vld [vmem:[%s3 + $0x10] sm:$0xff]
  %v2757 = vld [vmem:[%s3 + $0x18] sm:$0xff]
  %v2758 = vld [vmem:[%s3 + $0x20] sm:$0xff]
  %v2759 = vld [vmem:[%s3 + $0x28] sm:$0xff]
  %v2760 = vld [vmem:[%s3 + $0x30] sm:$0x3]
  %v2761 = vld [vmem:[#allocation2] sm:$0x1]
  %v2763 = vlaneseq
  %v2764 = vshrl.u32 %v2763, 7
  %v2765 = vsub.s32 0, %v2764
  %v2766 = vrot.slane %v2761, %v2765
  %vm2768 = vcmask 408576
  %v2770 = vsel %vm2768, %v2753, 0
  %vm2772 = vcmask 1041408
  %v2774 = vsel %vm2772, %v2760, 0
  %2776 = vmatprep.subr.mxu0 0.0
  %2777 = vmatpush1.msra.mxu0 %v2754
  %2778 = vmatprep.subr.mxu0 0.0
  %2779 = vmatpush1.msra.mxu0 %v2755
  %2780 = vmatprep.subr.mxu0 0.0
  %2781 = vmatpush1.msra.mxu0 %v2756
  %2782 = vmatprep.subr.mxu0 0.0
  %2783 = vmatpush1.msra.mxu0 %v2757
  %2784 = vmatprep.subr.mxu0 0.0
  %2785 = vmatpush1.msra.mxu0 %v2758
  %2786 = vmatprep.subr.mxu0 0.0
  %2787 = vmatpush1.msra.mxu0 %v2759
  %2788 = vmatprep.subr.mxu0 0.0
  %2789 = vmatpush1.msra.mxu0 %v2774
  %2790 = vmatprep.subr.mxu0 0.0
  %2791 = vmatpush1.msra.mxu0 0.0
  %2792 = vmatprep.subr.mxu0 0.0
  %2793 = vmatpush1.msra.mxu0 0.0
  %2794 = vmatprep.subr.mxu0 0.0
  %2795 = vmatpush1.msra.mxu0 0.0
  %2796 = vmatprep.subr.mxu0 0.0
  %2797 = vmatpush1.msra.mxu0 0.0
  %2798 = vmatprep.subr.mxu0 0.0
  %2799 = vmatpush1.msra.mxu0 0.0
  %2800 = vmatprep.subr.mxu0 0.0
  %2801 = vmatpush1.msra.mxu0 0.0
  %2802 = vmatprep.subr.mxu0 0.0
  %2803 = vmatpush1.msra.mxu0 0.0
  %2804 = vmatprep.subr.mxu0 0.0
  %2805 = vmatpush1.msra.mxu0 0.0
  %2806 = vmatprep.subr.mxu0 0.0
  %2807 = vmatpush1.msra.mxu0 0.0
  %2808 = vmatprep.subr.mxu0 0.0
  %2809 = vmatpush1.msra.mxu0 0.0
  %2810 = vmatprep.subr.mxu0 0.0
  %2811 = vmatpush1.msra.mxu0 0.0
  %2812 = vmatprep.subr.mxu0 0.0
  %2813 = vmatpush1.msra.mxu0 0.0
  %2814 = vmatprep.subr.mxu0 0.0
  %2815 = vmatpush1.msra.mxu0 0.0
  %2816 = vmatprep.subr.mxu0 0.0
  %2817 = vmatpush1.msra.mxu0 0.0
  %2818 = vmatprep.subr.mxu0 0.0
  %2819 = vmatpush1.msra.mxu0 0.0
  %2820 = vmatprep.subr.mxu0 0.0
  %2821 = vmatpush1.msra.mxu0 0.0
  %2822 = vmatprep.subr.mxu0 0.0
  %2823 = vmatpush1.msra.mxu0 0.0
  %2824 = vmatprep.subr.mxu0 0.0
  %2825 = vmatpush1.msra.mxu0 0.0
  %2826 = vmatprep.subr.mxu0 0.0
  %2827 = vmatpush1.msra.mxu0 0.0
  %2828 = vmatprep.subr.mxu0 0.0
  %2829 = vmatpush1.msra.mxu0 0.0
  %2830 = vmatprep.subr.mxu0 0.0
  %2831 = vmatpush1.msra.mxu0 0.0
  %2832 = vmatprep.subr.mxu0 0.0
  %2833 = vmatpush1.msra.mxu0 0.0
  %2834 = vmatprep.subr.mxu0 0.0
  %2835 = vmatpush1.msra.mxu0 0.0
  %2836 = vmatprep.subr.mxu0 0.0
  %2837 = vmatpush1.msra.mxu0 0.0
  %2838 = vmatprep.subr.mxu0 0.0
  %2839 = vmatpush1.msra.mxu0 0.0
  %2840 = vmatprep.mubr.f32.mxu0 0.0
  %2841 = vmatmul.mubr.f32.gmra.mrb[0].mxu0 %v2770
  %v2842 = vpop.f32.mrb[0].mxu0
  %v2843 = vadd.f32 %v2766, %v2842
  %v2844 = vpop.f32.mrb[0].mxu0
  %2845 = vdwg.mxu0
  %v2846 = vxor.u32 %v2843, 2147483648
  %v2847 = vmul.f32 %v2846, 1.442695
  %v2848 = vpow.pop %v2847
  %v2849 = vadd.f32 %v2848, 1.0
  %v2850 = vrcp.pop %v2849
  %v2851 = vmul.f32 1.0, %v2850
  %vm2852 = vcmask 1024
  %2853 = vst.msk [vmem:[%s5] sm:$0x3] %vm2852, %v2851
  // Predicated region
  $region22: #{forward.3} parent=0 // pred_check
    _
  $region23: #{forward.3} parent=0 // pred_check_branch
    %2855 = sbr.rel (0) target = $region25
  $region24: #{forward.3} parent=0 // pred_region
    _
  $region25: #{forward.3} parent=0 // pred_fallthru
    _
  // Predicated region
  $region26: #{forward.3} parent=0 // pred_check
    _
  $region27: #{forward.3} parent=0 // pred_check_branch
    %2857 = sbr.rel (0) target = $region29
  $region28: #{forward.3} parent=0 // pred_region
    _
  $region29: #{forward.3} parent=0 // pred_fallthru
    _

</llo_original>
